<compile_context>
chip_gen: v7x
topology: tpu7x:2x2x1
jax: 0.10.0
libtpu: 0.0.40
codegen_flags: <defaults>
</compile_context>

<pallas_src>
import functools

import jax
import jax.numpy as jnp
from jax.experimental import pallas as pl
from jax.experimental.pallas import tpu as pltpu

LANE = 128   # TPU lane width; channel / hidden dims are padded to multiples.
LEAD = 8     # 8-row-aligned leading halo for the VMEM inter-layer buffers.


def _round_up(x, m):
    return ((x + m - 1) // m) * m


def conv_cfg(n_channels):
    # (Cin, Cout, K, padding) for the four Conv1d+BN+ReLU+Dropout blocks.
    return [
        (n_channels, 64, 25, 12),
        (64, 128, 13, 6),
        (128, 256, 7, 3),
        (256, 256, 3, 1),
    ]


# ----------------------------------------------------------------------------
# Fused Pallas kernel: conv x4 + BN + ReLU + global avg pool + FC head
# ----------------------------------------------------------------------------
def _encoder_kernel(x1_ref, w1_ref, s1_ref, b1_ref,
                    w2_ref, s2_ref, b2_ref,
                    w3_ref, s3_ref, b3_ref,
                    w4_ref, s4_ref, b4_ref,
                    fw1_ref, fb1_ref, fw2_ref, fb2_ref,
                    o_ref,
                    a1_ref, a2_ref, a3_ref,
                    *, T, K2, K3, K4, chunk):
    """One batch element per grid step.

    x1_ref : (T, KC1_p)        bf16  im2col'd layer-1 input (tap-major cols)
    w1_ref : (KC1_p, C1_p)     bf16  layer-1 weight, K folded into contraction
    wL_ref : (KL, CinL_p, CoutL_p) bf16  layers 2..4, tap-major
    sL/bL  : (1, CoutL_p)      f32   folded BatchNorm scale / shift
    fw*/fb*: FC head weights (bf16) / biases (f32), lane-padded
    o_ref  : (1, Hp)           f32
    aL_ref : VMEM scratch, (LEAD + T + padL, C) bf16 time-padded activations
    """
    pad2, pad3, pad4 = (K2 - 1) // 2, (K3 - 1) // 2, (K4 - 1) // 2

    # Halo rows and padded channels must be exactly zero ('same' conv + inert
    # lane padding).  Buffers are small; zero them fully each step.
    a1_ref[...] = jnp.zeros_like(a1_ref)
    a2_ref[...] = jnp.zeros_like(a2_ref)
    a3_ref[...] = jnp.zeros_like(a3_ref)

    # ---- Layer 1: single deep contraction per time chunk (K folded in). ----
    for t0 in range(0, T, chunk):
        rows = min(chunk, T - t0)
        acc = jnp.dot(x1_ref[pl.ds(t0, rows), :], w1_ref[...],
                      preferred_element_type=jnp.float32)
        y = jnp.maximum(acc * s1_ref[...] + b1_ref[...], 0.0)
        a1_ref[pl.ds(LEAD + t0, rows), :] = y.astype(a1_ref.dtype)

    # ---- Shifted-slice conv over a VMEM-resident, time-padded source. ----
    def conv_block(src_ref, w_ref, s_ref, b_ref, K, pad, t0, rows):
        base = LEAD - pad
        acc = jnp.dot(src_ref[pl.ds(base + t0, rows), :], w_ref[0],
                      preferred_element_type=jnp.float32)
        for k in range(1, K):
            acc = acc + jnp.dot(src_ref[pl.ds(base + t0 + k, rows), :], w_ref[k],
                                preferred_element_type=jnp.float32)
        return jnp.maximum(acc * s_ref[...] + b_ref[...], 0.0)

    # ---- Layer 2 (VMEM -> VMEM). ----
    for t0 in range(0, T, chunk):
        rows = min(chunk, T - t0)
        y = conv_block(a1_ref, w2_ref, s2_ref, b2_ref, K2, pad2, t0, rows)
        a2_ref[pl.ds(LEAD + t0, rows), :] = y.astype(a2_ref.dtype)

    # ---- Layer 3 (VMEM -> VMEM). ----
    for t0 in range(0, T, chunk):
        rows = min(chunk, T - t0)
        y = conv_block(a2_ref, w3_ref, s3_ref, b3_ref, K3, pad3, t0, rows)
        a3_ref[pl.ds(LEAD + t0, rows), :] = y.astype(a3_ref.dtype)

    # ---- Layer 4 + fused global average pool over time (never hits HBM). ----
    pooled = jnp.zeros((1, w4_ref.shape[-1]), jnp.float32)
    for t0 in range(0, T, chunk):
        rows = min(chunk, T - t0)
        y = conv_block(a3_ref, w4_ref, s4_ref, b4_ref, K4, pad4, t0, rows)
        pooled = pooled + jnp.sum(y, axis=0, keepdims=True)
    pooled = pooled * (1.0 / T)

    # ---- FC head fused into the epilogue: Linear+ReLU -> Linear+ReLU. ----
    z = jnp.dot(pooled.astype(jnp.bfloat16), fw1_ref[...],
                preferred_element_type=jnp.float32)
    z = jnp.maximum(z + fb1_ref[...], 0.0)
    z = jnp.dot(z.astype(jnp.bfloat16), fw2_ref[...],
                preferred_element_type=jnp.float32)
    o_ref[...] = jnp.maximum(z + fb2_ref[...], 0.0)


# ----------------------------------------------------------------------------
# Host-side helpers
# ----------------------------------------------------------------------------
def _im2col_layer1(x_nct, K, pad, kc_p):
    """(B, Cin, T) f32 -> (B, T, KC1_p) bf16, columns ordered (tap, channel)."""
    B, C, T = x_nct.shape
    x_btc = jnp.transpose(x_nct, (0, 2, 1))
    x_pad = jnp.pad(x_btc, ((0, 0), (pad, pad), (0, 0)))
    cols = jnp.concatenate([x_pad[:, k:k + T, :] for k in range(K)], axis=-1)
    cols = jnp.pad(cols, ((0, 0), (0, 0), (0, kc_p - K * C)))
    return cols.astype(jnp.bfloat16)


# ----------------------------------------------------------------------------
# Parameters (synthetic, deterministic; PyTorch layouts for the "raw" set)
# ----------------------------------------------------------------------------
def init_params(key, n_channels, hidden_dim):
    convs = []
    for (cin, cout, k, _pad) in conv_cfg(n_channels):
        key, kw, kb, kg, kbe, km, kv = jax.random.split(key, 7)
        convs.append(dict(
            w=jax.random.normal(kw, (cout, cin, k), jnp.float32) * 0.05,
            b=jax.random.normal(kb, (cout,), jnp.float32) * 0.05,
            gamma=1.0 + 0.1 * jax.random.normal(kg, (cout,), jnp.float32),
            beta=0.1 * jax.random.normal(kbe, (cout,), jnp.float32),
            mean=0.1 * jax.random.normal(km, (cout,), jnp.float32),
            var=jnp.abs(1.0 + 0.1 * jax.random.normal(kv, (cout,), jnp.float32)),
        ))
    key, k1, k2, k3, k4 = jax.random.split(key, 5)
    fc = dict(  # PyTorch nn.Linear layout: (out_features, in_features)
        w1=jax.random.normal(k1, (hidden_dim, 256), jnp.float32) * 0.05,
        b1=jax.random.normal(k2, (hidden_dim,), jnp.float32) * 0.05,
        w2=jax.random.normal(k3, (hidden_dim, hidden_dim), jnp.float32) * 0.05,
        b2=jax.random.normal(k4, (hidden_dim,), jnp.float32) * 0.05,
    )
    return {"convs": convs, "fc": fc}


def prepare_params(raw, n_channels, hidden_dim, eps=1e-5):
    """Fold BN, pad to lane multiples, flatten layer-1 taps, cast to bf16."""
    cfg = conv_cfg(n_channels)
    convs = []
    for i, (p, (cin, cout, k, _pad)) in enumerate(zip(raw["convs"], cfg)):
        cout_p = _round_up(cout, LANE)
        s = p["gamma"] / jnp.sqrt(p["var"] + eps)
        t = (p["b"] - p["mean"]) * s + p["beta"]
        s = jnp.pad(s, (0, cout_p - cout), constant_values=1.0).reshape(1, cout_p)
        t = jnp.pad(t, (0, cout_p - cout)).reshape(1, cout_p)
        w = jnp.transpose(p["w"], (2, 1, 0))                     # (K, Cin, Cout)
        if i == 0:
            kc = k * cin
            kc_p = _round_up(kc, LANE)
            w = w.reshape(kc, cout)                              # rows = (tap, ch)
            w = jnp.pad(w, ((0, kc_p - kc), (0, cout_p - cout)))
        else:
            cin_p = _round_up(cin, LANE)
            w = jnp.pad(w, ((0, 0), (0, cin_p - cin), (0, cout_p - cout)))
        convs.append(dict(w=w.astype(jnp.bfloat16),
                          scale=s.astype(jnp.float32),
                          shift=t.astype(jnp.float32)))
    hp = _round_up(hidden_dim, LANE)
    c_last = _round_up(cfg[-1][1], LANE)                         # 256
    rf = raw["fc"]
    fc = dict(
        w1=jnp.pad(rf["w1"].T, ((0, c_last - rf["w1"].shape[1]),
                                (0, hp - hidden_dim))).astype(jnp.bfloat16),
        b1=jnp.pad(rf["b1"], (0, hp - hidden_dim)).reshape(1, hp).astype(jnp.float32),
        w2=jnp.pad(rf["w2"].T, ((0, hp - hidden_dim),
                                (0, hp - hidden_dim))).astype(jnp.bfloat16),
        b2=jnp.pad(rf["b2"], (0, hp - hidden_dim)).reshape(1, hp).astype(jnp.float32),
    )
    return {"convs": convs, "fc": fc}


# ----------------------------------------------------------------------------
# Forward builder
# ----------------------------------------------------------------------------
def build_forward(n_channels, n_times, hidden_dim):
    cfg = conv_cfg(n_channels)                     # static Python ints
    c1_in, _c1_out, k1, pad1 = cfg[0]
    k2, k3, k4 = cfg[1][2], cfg[2][2], cfg[3][2]
    pad2, pad3, pad4 = (k2 - 1) // 2, (k3 - 1) // 2, (k4 - 1) // 2
    kc_p = _round_up(k1 * c1_in, LANE)
    c1p = _round_up(cfg[0][1], LANE)               # 128
    c2p = _round_up(cfg[1][1], LANE)               # 128
    c3p = _round_up(cfg[2][1], LANE)               # 256
    c4p = _round_up(cfg[3][1], LANE)               # 256
    hp = _round_up(hidden_dim, LANE)
    T = n_times
    chunk = min(T, 128)                            # bound the f32 accumulator

    kernel = functools.partial(_encoder_kernel, T=T, K2=k2, K3=k3, K4=k4,
                               chunk=chunk)

    def forward(params, x_nct):
        """x_nct: (B, n_channels, n_times) -> (B, hidden_dim)."""
        B = x_nct.shape[0]
        x1 = _im2col_layer1(x_nct.astype(jnp.float32), k1, pad1, kc_p)
        cp, fc = params["convs"], params["fc"]

        const2 = lambda b: (0, 0)
        const3 = lambda b: (0, 0, 0)
        out = pl.pallas_call(
            kernel,
            grid=(B,),
            out_shape=jax.ShapeDtypeStruct((B, 1, hp), jnp.float32),
            in_specs=[
                # Activations: one batch element per grid step (pipelined DMA).
                pl.BlockSpec((None, T, kc_p), lambda b: (b, 0, 0)),
                # Weights / BN constants: constant index_map -> VMEM-resident.
                pl.BlockSpec((kc_p, c1p), const2),
                pl.BlockSpec((1, c1p), const2),
                pl.BlockSpec((1, c1p), const2),
                pl.BlockSpec((k2, c1p, c2p), const3),
                pl.BlockSpec((1, c2p), const2),
                pl.BlockSpec((1, c2p), const2),
                pl.BlockSpec((k3, c2p, c3p), const3),
                pl.BlockSpec((1, c3p), const2),
                pl.BlockSpec((1, c3p), const2),
                pl.BlockSpec((k4, c3p, c4p), const3),
                pl.BlockSpec((1, c4p), const2),
                pl.BlockSpec((1, c4p), const2),
                pl.BlockSpec((c4p, hp), const2),
                pl.BlockSpec((1, hp), const2),
                pl.BlockSpec((hp, hp), const2),
                pl.BlockSpec((1, hp), const2),
            ],
            out_specs=pl.BlockSpec((None, 1, hp), lambda b: (b, 0, 0)),
            scratch_shapes=[
                # Inter-layer activations, time-padded (8-aligned leading halo).
                pltpu.VMEM((LEAD + T + pad2, c1p), jnp.bfloat16),
                pltpu.VMEM((LEAD + T + pad3, c2p), jnp.bfloat16),
                pltpu.VMEM((LEAD + T + pad4, c3p), jnp.bfloat16),
            ],
            compiler_params=pltpu.CompilerParams(
                dimension_semantics=("parallel",),
                vmem_limit_bytes=32 * 1024 * 1024),
        )(x1,
          cp[0]["w"], cp[0]["scale"], cp[0]["shift"],
          cp[1]["w"], cp[1]["scale"], cp[1]["shift"],
          cp[2]["w"], cp[2]["scale"], cp[2]["shift"],
          cp[3]["w"], cp[3]["scale"], cp[3]["shift"],
          fc["w1"], fc["b1"], fc["w2"], fc["b2"])
        return out.reshape(B, hp)[:, :hidden_dim]   # drop lane padding

    return jax.jit(forward)


# ----------------------------------------------------------------------------
if __name__ == "__main__":
    # Small shapes consistent with the module: (batch, n_channels, n_times).
    B, C_IN, T, HIDDEN = 2, 8, 32, 32

    key = jax.random.PRNGKey(0)
    kx, kp = jax.random.split(key)
    x = jax.random.normal(kx, (B, C_IN, T), jnp.float32)

    raw_params = init_params(kp, n_channels=C_IN, hidden_dim=HIDDEN)
    params = prepare_params(raw_params, n_channels=C_IN, hidden_dim=HIDDEN)

    forward = build_forward(n_channels=C_IN, n_times=T, hidden_dim=HIDDEN)
    out = jax.block_until_ready(forward(params, x))

    assert out.shape == (B, HIDDEN), out.shape
    assert bool(jnp.all(jnp.isfinite(out)))
    print("KERNEL_OK")
</pallas_src>

<mosaic_0001>
module attributes {stable_mosaic.version = 11 : i64} {
  func.func @_encoder_kernel(%arg0: i32, %arg1: memref<1x32x256xbf16, #tpu.memory_space<vmem>>, %arg2: memref<256x128xbf16, #tpu.memory_space<vmem>>, %arg3: memref<1x128xf32, #tpu.memory_space<vmem>>, %arg4: memref<1x128xf32, #tpu.memory_space<vmem>>, %arg5: memref<13x128x128xbf16, #tpu.memory_space<vmem>>, %arg6: memref<1x128xf32, #tpu.memory_space<vmem>>, %arg7: memref<1x128xf32, #tpu.memory_space<vmem>>, %arg8: memref<7x128x256xbf16, #tpu.memory_space<vmem>>, %arg9: memref<1x256xf32, #tpu.memory_space<vmem>>, %arg10: memref<1x256xf32, #tpu.memory_space<vmem>>, %arg11: memref<3x256x256xbf16, #tpu.memory_space<vmem>>, %arg12: memref<1x256xf32, #tpu.memory_space<vmem>>, %arg13: memref<1x256xf32, #tpu.memory_space<vmem>>, %arg14: memref<256x128xbf16, #tpu.memory_space<vmem>>, %arg15: memref<1x128xf32, #tpu.memory_space<vmem>>, %arg16: memref<128x128xbf16, #tpu.memory_space<vmem>>, %arg17: memref<1x128xf32, #tpu.memory_space<vmem>>, %arg18: memref<1x1x128xf32, #tpu.memory_space<vmem>>, %arg19: memref<46x128xbf16, #tpu.memory_space<vmem>>, %arg20: memref<43x128xbf16, #tpu.memory_space<vmem>>, %arg21: memref<41x256xbf16, #tpu.memory_space<vmem>>) attributes {dimension_semantics = [#tpu.dimension_semantics<parallel>], iteration_bounds = array<i64: 2>, scalar_prefetch = 0 : i64, scratch_operands = 3 : i64, tpu.core_type = #tpu.core_type<tc>, window_params = [{transform_indices = @transform_0, window_bounds = array<i64: 1, 32, 256>}, {pipeline_mode = #tpu.pipeline_mode<synchronous>, transform_indices = @transform_1, window_bounds = array<i64: 256, 128>}, {pipeline_mode = #tpu.pipeline_mode<synchronous>, transform_indices = @transform_2, window_bounds = array<i64: 1, 128>}, {pipeline_mode = #tpu.pipeline_mode<synchronous>, transform_indices = @transform_3, window_bounds = array<i64: 1, 128>}, {pipeline_mode = #tpu.pipeline_mode<synchronous>, transform_indices = @transform_4, window_bounds = array<i64: 13, 128, 128>}, {pipeline_mode = #tpu.pipeline_mode<synchronous>, transform_indices = @transform_5, window_bounds = array<i64: 1, 128>}, {pipeline_mode = #tpu.pipeline_mode<synchronous>, transform_indices = @transform_6, window_bounds = array<i64: 1, 128>}, {pipeline_mode = #tpu.pipeline_mode<synchronous>, transform_indices = @transform_7, window_bounds = array<i64: 7, 128, 256>}, {pipeline_mode = #tpu.pipeline_mode<synchronous>, transform_indices = @transform_8, window_bounds = array<i64: 1, 256>}, {pipeline_mode = #tpu.pipeline_mode<synchronous>, transform_indices = @transform_9, window_bounds = array<i64: 1, 256>}, {pipeline_mode = #tpu.pipeline_mode<synchronous>, transform_indices = @transform_10, window_bounds = array<i64: 3, 256, 256>}, {pipeline_mode = #tpu.pipeline_mode<synchronous>, transform_indices = @transform_11, window_bounds = array<i64: 1, 256>}, {pipeline_mode = #tpu.pipeline_mode<synchronous>, transform_indices = @transform_12, window_bounds = array<i64: 1, 256>}, {pipeline_mode = #tpu.pipeline_mode<synchronous>, transform_indices = @transform_13, window_bounds = array<i64: 256, 128>}, {pipeline_mode = #tpu.pipeline_mode<synchronous>, transform_indices = @transform_14, window_bounds = array<i64: 1, 128>}, {pipeline_mode = #tpu.pipeline_mode<synchronous>, transform_indices = @transform_15, window_bounds = array<i64: 128, 128>}, {pipeline_mode = #tpu.pipeline_mode<synchronous>, transform_indices = @transform_16, window_bounds = array<i64: 1, 128>}, {transform_indices = @transform_17, window_bounds = array<i64: 1, 1, 128>}]} {
    %cst = arith.constant 0.000000e+00 : bf16
    %0 = vector.broadcast %cst : bf16 to vector<46x128xbf16>
    %c0 = arith.constant 0 : index
    %c0_0 = arith.constant 0 : index
    %1 = vector.load %arg19[%c0, %c0_0] : memref<46x128xbf16, #tpu.memory_space<vmem>>, vector<46x128xbf16>
    tpu.vector_store %arg19[%c0, %c0_0], %0 {strides = array<i32>} : memref<46x128xbf16, #tpu.memory_space<vmem>>, vector<46x128xbf16>,
    %cst_1 = arith.constant 0.000000e+00 : bf16
    %2 = vector.broadcast %cst_1 : bf16 to vector<43x128xbf16>
    %c0_2 = arith.constant 0 : index
    %c0_3 = arith.constant 0 : index
    %3 = vector.load %arg20[%c0_2, %c0_3] : memref<43x128xbf16, #tpu.memory_space<vmem>>, vector<43x128xbf16>
    tpu.vector_store %arg20[%c0_2, %c0_3], %2 {strides = array<i32>} : memref<43x128xbf16, #tpu.memory_space<vmem>>, vector<43x128xbf16>,
    %cst_4 = arith.constant 0.000000e+00 : bf16
    %4 = vector.broadcast %cst_4 : bf16 to vector<41x256xbf16>
    %c0_5 = arith.constant 0 : index
    %c0_6 = arith.constant 0 : index
    %5 = vector.load %arg21[%c0_5, %c0_6] : memref<41x256xbf16, #tpu.memory_space<vmem>>, vector<41x256xbf16>
    tpu.vector_store %arg21[%c0_5, %c0_6], %4 {strides = array<i32>} : memref<41x256xbf16, #tpu.memory_space<vmem>>, vector<41x256xbf16>,
    %c0_7 = arith.constant 0 : index
    %c0_8 = arith.constant 0 : index
    %c0_9 = arith.constant 0 : index
    %6 = vector.load %arg1[%c0_7, %c0_8, %c0_9] : memref<1x32x256xbf16, #tpu.memory_space<vmem>>, vector<1x32x256xbf16>
    %7 = vector.shape_cast %6 : vector<1x32x256xbf16> to vector<32x256xbf16>
    %c0_10 = arith.constant 0 : index
    %c0_11 = arith.constant 0 : index
    %8 = vector.load %arg2[%c0_10, %c0_11] : memref<256x128xbf16, #tpu.memory_space<vmem>>, vector<256x128xbf16>
    %cst_12 = arith.constant dense<0.000000e+00> : vector<32x128xf32>
    %9 = tpu.matmul %7, %8, %cst_12 {dimension_numbers = #tpu.dot_dimension_numbers<[1], [0], [0], [1], [0, 0, 1, 1], [], []>} : vector<32x256xbf16>, vector<256x128xbf16>, vector<32x128xf32> -> vector<32x128xf32>
    %c0_13 = arith.constant 0 : index
    %c0_14 = arith.constant 0 : index
    %10 = vector.load %arg3[%c0_13, %c0_14] : memref<1x128xf32, #tpu.memory_space<vmem>>, vector<1x128xf32>
    %11 = vector.broadcast %10 : vector<1x128xf32> to vector<32x128xf32>
    %12 = arith.mulf %9, %11 : vector<32x128xf32>
    %c0_15 = arith.constant 0 : index
    %c0_16 = arith.constant 0 : index
    %13 = vector.load %arg4[%c0_15, %c0_16] : memref<1x128xf32, #tpu.memory_space<vmem>>, vector<1x128xf32>
    %14 = vector.broadcast %13 : vector<1x128xf32> to vector<32x128xf32>
    %15 = arith.addf %12, %14 : vector<32x128xf32>
    %cst_17 = arith.constant 0.000000e+00 : f32
    %16 = vector.broadcast %cst_17 : f32 to vector<32x128xf32>
    %17 = arith.maximumf %15, %16 : vector<32x128xf32>
    %18 = arith.truncf %17 : vector<32x128xf32> to vector<32x128xbf16>
    %c8 = arith.constant 8 : index
    %c0_18 = arith.constant 0 : index
    %19 = vector.load %arg19[%c8, %c0_18] : memref<46x128xbf16, #tpu.memory_space<vmem>>, vector<32x128xbf16>
    tpu.vector_store %arg19[%c8, %c0_18], %18 {strides = array<i32>} : memref<46x128xbf16, #tpu.memory_space<vmem>>, vector<32x128xbf16>,
    %c2 = arith.constant 2 : index
    %c0_19 = arith.constant 0 : index
    %20 = vector.load %arg19[%c2, %c0_19] : memref<46x128xbf16, #tpu.memory_space<vmem>>, vector<32x128xbf16>
    %c0_20 = arith.constant 0 : index
    %c0_21 = arith.constant 0 : index
    %c0_22 = arith.constant 0 : index
    %21 = vector.load %arg5[%c0_20, %c0_21, %c0_22] : memref<13x128x128xbf16, #tpu.memory_space<vmem>>, vector<1x128x128xbf16>
    %22 = vector.shape_cast %21 : vector<1x128x128xbf16> to vector<128x128xbf16>
    %cst_23 = arith.constant dense<0.000000e+00> : vector<32x128xf32>
    %23 = tpu.matmul %20, %22, %cst_23 {dimension_numbers = #tpu.dot_dimension_numbers<[1], [0], [0], [1], [0, 0, 1, 1], [], []>} : vector<32x128xbf16>, vector<128x128xbf16>, vector<32x128xf32> -> vector<32x128xf32>
    %c3 = arith.constant 3 : index
    %c0_24 = arith.constant 0 : index
    %24 = vector.load %arg19[%c3, %c0_24] : memref<46x128xbf16, #tpu.memory_space<vmem>>, vector<32x128xbf16>
    %c1 = arith.constant 1 : index
    %c0_25 = arith.constant 0 : index
    %c0_26 = arith.constant 0 : index
    %25 = vector.load %arg5[%c1, %c0_25, %c0_26] : memref<13x128x128xbf16, #tpu.memory_space<vmem>>, vector<1x128x128xbf16>
    %26 = vector.shape_cast %25 : vector<1x128x128xbf16> to vector<128x128xbf16>
    %cst_27 = arith.constant dense<0.000000e+00> : vector<32x128xf32>
    %27 = tpu.matmul %24, %26, %cst_27 {dimension_numbers = #tpu.dot_dimension_numbers<[1], [0], [0], [1], [0, 0, 1, 1], [], []>} : vector<32x128xbf16>, vector<128x128xbf16>, vector<32x128xf32> -> vector<32x128xf32>
    %28 = arith.addf %23, %27 : vector<32x128xf32>
    %c4 = arith.constant 4 : index
    %c0_28 = arith.constant 0 : index
    %29 = vector.load %arg19[%c4, %c0_28] : memref<46x128xbf16, #tpu.memory_space<vmem>>, vector<32x128xbf16>
    %c2_29 = arith.constant 2 : index
    %c0_30 = arith.constant 0 : index
    %c0_31 = arith.constant 0 : index
    %30 = vector.load %arg5[%c2_29, %c0_30, %c0_31] : memref<13x128x128xbf16, #tpu.memory_space<vmem>>, vector<1x128x128xbf16>
    %31 = vector.shape_cast %30 : vector<1x128x128xbf16> to vector<128x128xbf16>
    %cst_32 = arith.constant dense<0.000000e+00> : vector<32x128xf32>
    %32 = tpu.matmul %29, %31, %cst_32 {dimension_numbers = #tpu.dot_dimension_numbers<[1], [0], [0], [1], [0, 0, 1, 1], [], []>} : vector<32x128xbf16>, vector<128x128xbf16>, vector<32x128xf32> -> vector<32x128xf32>
    %33 = arith.addf %28, %32 : vector<32x128xf32>
    %c5 = arith.constant 5 : index
    %c0_33 = arith.constant 0 : index
    %34 = vector.load %arg19[%c5, %c0_33] : memref<46x128xbf16, #tpu.memory_space<vmem>>, vector<32x128xbf16>
    %c3_34 = arith.constant 3 : index
    %c0_35 = arith.constant 0 : index
    %c0_36 = arith.constant 0 : index
    %35 = vector.load %arg5[%c3_34, %c0_35, %c0_36] : memref<13x128x128xbf16, #tpu.memory_space<vmem>>, vector<1x128x128xbf16>
    %36 = vector.shape_cast %35 : vector<1x128x128xbf16> to vector<128x128xbf16>
    %cst_37 = arith.constant dense<0.000000e+00> : vector<32x128xf32>
    %37 = tpu.matmul %34, %36, %cst_37 {dimension_numbers = #tpu.dot_dimension_numbers<[1], [0], [0], [1], [0, 0, 1, 1], [], []>} : vector<32x128xbf16>, vector<128x128xbf16>, vector<32x128xf32> -> vector<32x128xf32>
    %38 = arith.addf %33, %37 : vector<32x128xf32>
    %c6 = arith.constant 6 : index
    %c0_38 = arith.constant 0 : index
    %39 = vector.load %arg19[%c6, %c0_38] : memref<46x128xbf16, #tpu.memory_space<vmem>>, vector<32x128xbf16>
    %c4_39 = arith.constant 4 : index
    %c0_40 = arith.constant 0 : index
    %c0_41 = arith.constant 0 : index
    %40 = vector.load %arg5[%c4_39, %c0_40, %c0_41] : memref<13x128x128xbf16, #tpu.memory_space<vmem>>, vector<1x128x128xbf16>
    %41 = vector.shape_cast %40 : vector<1x128x128xbf16> to vector<128x128xbf16>
    %cst_42 = arith.constant dense<0.000000e+00> : vector<32x128xf32>
    %42 = tpu.matmul %39, %41, %cst_42 {dimension_numbers = #tpu.dot_dimension_numbers<[1], [0], [0], [1], [0, 0, 1, 1], [], []>} : vector<32x128xbf16>, vector<128x128xbf16>, vector<32x128xf32> -> vector<32x128xf32>
    %43 = arith.addf %38, %42 : vector<32x128xf32>
    %c7 = arith.constant 7 : index
    %c0_43 = arith.constant 0 : index
    %44 = vector.load %arg19[%c7, %c0_43] : memref<46x128xbf16, #tpu.memory_space<vmem>>, vector<32x128xbf16>
    %c5_44 = arith.constant 5 : index
    %c0_45 = arith.constant 0 : index
    %c0_46 = arith.constant 0 : index
    %45 = vector.load %arg5[%c5_44, %c0_45, %c0_46] : memref<13x128x128xbf16, #tpu.memory_space<vmem>>, vector<1x128x128xbf16>
    %46 = vector.shape_cast %45 : vector<1x128x128xbf16> to vector<128x128xbf16>
    %cst_47 = arith.constant dense<0.000000e+00> : vector<32x128xf32>
    %47 = tpu.matmul %44, %46, %cst_47 {dimension_numbers = #tpu.dot_dimension_numbers<[1], [0], [0], [1], [0, 0, 1, 1], [], []>} : vector<32x128xbf16>, vector<128x128xbf16>, vector<32x128xf32> -> vector<32x128xf32>
    %48 = arith.addf %43, %47 : vector<32x128xf32>
    %c8_48 = arith.constant 8 : index
    %c0_49 = arith.constant 0 : index
    %49 = vector.load %arg19[%c8_48, %c0_49] : memref<46x128xbf16, #tpu.memory_space<vmem>>, vector<32x128xbf16>
    %c6_50 = arith.constant 6 : index
    %c0_51 = arith.constant 0 : index
    %c0_52 = arith.constant 0 : index
    %50 = vector.load %arg5[%c6_50, %c0_51, %c0_52] : memref<13x128x128xbf16, #tpu.memory_space<vmem>>, vector<1x128x128xbf16>
    %51 = vector.shape_cast %50 : vector<1x128x128xbf16> to vector<128x128xbf16>
    %cst_53 = arith.constant dense<0.000000e+00> : vector<32x128xf32>
    %52 = tpu.matmul %49, %51, %cst_53 {dimension_numbers = #tpu.dot_dimension_numbers<[1], [0], [0], [1], [0, 0, 1, 1], [], []>} : vector<32x128xbf16>, vector<128x128xbf16>, vector<32x128xf32> -> vector<32x128xf32>
    %53 = arith.addf %48, %52 : vector<32x128xf32>
    %c9 = arith.constant 9 : index
    %c0_54 = arith.constant 0 : index
    %54 = vector.load %arg19[%c9, %c0_54] : memref<46x128xbf16, #tpu.memory_space<vmem>>, vector<32x128xbf16>
    %c7_55 = arith.constant 7 : index
    %c0_56 = arith.constant 0 : index
    %c0_57 = arith.constant 0 : index
    %55 = vector.load %arg5[%c7_55, %c0_56, %c0_57] : memref<13x128x128xbf16, #tpu.memory_space<vmem>>, vector<1x128x128xbf16>
    %56 = vector.shape_cast %55 : vector<1x128x128xbf16> to vector<128x128xbf16>
    %cst_58 = arith.constant dense<0.000000e+00> : vector<32x128xf32>
    %57 = tpu.matmul %54, %56, %cst_58 {dimension_numbers = #tpu.dot_dimension_numbers<[1], [0], [0], [1], [0, 0, 1, 1], [], []>} : vector<32x128xbf16>, vector<128x128xbf16>, vector<32x128xf32> -> vector<32x128xf32>
    %58 = arith.addf %53, %57 : vector<32x128xf32>
    %c10 = arith.constant 10 : index
    %c0_59 = arith.constant 0 : index
    %59 = vector.load %arg19[%c10, %c0_59] : memref<46x128xbf16, #tpu.memory_space<vmem>>, vector<32x128xbf16>
    %c8_60 = arith.constant 8 : index
    %c0_61 = arith.constant 0 : index
    %c0_62 = arith.constant 0 : index
    %60 = vector.load %arg5[%c8_60, %c0_61, %c0_62] : memref<13x128x128xbf16, #tpu.memory_space<vmem>>, vector<1x128x128xbf16>
    %61 = vector.shape_cast %60 : vector<1x128x128xbf16> to vector<128x128xbf16>
    %cst_63 = arith.constant dense<0.000000e+00> : vector<32x128xf32>
    %62 = tpu.matmul %59, %61, %cst_63 {dimension_numbers = #tpu.dot_dimension_numbers<[1], [0], [0], [1], [0, 0, 1, 1], [], []>} : vector<32x128xbf16>, vector<128x128xbf16>, vector<32x128xf32> -> vector<32x128xf32>
    %63 = arith.addf %58, %62 : vector<32x128xf32>
    %c11 = arith.constant 11 : index
    %c0_64 = arith.constant 0 : index
    %64 = vector.load %arg19[%c11, %c0_64] : memref<46x128xbf16, #tpu.memory_space<vmem>>, vector<32x128xbf16>
    %c9_65 = arith.constant 9 : index
    %c0_66 = arith.constant 0 : index
    %c0_67 = arith.constant 0 : index
    %65 = vector.load %arg5[%c9_65, %c0_66, %c0_67] : memref<13x128x128xbf16, #tpu.memory_space<vmem>>, vector<1x128x128xbf16>
    %66 = vector.shape_cast %65 : vector<1x128x128xbf16> to vector<128x128xbf16>
    %cst_68 = arith.constant dense<0.000000e+00> : vector<32x128xf32>
    %67 = tpu.matmul %64, %66, %cst_68 {dimension_numbers = #tpu.dot_dimension_numbers<[1], [0], [0], [1], [0, 0, 1, 1], [], []>} : vector<32x128xbf16>, vector<128x128xbf16>, vector<32x128xf32> -> vector<32x128xf32>
    %68 = arith.addf %63, %67 : vector<32x128xf32>
    %c12 = arith.constant 12 : index
    %c0_69 = arith.constant 0 : index
    %69 = vector.load %arg19[%c12, %c0_69] : memref<46x128xbf16, #tpu.memory_space<vmem>>, vector<32x128xbf16>
    %c10_70 = arith.constant 10 : index
    %c0_71 = arith.constant 0 : index
    %c0_72 = arith.constant 0 : index
    %70 = vector.load %arg5[%c10_70, %c0_71, %c0_72] : memref<13x128x128xbf16, #tpu.memory_space<vmem>>, vector<1x128x128xbf16>
    %71 = vector.shape_cast %70 : vector<1x128x128xbf16> to vector<128x128xbf16>
    %cst_73 = arith.constant dense<0.000000e+00> : vector<32x128xf32>
    %72 = tpu.matmul %69, %71, %cst_73 {dimension_numbers = #tpu.dot_dimension_numbers<[1], [0], [0], [1], [0, 0, 1, 1], [], []>} : vector<32x128xbf16>, vector<128x128xbf16>, vector<32x128xf32> -> vector<32x128xf32>
    %73 = arith.addf %68, %72 : vector<32x128xf32>
    %c13 = arith.constant 13 : index
    %c0_74 = arith.constant 0 : index
    %74 = vector.load %arg19[%c13, %c0_74] : memref<46x128xbf16, #tpu.memory_space<vmem>>, vector<32x128xbf16>
    %c11_75 = arith.constant 11 : index
    %c0_76 = arith.constant 0 : index
    %c0_77 = arith.constant 0 : index
    %75 = vector.load %arg5[%c11_75, %c0_76, %c0_77] : memref<13x128x128xbf16, #tpu.memory_space<vmem>>, vector<1x128x128xbf16>
    %76 = vector.shape_cast %75 : vector<1x128x128xbf16> to vector<128x128xbf16>
    %cst_78 = arith.constant dense<0.000000e+00> : vector<32x128xf32>
    %77 = tpu.matmul %74, %76, %cst_78 {dimension_numbers = #tpu.dot_dimension_numbers<[1], [0], [0], [1], [0, 0, 1, 1], [], []>} : vector<32x128xbf16>, vector<128x128xbf16>, vector<32x128xf32> -> vector<32x128xf32>
    %78 = arith.addf %73, %77 : vector<32x128xf32>
    %c14 = arith.constant 14 : index
    %c0_79 = arith.constant 0 : index
    %79 = vector.load %arg19[%c14, %c0_79] : memref<46x128xbf16, #tpu.memory_space<vmem>>, vector<32x128xbf16>
    %c12_80 = arith.constant 12 : index
    %c0_81 = arith.constant 0 : index
    %c0_82 = arith.constant 0 : index
    %80 = vector.load %arg5[%c12_80, %c0_81, %c0_82] : memref<13x128x128xbf16, #tpu.memory_space<vmem>>, vector<1x128x128xbf16>
    %81 = vector.shape_cast %80 : vector<1x128x128xbf16> to vector<128x128xbf16>
    %cst_83 = arith.constant dense<0.000000e+00> : vector<32x128xf32>
    %82 = tpu.matmul %79, %81, %cst_83 {dimension_numbers = #tpu.dot_dimension_numbers<[1], [0], [0], [1], [0, 0, 1, 1], [], []>} : vector<32x128xbf16>, vector<128x128xbf16>, vector<32x128xf32> -> vector<32x128xf32>
    %83 = arith.addf %78, %82 : vector<32x128xf32>
    %c0_84 = arith.constant 0 : index
    %c0_85 = arith.constant 0 : index
    %84 = vector.load %arg6[%c0_84, %c0_85] : memref<1x128xf32, #tpu.memory_space<vmem>>, vector<1x128xf32>
    %85 = vector.broadcast %84 : vector<1x128xf32> to vector<32x128xf32>
    %86 = arith.mulf %83, %85 : vector<32x128xf32>
    %c0_86 = arith.constant 0 : index
    %c0_87 = arith.constant 0 : index
    %87 = vector.load %arg7[%c0_86, %c0_87] : memref<1x128xf32, #tpu.memory_space<vmem>>, vector<1x128xf32>
    %88 = vector.broadcast %87 : vector<1x128xf32> to vector<32x128xf32>
    %89 = arith.addf %86, %88 : vector<32x128xf32>
    %cst_88 = arith.constant 0.000000e+00 : f32
    %90 = vector.broadcast %cst_88 : f32 to vector<32x128xf32>
    %91 = arith.maximumf %89, %90 : vector<32x128xf32>
    %92 = arith.truncf %91 : vector<32x128xf32> to vector<32x128xbf16>
    %c8_89 = arith.constant 8 : index
    %c0_90 = arith.constant 0 : index
    %93 = vector.load %arg20[%c8_89, %c0_90] : memref<43x128xbf16, #tpu.memory_space<vmem>>, vector<32x128xbf16>
    tpu.vector_store %arg20[%c8_89, %c0_90], %92 {strides = array<i32>} : memref<43x128xbf16, #tpu.memory_space<vmem>>, vector<32x128xbf16>,
    %c5_91 = arith.constant 5 : index
    %c0_92 = arith.constant 0 : index
    %94 = vector.load %arg20[%c5_91, %c0_92] : memref<43x128xbf16, #tpu.memory_space<vmem>>, vector<32x128xbf16>
    %c0_93 = arith.constant 0 : index
    %c0_94 = arith.constant 0 : index
    %c0_95 = arith.constant 0 : index
    %95 = vector.load %arg8[%c0_93, %c0_94, %c0_95] : memref<7x128x256xbf16, #tpu.memory_space<vmem>>, vector<1x128x256xbf16>
    %96 = vector.shape_cast %95 : vector<1x128x256xbf16> to vector<128x256xbf16>
    %cst_96 = arith.constant dense<0.000000e+00> : vector<32x256xf32>
    %97 = tpu.matmul %94, %96, %cst_96 {dimension_numbers = #tpu.dot_dimension_numbers<[1], [0], [0], [1], [0, 0, 1, 1], [], []>} : vector<32x128xbf16>, vector<128x256xbf16>, vector<32x256xf32> -> vector<32x256xf32>
    %c6_97 = arith.constant 6 : index
    %c0_98 = arith.constant 0 : index
    %98 = vector.load %arg20[%c6_97, %c0_98] : memref<43x128xbf16, #tpu.memory_space<vmem>>, vector<32x128xbf16>
    %c1_99 = arith.constant 1 : index
    %c0_100 = arith.constant 0 : index
    %c0_101 = arith.constant 0 : index
    %99 = vector.load %arg8[%c1_99, %c0_100, %c0_101] : memref<7x128x256xbf16, #tpu.memory_space<vmem>>, vector<1x128x256xbf16>
    %100 = vector.shape_cast %99 : vector<1x128x256xbf16> to vector<128x256xbf16>
    %cst_102 = arith.constant dense<0.000000e+00> : vector<32x256xf32>
    %101 = tpu.matmul %98, %100, %cst_102 {dimension_numbers = #tpu.dot_dimension_numbers<[1], [0], [0], [1], [0, 0, 1, 1], [], []>} : vector<32x128xbf16>, vector<128x256xbf16>, vector<32x256xf32> -> vector<32x256xf32>
    %102 = arith.addf %97, %101 : vector<32x256xf32>
    %c7_103 = arith.constant 7 : index
    %c0_104 = arith.constant 0 : index
    %103 = vector.load %arg20[%c7_103, %c0_104] : memref<43x128xbf16, #tpu.memory_space<vmem>>, vector<32x128xbf16>
    %c2_105 = arith.constant 2 : index
    %c0_106 = arith.constant 0 : index
    %c0_107 = arith.constant 0 : index
    %104 = vector.load %arg8[%c2_105, %c0_106, %c0_107] : memref<7x128x256xbf16, #tpu.memory_space<vmem>>, vector<1x128x256xbf16>
    %105 = vector.shape_cast %104 : vector<1x128x256xbf16> to vector<128x256xbf16>
    %cst_108 = arith.constant dense<0.000000e+00> : vector<32x256xf32>
    %106 = tpu.matmul %103, %105, %cst_108 {dimension_numbers = #tpu.dot_dimension_numbers<[1], [0], [0], [1], [0, 0, 1, 1], [], []>} : vector<32x128xbf16>, vector<128x256xbf16>, vector<32x256xf32> -> vector<32x256xf32>
    %107 = arith.addf %102, %106 : vector<32x256xf32>
    %c8_109 = arith.constant 8 : index
    %c0_110 = arith.constant 0 : index
    %108 = vector.load %arg20[%c8_109, %c0_110] : memref<43x128xbf16, #tpu.memory_space<vmem>>, vector<32x128xbf16>
    %c3_111 = arith.constant 3 : index
    %c0_112 = arith.constant 0 : index
    %c0_113 = arith.constant 0 : index
    %109 = vector.load %arg8[%c3_111, %c0_112, %c0_113] : memref<7x128x256xbf16, #tpu.memory_space<vmem>>, vector<1x128x256xbf16>
    %110 = vector.shape_cast %109 : vector<1x128x256xbf16> to vector<128x256xbf16>
    %cst_114 = arith.constant dense<0.000000e+00> : vector<32x256xf32>
    %111 = tpu.matmul %108, %110, %cst_114 {dimension_numbers = #tpu.dot_dimension_numbers<[1], [0], [0], [1], [0, 0, 1, 1], [], []>} : vector<32x128xbf16>, vector<128x256xbf16>, vector<32x256xf32> -> vector<32x256xf32>
    %112 = arith.addf %107, %111 : vector<32x256xf32>
    %c9_115 = arith.constant 9 : index
    %c0_116 = arith.constant 0 : index
    %113 = vector.load %arg20[%c9_115, %c0_116] : memref<43x128xbf16, #tpu.memory_space<vmem>>, vector<32x128xbf16>
    %c4_117 = arith.constant 4 : index
    %c0_118 = arith.constant 0 : index
    %c0_119 = arith.constant 0 : index
    %114 = vector.load %arg8[%c4_117, %c0_118, %c0_119] : memref<7x128x256xbf16, #tpu.memory_space<vmem>>, vector<1x128x256xbf16>
    %115 = vector.shape_cast %114 : vector<1x128x256xbf16> to vector<128x256xbf16>
    %cst_120 = arith.constant dense<0.000000e+00> : vector<32x256xf32>
    %116 = tpu.matmul %113, %115, %cst_120 {dimension_numbers = #tpu.dot_dimension_numbers<[1], [0], [0], [1], [0, 0, 1, 1], [], []>} : vector<32x128xbf16>, vector<128x256xbf16>, vector<32x256xf32> -> vector<32x256xf32>
    %117 = arith.addf %112, %116 : vector<32x256xf32>
    %c10_121 = arith.constant 10 : index
    %c0_122 = arith.constant 0 : index
    %118 = vector.load %arg20[%c10_121, %c0_122] : memref<43x128xbf16, #tpu.memory_space<vmem>>, vector<32x128xbf16>
    %c5_123 = arith.constant 5 : index
    %c0_124 = arith.constant 0 : index
    %c0_125 = arith.constant 0 : index
    %119 = vector.load %arg8[%c5_123, %c0_124, %c0_125] : memref<7x128x256xbf16, #tpu.memory_space<vmem>>, vector<1x128x256xbf16>
    %120 = vector.shape_cast %119 : vector<1x128x256xbf16> to vector<128x256xbf16>
    %cst_126 = arith.constant dense<0.000000e+00> : vector<32x256xf32>
    %121 = tpu.matmul %118, %120, %cst_126 {dimension_numbers = #tpu.dot_dimension_numbers<[1], [0], [0], [1], [0, 0, 1, 1], [], []>} : vector<32x128xbf16>, vector<128x256xbf16>, vector<32x256xf32> -> vector<32x256xf32>
    %122 = arith.addf %117, %121 : vector<32x256xf32>
    %c11_127 = arith.constant 11 : index
    %c0_128 = arith.constant 0 : index
    %123 = vector.load %arg20[%c11_127, %c0_128] : memref<43x128xbf16, #tpu.memory_space<vmem>>, vector<32x128xbf16>
    %c6_129 = arith.constant 6 : index
    %c0_130 = arith.constant 0 : index
    %c0_131 = arith.constant 0 : index
    %124 = vector.load %arg8[%c6_129, %c0_130, %c0_131] : memref<7x128x256xbf16, #tpu.memory_space<vmem>>, vector<1x128x256xbf16>
    %125 = vector.shape_cast %124 : vector<1x128x256xbf16> to vector<128x256xbf16>
    %cst_132 = arith.constant dense<0.000000e+00> : vector<32x256xf32>
    %126 = tpu.matmul %123, %125, %cst_132 {dimension_numbers = #tpu.dot_dimension_numbers<[1], [0], [0], [1], [0, 0, 1, 1], [], []>} : vector<32x128xbf16>, vector<128x256xbf16>, vector<32x256xf32> -> vector<32x256xf32>
    %127 = arith.addf %122, %126 : vector<32x256xf32>
    %c0_133 = arith.constant 0 : index
    %c0_134 = arith.constant 0 : index
    %128 = vector.load %arg9[%c0_133, %c0_134] : memref<1x256xf32, #tpu.memory_space<vmem>>, vector<1x256xf32>
    %129 = vector.broadcast %128 : vector<1x256xf32> to vector<32x256xf32>
    %130 = arith.mulf %127, %129 : vector<32x256xf32>
    %c0_135 = arith.constant 0 : index
    %c0_136 = arith.constant 0 : index
    %131 = vector.load %arg10[%c0_135, %c0_136] : memref<1x256xf32, #tpu.memory_space<vmem>>, vector<1x256xf32>
    %132 = vector.broadcast %131 : vector<1x256xf32> to vector<32x256xf32>
    %133 = arith.addf %130, %132 : vector<32x256xf32>
    %cst_137 = arith.constant 0.000000e+00 : f32
    %134 = vector.broadcast %cst_137 : f32 to vector<32x256xf32>
    %135 = arith.maximumf %133, %134 : vector<32x256xf32>
    %136 = arith.truncf %135 : vector<32x256xf32> to vector<32x256xbf16>
    %c8_138 = arith.constant 8 : index
    %c0_139 = arith.constant 0 : index
    %137 = vector.load %arg21[%c8_138, %c0_139] : memref<41x256xbf16, #tpu.memory_space<vmem>>, vector<32x256xbf16>
    tpu.vector_store %arg21[%c8_138, %c0_139], %136 {strides = array<i32>} : memref<41x256xbf16, #tpu.memory_space<vmem>>, vector<32x256xbf16>,
    %cst_140 = arith.constant 0.000000e+00 : f32
    %138 = vector.broadcast %cst_140 : f32 to vector<1x256xf32>
    %c7_141 = arith.constant 7 : index
    %c0_142 = arith.constant 0 : index
    %139 = vector.load %arg21[%c7_141, %c0_142] : memref<41x256xbf16, #tpu.memory_space<vmem>>, vector<32x256xbf16>
    %c0_143 = arith.constant 0 : index
    %c0_144 = arith.constant 0 : index
    %c0_145 = arith.constant 0 : index
    %140 = vector.load %arg11[%c0_143, %c0_144, %c0_145] : memref<3x256x256xbf16, #tpu.memory_space<vmem>>, vector<1x256x256xbf16>
    %141 = vector.shape_cast %140 : vector<1x256x256xbf16> to vector<256x256xbf16>
    %cst_146 = arith.constant dense<0.000000e+00> : vector<32x256xf32>
    %142 = tpu.matmul %139, %141, %cst_146 {dimension_numbers = #tpu.dot_dimension_numbers<[1], [0], [0], [1], [0, 0, 1, 1], [], []>} : vector<32x256xbf16>, vector<256x256xbf16>, vector<32x256xf32> -> vector<32x256xf32>
    %c8_147 = arith.constant 8 : index
    %c0_148 = arith.constant 0 : index
    %143 = vector.load %arg21[%c8_147, %c0_148] : memref<41x256xbf16, #tpu.memory_space<vmem>>, vector<32x256xbf16>
    %c1_149 = arith.constant 1 : index
    %c0_150 = arith.constant 0 : index
    %c0_151 = arith.constant 0 : index
    %144 = vector.load %arg11[%c1_149, %c0_150, %c0_151] : memref<3x256x256xbf16, #tpu.memory_space<vmem>>, vector<1x256x256xbf16>
    %145 = vector.shape_cast %144 : vector<1x256x256xbf16> to vector<256x256xbf16>
    %cst_152 = arith.constant dense<0.000000e+00> : vector<32x256xf32>
    %146 = tpu.matmul %143, %145, %cst_152 {dimension_numbers = #tpu.dot_dimension_numbers<[1], [0], [0], [1], [0, 0, 1, 1], [], []>} : vector<32x256xbf16>, vector<256x256xbf16>, vector<32x256xf32> -> vector<32x256xf32>
    %147 = arith.addf %142, %146 : vector<32x256xf32>
    %c9_153 = arith.constant 9 : index
    %c0_154 = arith.constant 0 : index
    %148 = vector.load %arg21[%c9_153, %c0_154] : memref<41x256xbf16, #tpu.memory_space<vmem>>, vector<32x256xbf16>
    %c2_155 = arith.constant 2 : index
    %c0_156 = arith.constant 0 : index
    %c0_157 = arith.constant 0 : index
    %149 = vector.load %arg11[%c2_155, %c0_156, %c0_157] : memref<3x256x256xbf16, #tpu.memory_space<vmem>>, vector<1x256x256xbf16>
    %150 = vector.shape_cast %149 : vector<1x256x256xbf16> to vector<256x256xbf16>
    %cst_158 = arith.constant dense<0.000000e+00> : vector<32x256xf32>
    %151 = tpu.matmul %148, %150, %cst_158 {dimension_numbers = #tpu.dot_dimension_numbers<[1], [0], [0], [1], [0, 0, 1, 1], [], []>} : vector<32x256xbf16>, vector<256x256xbf16>, vector<32x256xf32> -> vector<32x256xf32>
    %152 = arith.addf %147, %151 : vector<32x256xf32>
    %c0_159 = arith.constant 0 : index
    %c0_160 = arith.constant 0 : index
    %153 = vector.load %arg12[%c0_159, %c0_160] : memref<1x256xf32, #tpu.memory_space<vmem>>, vector<1x256xf32>
    %154 = vector.broadcast %153 : vector<1x256xf32> to vector<32x256xf32>
    %155 = arith.mulf %152, %154 : vector<32x256xf32>
    %c0_161 = arith.constant 0 : index
    %c0_162 = arith.constant 0 : index
    %156 = vector.load %arg13[%c0_161, %c0_162] : memref<1x256xf32, #tpu.memory_space<vmem>>, vector<1x256xf32>
    %157 = vector.broadcast %156 : vector<1x256xf32> to vector<32x256xf32>
    %158 = arith.addf %155, %157 : vector<32x256xf32>
    %cst_163 = arith.constant 0.000000e+00 : f32
    %159 = vector.broadcast %cst_163 : f32 to vector<32x256xf32>
    %160 = arith.maximumf %158, %159 : vector<32x256xf32>
    %cst_164 = arith.constant dense<0.000000e+00> : vector<256xf32>
    %161 = vector.multi_reduction <add>, %160, %cst_164 [0] : vector<32x256xf32> to vector<256xf32>
    %162 = vector.shape_cast %161 : vector<256xf32> to vector<1x256xf32>
    %163 = arith.addf %138, %162 : vector<1x256xf32>
    %cst_165 = arith.constant 3.125000e-02 : f32
    %164 = vector.broadcast %cst_165 : f32 to vector<1x256xf32>
    %165 = arith.mulf %163, %164 : vector<1x256xf32>
    %166 = arith.truncf %165 : vector<1x256xf32> to vector<1x256xbf16>
    %c0_166 = arith.constant 0 : index
    %c0_167 = arith.constant 0 : index
    %167 = vector.load %arg14[%c0_166, %c0_167] : memref<256x128xbf16, #tpu.memory_space<vmem>>, vector<256x128xbf16>
    %cst_168 = arith.constant dense<0.000000e+00> : vector<1x128xf32>
    %168 = tpu.matmul %166, %167, %cst_168 {dimension_numbers = #tpu.dot_dimension_numbers<[1], [0], [0], [1], [0, 0, 1, 1], [], []>} : vector<1x256xbf16>, vector<256x128xbf16>, vector<1x128xf32> -> vector<1x128xf32>
    %c0_169 = arith.constant 0 : index
    %c0_170 = arith.constant 0 : index
    %169 = vector.load %arg15[%c0_169, %c0_170] : memref<1x128xf32, #tpu.memory_space<vmem>>, vector<1x128xf32>
    %170 = arith.addf %168, %169 : vector<1x128xf32>
    %cst_171 = arith.constant 0.000000e+00 : f32
    %171 = vector.broadcast %cst_171 : f32 to vector<1x128xf32>
    %172 = arith.maximumf %170, %171 : vector<1x128xf32>
    %173 = arith.truncf %172 : vector<1x128xf32> to vector<1x128xbf16>
    %c0_172 = arith.constant 0 : index
    %c0_173 = arith.constant 0 : index
    %174 = vector.load %arg16[%c0_172, %c0_173] : memref<128x128xbf16, #tpu.memory_space<vmem>>, vector<128x128xbf16>
    %cst_174 = arith.constant dense<0.000000e+00> : vector<1x128xf32>
    %175 = tpu.matmul %173, %174, %cst_174 {dimension_numbers = #tpu.dot_dimension_numbers<[1], [0], [0], [1], [0, 0, 1, 1], [], []>} : vector<1x128xbf16>, vector<128x128xbf16>, vector<1x128xf32> -> vector<1x128xf32>
    %c0_175 = arith.constant 0 : index
    %c0_176 = arith.constant 0 : index
    %176 = vector.load %arg17[%c0_175, %c0_176] : memref<1x128xf32, #tpu.memory_space<vmem>>, vector<1x128xf32>
    %177 = arith.addf %175, %176 : vector<1x128xf32>
    %cst_177 = arith.constant 0.000000e+00 : f32
    %178 = vector.broadcast %cst_177 : f32 to vector<1x128xf32>
    %179 = arith.maximumf %177, %178 : vector<1x128xf32>
    %c0_178 = arith.constant 0 : index
    %c0_179 = arith.constant 0 : index
    %c0_180 = arith.constant 0 : index
    %180 = vector.load %arg18[%c0_178, %c0_179, %c0_180] : memref<1x1x128xf32, #tpu.memory_space<vmem>>, vector<1x1x128xf32>
    %181 = vector.shape_cast %180 : vector<1x1x128xf32> to vector<1x128xf32>
    %182 = vector.shape_cast %179 : vector<1x128xf32> to vector<1x1x128xf32>
    tpu.vector_store %arg18[%c0_178, %c0_179, %c0_180], %182 {strides = array<i32>} : memref<1x1x128xf32, #tpu.memory_space<vmem>>, vector<1x1x128xf32>,
    return
  }
  func.func @transform_0(%arg0: i32) -> (i32, i32, i32) {
    %c0_i32 = arith.constant 0 : i32
    %c0_i32_0 = arith.constant 0 : i32
    %c0_i32_1 = arith.constant 0 : i32
    return %arg0, %c0_i32, %c0_i32_0 : i32, i32, i32
  }
  func.func @transform_1(%arg0: i32) -> (i32, i32) {
    %c0_i32 = arith.constant 0 : i32
    %c0_i32_0 = arith.constant 0 : i32
    %c0_i32_1 = arith.constant 0 : i32
    return %c0_i32, %c0_i32_0 : i32, i32
  }
  func.func @transform_2(%arg0: i32) -> (i32, i32) {
    %c0_i32 = arith.constant 0 : i32
    %c0_i32_0 = arith.constant 0 : i32
    %c0_i32_1 = arith.constant 0 : i32
    return %c0_i32, %c0_i32_0 : i32, i32
  }
  func.func @transform_3(%arg0: i32) -> (i32, i32) {
    %c0_i32 = arith.constant 0 : i32
    %c0_i32_0 = arith.constant 0 : i32
    %c0_i32_1 = arith.constant 0 : i32
    return %c0_i32, %c0_i32_0 : i32, i32
  }
  func.func @transform_4(%arg0: i32) -> (i32, i32, i32) {
    %c0_i32 = arith.constant 0 : i32
    %c0_i32_0 = arith.constant 0 : i32
    %c0_i32_1 = arith.constant 0 : i32
    %c0_i32_2 = arith.constant 0 : i32
    return %c0_i32, %c0_i32_0, %c0_i32_1 : i32, i32, i32
  }
  func.func @transform_5(%arg0: i32) -> (i32, i32) {
    %c0_i32 = arith.constant 0 : i32
    %c0_i32_0 = arith.constant 0 : i32
    %c0_i32_1 = arith.constant 0 : i32
    return %c0_i32, %c0_i32_0 : i32, i32
  }
  func.func @transform_6(%arg0: i32) -> (i32, i32) {
    %c0_i32 = arith.constant 0 : i32
    %c0_i32_0 = arith.constant 0 : i32
    %c0_i32_1 = arith.constant 0 : i32
    return %c0_i32, %c0_i32_0 : i32, i32
  }
  func.func @transform_7(%arg0: i32) -> (i32, i32, i32) {
    %c0_i32 = arith.constant 0 : i32
    %c0_i32_0 = arith.constant 0 : i32
    %c0_i32_1 = arith.constant 0 : i32
    %c0_i32_2 = arith.constant 0 : i32
    return %c0_i32, %c0_i32_0, %c0_i32_1 : i32, i32, i32
  }
  func.func @transform_8(%arg0: i32) -> (i32, i32) {
    %c0_i32 = arith.constant 0 : i32
    %c0_i32_0 = arith.constant 0 : i32
    %c0_i32_1 = arith.constant 0 : i32
    return %c0_i32, %c0_i32_0 : i32, i32
  }
  func.func @transform_9(%arg0: i32) -> (i32, i32) {
    %c0_i32 = arith.constant 0 : i32
    %c0_i32_0 = arith.constant 0 : i32
    %c0_i32_1 = arith.constant 0 : i32
    return %c0_i32, %c0_i32_0 : i32, i32
  }
  func.func @transform_10(%arg0: i32) -> (i32, i32, i32) {
    %c0_i32 = arith.constant 0 : i32
    %c0_i32_0 = arith.constant 0 : i32
    %c0_i32_1 = arith.constant 0 : i32
    %c0_i32_2 = arith.constant 0 : i32
    return %c0_i32, %c0_i32_0, %c0_i32_1 : i32, i32, i32
  }
  func.func @transform_11(%arg0: i32) -> (i32, i32) {
    %c0_i32 = arith.constant 0 : i32
    %c0_i32_0 = arith.constant 0 : i32
    %c0_i32_1 = arith.constant 0 : i32
    return %c0_i32, %c0_i32_0 : i32, i32
  }
  func.func @transform_12(%arg0: i32) -> (i32, i32) {
    %c0_i32 = arith.constant 0 : i32
    %c0_i32_0 = arith.constant 0 : i32
    %c0_i32_1 = arith.constant 0 : i32
    return %c0_i32, %c0_i32_0 : i32, i32
  }
  func.func @transform_13(%arg0: i32) -> (i32, i32) {
    %c0_i32 = arith.constant 0 : i32
    %c0_i32_0 = arith.constant 0 : i32
    %c0_i32_1 = arith.constant 0 : i32
    return %c0_i32, %c0_i32_0 : i32, i32
  }
  func.func @transform_14(%arg0: i32) -> (i32, i32) {
    %c0_i32 = arith.constant 0 : i32
    %c0_i32_0 = arith.constant 0 : i32
    %c0_i32_1 = arith.constant 0 : i32
    return %c0_i32, %c0_i32_0 : i32, i32
  }
  func.func @transform_15(%arg0: i32) -> (i32, i32) {
    %c0_i32 = arith.constant 0 : i32
    %c0_i32_0 = arith.constant 0 : i32
    %c0_i32_1 = arith.constant 0 : i32
    return %c0_i32, %c0_i32_0 : i32, i32
  }
  func.func @transform_16(%arg0: i32) -> (i32, i32) {
    %c0_i32 = arith.constant 0 : i32
    %c0_i32_0 = arith.constant 0 : i32
    %c0_i32_1 = arith.constant 0 : i32
    return %c0_i32, %c0_i32_0 : i32, i32
  }
  func.func @transform_17(%arg0: i32) -> (i32, i32, i32) {
    %c0_i32 = arith.constant 0 : i32
    %c0_i32_0 = arith.constant 0 : i32
    %c0_i32_1 = arith.constant 0 : i32
    return %arg0, %c0_i32, %c0_i32_0 : i32, i32, i32
  }
}

</mosaic_0001>

<llo_original>
// kernel: forward.1
$region0: #{forward.1}
  #allocation0 [shape = 'u32[]', space=smem, size = 0x4, offset = 0x4, fixed_abs, tag = 'smem constant byte address 0x4 - core index']
  #allocation1 [shape = 'u32[144,128]{1,0:T(1,128)}', space=vmem, size = 0x12000, scoped, tag = 'internal scratch']
  #allocation2 [shape = 'bf16[46,128]{1,0:T(8,128)(2,1)}', space=vmem, size = 0x3000, scoped, tag = 'scratch operand']
  #allocation3 [shape = 'bf16[43,128]{1,0:T(8,128)(2,1)}', space=vmem, size = 0x3000, scoped, tag = 'scratch operand']
  #allocation4 [shape = 'bf16[41,256]{1,0:T(8,128)(2,1)}', space=vmem, size = 0x6000, scoped, tag = 'scratch operand']
  %s0 = inlined_call_operand.vmem [shape: bf16[2,32,256], index: 0, kind: input, shape index: {}]
  %s1 = inlined_call_operand.vmem [shape: bf16[256,128], index: 1, kind: input, shape index: {}]
  %s2 = inlined_call_operand.vmem [shape: f32[1,128], index: 2, kind: input, shape index: {}]
  %s3 = inlined_call_operand.vmem [shape: f32[1,128], index: 3, kind: input, shape index: {}]
  %s4 = inlined_call_operand.vmem [shape: bf16[13,128,128], index: 4, kind: input, shape index: {}]
  %s5 = inlined_call_operand.vmem [shape: f32[1,128], index: 5, kind: input, shape index: {}]
  %s6 = inlined_call_operand.hbm [shape: f32[1,128], index: 6, kind: input, shape index: {}]
  %s7 = inlined_call_operand.vmem [shape: bf16[7,128,256], index: 7, kind: input, shape index: {}]
  %s8 = inlined_call_operand.vmem [shape: f32[1,256], index: 8, kind: input, shape index: {}]
  %s9 = inlined_call_operand.vmem [shape: f32[1,256], index: 9, kind: input, shape index: {}]
  %s10 = inlined_call_operand.vmem [shape: bf16[3,256,256], index: 10, kind: input, shape index: {}]
  %s11 = inlined_call_operand.vmem [shape: f32[1,256], index: 11, kind: input, shape index: {}]
  %s12 = inlined_call_operand.vmem [shape: f32[1,256], index: 12, kind: input, shape index: {}]
  %s13 = inlined_call_operand.vmem [shape: bf16[256,128], index: 13, kind: input, shape index: {}]
  %s14 = inlined_call_operand.vmem [shape: f32[1,128], index: 14, kind: input, shape index: {}]
  %s15 = inlined_call_operand.hbm [shape: bf16[128,128], index: 15, kind: input, shape index: {}]
  %s16 = inlined_call_operand.vmem [shape: f32[1,128], index: 16, kind: input, shape index: {}]
  %s17 = inlined_call_operand.hbm [shape: f32[2,1,128], index: 17, kind: output, shape index: {}]
  %s18 = sld [smem:[#allocation0]]
  $region109: #{forward.1} parent=0
    _
  %s20 = ssub.s32 1, %s18
  %s21 = scalar_select 0, %s20, %s18
  $region1: #{forward.1} parent=0
    #allocation5 [shape = 'u8[512]{0}', space=vmem, size = 0x400, scoped, tag = 'input window, operand 6, single buffered']
    #allocation6 [shape = 's32[2]{0}', space=sflag, size = 0x8, scoped, tag = 'scoped memory for forward.1']
    #allocation7 [shape = 's32[2]{0}', space=sflag, size = 0x8, scoped, tag = 'scoped memory for forward.1']
    #allocation8 [shape = 'u8[32768]{0}', space=vmem, size = 0x8000, scoped, tag = 'input window, operand 15, single buffered']
    #allocation9 [shape = 's32[1]{0}', space=sflag, size = 0x4, scoped, tag = 'scoped memory for forward.1']
    #allocation10 [shape = 'u8[1024]{0}', space=vmem, size = 0x400, scoped, tag = 'output window, operand 0']
    %22 = vsyncpa [#allocation6], 0
    %23 = vsyncpa [#allocation9], 0
    %24 = vsyncpa [#allocation7], 0
    %s25 = scalar_lea.sflag [#allocation7], 1
    %26 = vsyncpa %s25, 0
    loop: start=0, step=1, limit=4
    $region2: #{forward.1} parent=1 // loop_pre_header
      _
    $region3: #{forward.1} parent=1 // loop_header
      %s28 = sphi 0, %s32
      %p29 = scmp.ge.s32.totalorder %s28, 4
      %s38 = sphi 0, %s40
      %s41 = sphi 0, %s38
      %s42 = sphi 0, %s41
      %s58 = sphi 0, %s42
      %s62 = sphi 0, %s62
      %s64 = sphi 0, %s62
      %s65 = sphi 0, %s64
      %s79 = sphi 0, %s65
      %s83 = sphi 0, %s83
      %s85 = sphi 0, %s83
      %s86 = sphi 0, %s85
      %s100 = sphi 0, %s86
      %s104 = sphi 0, %s104
      %s106 = sphi 0, %s104
      %s107 = sphi 0, %s106
      %s121 = sphi 0, %s107
      %s125 = sphi 0, %s125
      %s127 = sphi 0, %s125
      %s128 = sphi 0, %s127
      %s142 = sphi 0, %s128
      %s146 = sphi 0, %s146
      %s148 = sphi 0, %s146
      %s149 = sphi 0, %s148
      %s163 = sphi 0, %s149
      %s167 = sphi 0, %s167
      %s169 = sphi 0, %s167
      %s170 = sphi 0, %s169
      %s184 = sphi 0, %s170
      %s188 = sphi 0, %s188
      %s190 = sphi 0, %s188
      %s191 = sphi 0, %s190
      %s205 = sphi 0, %s191
      %s209 = sphi 0, %s209
      %s211 = sphi 0, %s209
      %s212 = sphi 0, %s211
      %s226 = sphi 0, %s212
      %s230 = sphi 0, %s230
      %s232 = sphi 0, %s230
      %s233 = sphi 0, %s232
      %s247 = sphi 0, %s233
      %s251 = sphi 0, %s251
      %s253 = sphi 0, %s251
      %s254 = sphi 0, %s253
      %s268 = sphi 0, %s254
      %s272 = sphi 0, %s272
      %s274 = sphi 0, %s272
      %s275 = sphi 0, %s274
      %s289 = sphi 0, %s275
      %s293 = sphi 0, %s293
      %s295 = sphi 0, %s293
      %s296 = sphi 0, %s295
      %s310 = sphi 0, %s296
      %s314 = sphi 0, %s314
      %s316 = sphi 0, %s314
      %s317 = sphi 0, %s316
      %s331 = sphi 0, %s317
      %s335 = sphi 0, %s335
      %s337 = sphi 0, %s335
      %s338 = sphi 0, %s337
      %s352 = sphi 0, %s338
      %s356 = sphi 0, %s356
      %s358 = sphi 0, %s356
      %s359 = sphi 0, %s358
      %s373 = sphi 0, %s359
      %s377 = sphi 0, %s377
      %s379 = sphi 0, %s377
      %s380 = sphi 0, %s379
      %s394 = sphi 0, %s380
      %s400 = sphi 0, %s402
      %s403 = sphi 0, %s400
      %s404 = sphi 0, %s403
      %s420 = sphi 0, %s404
    $region4: #{forward.1} parent=1 // loop_header_branch
      %31 = sbr.rel (%p29) target = $region8
    $region5: #{forward.1} parent=1 // loop_body
      %s33 = ssub.s32 %s28, 1
      %s34 = ssub.s32 %s28, 2
      %s35 = sadd.s32 %s28, 1
      %s36 = ssub.s32 %s28, %s35
      %p37 = scmp.eq.s32.totalorder %s36, 0
      %s39 = sadd.s32 %s38, 1
      %s40 = scalar_select %p37, %s38, %s39
      %p43 = pneg %p37
      %p44 = scmp.eq.s32.totalorder %s28, 1
      %p45 = por %p43, %p44
      %p46 = scmp.ne.s32.totalorder %s38, %s41
      %p47 = scmp.eq.s32.totalorder %s28, 0
      %p48 = por %p46, %p47
      %p49 = scmp.ne.s32.totalorder %s38, %s41
      %p50 = scmp.eq.s32.totalorder %s33, 1
      %p51 = por %p49, %p50
      %p52 = scmp.ne.s32.totalorder %s41, %s42
      %p53 = scmp.eq.s32.totalorder %s33, 0
      %p54 = por %p52, %p53
      %p55 = scmp.ne.s32.totalorder %s41, %s42
      %p56 = scmp.eq.s32.totalorder %s34, 1
      %p57 = por %p55, %p56
      %p59 = scmp.ne.s32.totalorder %s42, %s58
      %p60 = scmp.eq.s32.totalorder %s34, 0
      %p61 = por %p59, %p60
      %s63 = sadd.s32 %s62, 1
      %p66 = scmp.eq.s32.totalorder %s28, 1
      %p67 = scmp.ne.s32.totalorder %s62, %s64
      %p68 = scmp.eq.s32.totalorder %s28, 0
      %p69 = por %p67, %p68
      %p70 = scmp.ne.s32.totalorder %s62, %s64
      %p71 = scmp.eq.s32.totalorder %s33, 1
      %p72 = por %p70, %p71
      %p73 = scmp.ne.s32.totalorder %s64, %s65
      %p74 = scmp.eq.s32.totalorder %s33, 0
      %p75 = por %p73, %p74
      %p76 = scmp.ne.s32.totalorder %s64, %s65
      %p77 = scmp.eq.s32.totalorder %s34, 1
      %p78 = por %p76, %p77
      %p80 = scmp.ne.s32.totalorder %s65, %s79
      %p81 = scmp.eq.s32.totalorder %s34, 0
      %p82 = por %p80, %p81
      %s84 = sadd.s32 %s83, 1
      %p87 = scmp.eq.s32.totalorder %s28, 1
      %p88 = scmp.ne.s32.totalorder %s83, %s85
      %p89 = scmp.eq.s32.totalorder %s28, 0
      %p90 = por %p88, %p89
      %p91 = scmp.ne.s32.totalorder %s83, %s85
      %p92 = scmp.eq.s32.totalorder %s33, 1
      %p93 = por %p91, %p92
      %p94 = scmp.ne.s32.totalorder %s85, %s86
      %p95 = scmp.eq.s32.totalorder %s33, 0
      %p96 = por %p94, %p95
      %p97 = scmp.ne.s32.totalorder %s85, %s86
      %p98 = scmp.eq.s32.totalorder %s34, 1
      %p99 = por %p97, %p98
      %p101 = scmp.ne.s32.totalorder %s86, %s100
      %p102 = scmp.eq.s32.totalorder %s34, 0
      %p103 = por %p101, %p102
      %s105 = sadd.s32 %s104, 1
      %p108 = scmp.eq.s32.totalorder %s28, 1
      %p109 = scmp.ne.s32.totalorder %s104, %s106
      %p110 = scmp.eq.s32.totalorder %s28, 0
      %p111 = por %p109, %p110
      %p112 = scmp.ne.s32.totalorder %s104, %s106
      %p113 = scmp.eq.s32.totalorder %s33, 1
      %p114 = por %p112, %p113
      %p115 = scmp.ne.s32.totalorder %s106, %s107
      %p116 = scmp.eq.s32.totalorder %s33, 0
      %p117 = por %p115, %p116
      %p118 = scmp.ne.s32.totalorder %s106, %s107
      %p119 = scmp.eq.s32.totalorder %s34, 1
      %p120 = por %p118, %p119
      %p122 = scmp.ne.s32.totalorder %s107, %s121
      %p123 = scmp.eq.s32.totalorder %s34, 0
      %p124 = por %p122, %p123
      %s126 = sadd.s32 %s125, 1
      %p129 = scmp.eq.s32.totalorder %s28, 1
      %p130 = scmp.ne.s32.totalorder %s125, %s127
      %p131 = scmp.eq.s32.totalorder %s28, 0
      %p132 = por %p130, %p131
      %p133 = scmp.ne.s32.totalorder %s125, %s127
      %p134 = scmp.eq.s32.totalorder %s33, 1
      %p135 = por %p133, %p134
      %p136 = scmp.ne.s32.totalorder %s127, %s128
      %p137 = scmp.eq.s32.totalorder %s33, 0
      %p138 = por %p136, %p137
      %p139 = scmp.ne.s32.totalorder %s127, %s128
      %p140 = scmp.eq.s32.totalorder %s34, 1
      %p141 = por %p139, %p140
      %p143 = scmp.ne.s32.totalorder %s128, %s142
      %p144 = scmp.eq.s32.totalorder %s34, 0
      %p145 = por %p143, %p144
      %s147 = sadd.s32 %s146, 1
      %p150 = scmp.eq.s32.totalorder %s28, 1
      %p151 = scmp.ne.s32.totalorder %s146, %s148
      %p152 = scmp.eq.s32.totalorder %s28, 0
      %p153 = por %p151, %p152
      %p154 = scmp.ne.s32.totalorder %s146, %s148
      %p155 = scmp.eq.s32.totalorder %s33, 1
      %p156 = por %p154, %p155
      %p157 = scmp.ne.s32.totalorder %s148, %s149
      %p158 = scmp.eq.s32.totalorder %s33, 0
      %p159 = por %p157, %p158
      %p160 = scmp.ne.s32.totalorder %s148, %s149
      %p161 = scmp.eq.s32.totalorder %s34, 1
      %p162 = por %p160, %p161
      %p164 = scmp.ne.s32.totalorder %s149, %s163
      %p165 = scmp.eq.s32.totalorder %s34, 0
      %p166 = por %p164, %p165
      %s168 = sadd.s32 %s167, 1
      %p171 = scmp.eq.s32.totalorder %s28, 1
      %p172 = scmp.ne.s32.totalorder %s167, %s169
      %p173 = scmp.eq.s32.totalorder %s28, 0
      %p174 = por %p172, %p173
      %p175 = scmp.ne.s32.totalorder %s167, %s169
      %p176 = scmp.eq.s32.totalorder %s33, 1
      %p177 = por %p175, %p176
      %p178 = scmp.ne.s32.totalorder %s169, %s170
      %p179 = scmp.eq.s32.totalorder %s33, 0
      %p180 = por %p178, %p179
      %p181 = scmp.ne.s32.totalorder %s169, %s170
      %p182 = scmp.eq.s32.totalorder %s34, 1
      %p183 = por %p181, %p182
      %p185 = scmp.ne.s32.totalorder %s170, %s184
      %p186 = scmp.eq.s32.totalorder %s34, 0
      %p187 = por %p185, %p186
      %s189 = sadd.s32 %s188, 1
      %p192 = scmp.eq.s32.totalorder %s28, 1
      %p193 = scmp.ne.s32.totalorder %s188, %s190
      %p194 = scmp.eq.s32.totalorder %s28, 0
      %p195 = por %p193, %p194
      %p196 = scmp.ne.s32.totalorder %s188, %s190
      %p197 = scmp.eq.s32.totalorder %s33, 1
      %p198 = por %p196, %p197
      %p199 = scmp.ne.s32.totalorder %s190, %s191
      %p200 = scmp.eq.s32.totalorder %s33, 0
      %p201 = por %p199, %p200
      %p202 = scmp.ne.s32.totalorder %s190, %s191
      %p203 = scmp.eq.s32.totalorder %s34, 1
      %p204 = por %p202, %p203
      %p206 = scmp.ne.s32.totalorder %s191, %s205
      %p207 = scmp.eq.s32.totalorder %s34, 0
      %p208 = por %p206, %p207
      %s210 = sadd.s32 %s209, 1
      %p213 = scmp.eq.s32.totalorder %s28, 1
      %p214 = scmp.ne.s32.totalorder %s209, %s211
      %p215 = scmp.eq.s32.totalorder %s28, 0
      %p216 = por %p214, %p215
      %p217 = scmp.ne.s32.totalorder %s209, %s211
      %p218 = scmp.eq.s32.totalorder %s33, 1
      %p219 = por %p217, %p218
      %p220 = scmp.ne.s32.totalorder %s211, %s212
      %p221 = scmp.eq.s32.totalorder %s33, 0
      %p222 = por %p220, %p221
      %p223 = scmp.ne.s32.totalorder %s211, %s212
      %p224 = scmp.eq.s32.totalorder %s34, 1
      %p225 = por %p223, %p224
      %p227 = scmp.ne.s32.totalorder %s212, %s226
      %p228 = scmp.eq.s32.totalorder %s34, 0
      %p229 = por %p227, %p228
      %s231 = sadd.s32 %s230, 1
      %p234 = scmp.eq.s32.totalorder %s28, 1
      %p235 = scmp.ne.s32.totalorder %s230, %s232
      %p236 = scmp.eq.s32.totalorder %s28, 0
      %p237 = por %p235, %p236
      %p238 = scmp.ne.s32.totalorder %s230, %s232
      %p239 = scmp.eq.s32.totalorder %s33, 1
      %p240 = por %p238, %p239
      %p241 = scmp.ne.s32.totalorder %s232, %s233
      %p242 = scmp.eq.s32.totalorder %s33, 0
      %p243 = por %p241, %p242
      %p244 = scmp.ne.s32.totalorder %s232, %s233
      %p245 = scmp.eq.s32.totalorder %s34, 1
      %p246 = por %p244, %p245
      %p248 = scmp.ne.s32.totalorder %s233, %s247
      %p249 = scmp.eq.s32.totalorder %s34, 0
      %p250 = por %p248, %p249
      %s252 = sadd.s32 %s251, 1
      %p255 = scmp.eq.s32.totalorder %s28, 1
      %p256 = scmp.ne.s32.totalorder %s251, %s253
      %p257 = scmp.eq.s32.totalorder %s28, 0
      %p258 = por %p256, %p257
      %p259 = scmp.ne.s32.totalorder %s251, %s253
      %p260 = scmp.eq.s32.totalorder %s33, 1
      %p261 = por %p259, %p260
      %p262 = scmp.ne.s32.totalorder %s253, %s254
      %p263 = scmp.eq.s32.totalorder %s33, 0
      %p264 = por %p262, %p263
      %p265 = scmp.ne.s32.totalorder %s253, %s254
      %p266 = scmp.eq.s32.totalorder %s34, 1
      %p267 = por %p265, %p266
      %p269 = scmp.ne.s32.totalorder %s254, %s268
      %p270 = scmp.eq.s32.totalorder %s34, 0
      %p271 = por %p269, %p270
      %s273 = sadd.s32 %s272, 1
      %p276 = scmp.eq.s32.totalorder %s28, 1
      %p277 = scmp.ne.s32.totalorder %s272, %s274
      %p278 = scmp.eq.s32.totalorder %s28, 0
      %p279 = por %p277, %p278
      %p280 = scmp.ne.s32.totalorder %s272, %s274
      %p281 = scmp.eq.s32.totalorder %s33, 1
      %p282 = por %p280, %p281
      %p283 = scmp.ne.s32.totalorder %s274, %s275
      %p284 = scmp.eq.s32.totalorder %s33, 0
      %p285 = por %p283, %p284
      %p286 = scmp.ne.s32.totalorder %s274, %s275
      %p287 = scmp.eq.s32.totalorder %s34, 1
      %p288 = por %p286, %p287
      %p290 = scmp.ne.s32.totalorder %s275, %s289
      %p291 = scmp.eq.s32.totalorder %s34, 0
      %p292 = por %p290, %p291
      %s294 = sadd.s32 %s293, 1
      %p297 = scmp.eq.s32.totalorder %s28, 1
      %p298 = scmp.ne.s32.totalorder %s293, %s295
      %p299 = scmp.eq.s32.totalorder %s28, 0
      %p300 = por %p298, %p299
      %p301 = scmp.ne.s32.totalorder %s293, %s295
      %p302 = scmp.eq.s32.totalorder %s33, 1
      %p303 = por %p301, %p302
      %p304 = scmp.ne.s32.totalorder %s295, %s296
      %p305 = scmp.eq.s32.totalorder %s33, 0
      %p306 = por %p304, %p305
      %p307 = scmp.ne.s32.totalorder %s295, %s296
      %p308 = scmp.eq.s32.totalorder %s34, 1
      %p309 = por %p307, %p308
      %p311 = scmp.ne.s32.totalorder %s296, %s310
      %p312 = scmp.eq.s32.totalorder %s34, 0
      %p313 = por %p311, %p312
      %s315 = sadd.s32 %s314, 1
      %p318 = scmp.eq.s32.totalorder %s28, 1
      %p319 = scmp.ne.s32.totalorder %s314, %s316
      %p320 = scmp.eq.s32.totalorder %s28, 0
      %p321 = por %p319, %p320
      %p322 = scmp.ne.s32.totalorder %s314, %s316
      %p323 = scmp.eq.s32.totalorder %s33, 1
      %p324 = por %p322, %p323
      %p325 = scmp.ne.s32.totalorder %s316, %s317
      %p326 = scmp.eq.s32.totalorder %s33, 0
      %p327 = por %p325, %p326
      %p328 = scmp.ne.s32.totalorder %s316, %s317
      %p329 = scmp.eq.s32.totalorder %s34, 1
      %p330 = por %p328, %p329
      %p332 = scmp.ne.s32.totalorder %s317, %s331
      %p333 = scmp.eq.s32.totalorder %s34, 0
      %p334 = por %p332, %p333
      %s336 = sadd.s32 %s335, 1
      %p339 = scmp.eq.s32.totalorder %s28, 1
      %p340 = scmp.ne.s32.totalorder %s335, %s337
      %p341 = scmp.eq.s32.totalorder %s28, 0
      %p342 = por %p340, %p341
      %p343 = scmp.ne.s32.totalorder %s335, %s337
      %p344 = scmp.eq.s32.totalorder %s33, 1
      %p345 = por %p343, %p344
      %p346 = scmp.ne.s32.totalorder %s337, %s338
      %p347 = scmp.eq.s32.totalorder %s33, 0
      %p348 = por %p346, %p347
      %p349 = scmp.ne.s32.totalorder %s337, %s338
      %p350 = scmp.eq.s32.totalorder %s34, 1
      %p351 = por %p349, %p350
      %p353 = scmp.ne.s32.totalorder %s338, %s352
      %p354 = scmp.eq.s32.totalorder %s34, 0
      %p355 = por %p353, %p354
      %s357 = sadd.s32 %s356, 1
      %p360 = scmp.eq.s32.totalorder %s28, 1
      %p361 = scmp.ne.s32.totalorder %s356, %s358
      %p362 = scmp.eq.s32.totalorder %s28, 0
      %p363 = por %p361, %p362
      %p364 = scmp.ne.s32.totalorder %s356, %s358
      %p365 = scmp.eq.s32.totalorder %s33, 1
      %p366 = por %p364, %p365
      %p367 = scmp.ne.s32.totalorder %s358, %s359
      %p368 = scmp.eq.s32.totalorder %s33, 0
      %p369 = por %p367, %p368
      %p370 = scmp.ne.s32.totalorder %s358, %s359
      %p371 = scmp.eq.s32.totalorder %s34, 1
      %p372 = por %p370, %p371
      %p374 = scmp.ne.s32.totalorder %s359, %s373
      %p375 = scmp.eq.s32.totalorder %s34, 0
      %p376 = por %p374, %p375
      %s378 = sadd.s32 %s377, 1
      %p381 = scmp.eq.s32.totalorder %s28, 1
      %p382 = scmp.ne.s32.totalorder %s377, %s379
      %p383 = scmp.eq.s32.totalorder %s28, 0
      %p384 = por %p382, %p383
      %p385 = scmp.ne.s32.totalorder %s377, %s379
      %p386 = scmp.eq.s32.totalorder %s33, 1
      %p387 = por %p385, %p386
      %p388 = scmp.ne.s32.totalorder %s379, %s380
      %p389 = scmp.eq.s32.totalorder %s33, 0
      %p390 = por %p388, %p389
      %p391 = scmp.ne.s32.totalorder %s379, %s380
      %p392 = scmp.eq.s32.totalorder %s34, 1
      %p393 = por %p391, %p392
      %p395 = scmp.ne.s32.totalorder %s380, %s394
      %p396 = scmp.eq.s32.totalorder %s34, 0
      %p397 = por %p395, %p396
      %s398 = ssub.s32 %s28, %s35
      %p399 = scmp.eq.s32.totalorder %s398, 0
      %s401 = sadd.s32 %s400, 1
      %s402 = scalar_select %p399, %s400, %s401
      %p405 = pneg %p399
      %p406 = scmp.eq.s32.totalorder %s28, 1
      %p407 = por %p405, %p406
      %p408 = scmp.ne.s32.totalorder %s400, %s403
      %p409 = scmp.eq.s32.totalorder %s28, 0
      %p410 = por %p408, %p409
      %p411 = scmp.ne.s32.totalorder %s400, %s403
      %p412 = scmp.eq.s32.totalorder %s33, 1
      %p413 = por %p411, %p412
      %p414 = scmp.ne.s32.totalorder %s403, %s404
      %p415 = scmp.eq.s32.totalorder %s33, 0
      %p416 = por %p414, %p415
      %p417 = scmp.ne.s32.totalorder %s403, %s404
      %p418 = scmp.eq.s32.totalorder %s34, 1
      %p419 = por %p417, %p418
      %p421 = scmp.ne.s32.totalorder %s404, %s420
      %p422 = scmp.eq.s32.totalorder %s34, 0
      %p423 = por %p421, %p422
      %p424 = scmp.le.s32.totalorder 1, %s28
      %p425 = scmp.lt.s32.totalorder %s28, 3
      %p426 = pnand %p424, %p425
      %p427 = pneg %p426
      // Predicated region
      $region9: #{forward.1} parent=5 // pred_check
        _
      $region10: #{forward.1} parent=5 // pred_check_branch
        %429 = sbr.rel (%p426) target = $region12
      $region11: #{forward.1} parent=5 // pred_region
        %s430 = ssub.s32 %s28, 1
        // Predicated region
        $region13: #{forward.1} parent=11 // pred_check
          %p431 = pneg %p75
        $region14: #{forward.1} parent=11 // pred_check_branch
          %433 = sbr.rel (%p431) target = $region16
        $region15: #{forward.1} parent=11 // pred_region
          _
        $region16: #{forward.1} parent=11 // pred_fallthru
          _
        // Predicated region
        $region17: #{forward.1} parent=11 // pred_check
          %p434 = pneg %p96
        $region18: #{forward.1} parent=11 // pred_check_branch
          %436 = sbr.rel (%p434) target = $region20
        $region19: #{forward.1} parent=11 // pred_region
          _
        $region20: #{forward.1} parent=11 // pred_fallthru
          _
        // Predicated region
        $region21: #{forward.1} parent=11 // pred_check
          %p437 = pneg %p117
        $region22: #{forward.1} parent=11 // pred_check_branch
          %439 = sbr.rel (%p437) target = $region24
        $region23: #{forward.1} parent=11 // pred_region
          _
        $region24: #{forward.1} parent=11 // pred_fallthru
          _
        // Predicated region
        $region25: #{forward.1} parent=11 // pred_check
          %p440 = pneg %p138
        $region26: #{forward.1} parent=11 // pred_check_branch
          %442 = sbr.rel (%p440) target = $region28
        $region27: #{forward.1} parent=11 // pred_region
          _
        $region28: #{forward.1} parent=11 // pred_fallthru
          _
        // Predicated region
        $region29: #{forward.1} parent=11 // pred_check
          %p443 = pneg %p159
        $region30: #{forward.1} parent=11 // pred_check_branch
          %445 = sbr.rel (%p443) target = $region32
        $region31: #{forward.1} parent=11 // pred_region
          _
        $region32: #{forward.1} parent=11 // pred_fallthru
          _
        // Predicated region
        $region33: #{forward.1} parent=11 // pred_check
          %p446 = pneg %p180
        $region34: #{forward.1} parent=11 // pred_check_branch
          %448 = sbr.rel (%p446) target = $region36
        $region35: #{forward.1} parent=11 // pred_region
          %s450 = ssub.s32 16, 16
          %451 = vsyncadd [#allocation6], %s450
          %s453 = sshll.u32 [#allocation5], 4
          %s454 = int_to_ptr.vmem [resolvable:$true] %s453
          %456 = dma.hbm_to_vmem [thread:$0]  %s6, 16, %s454, [#allocation6]
        $region36: #{forward.1} parent=11 // pred_fallthru
          _
        // Predicated region
        $region37: #{forward.1} parent=11 // pred_check
          %p457 = pneg %p201
        $region38: #{forward.1} parent=11 // pred_check_branch
          %459 = sbr.rel (%p457) target = $region40
        $region39: #{forward.1} parent=11 // pred_region
          _
        $region40: #{forward.1} parent=11 // pred_fallthru
          _
        // Predicated region
        $region41: #{forward.1} parent=11 // pred_check
          %p460 = pneg %p222
        $region42: #{forward.1} parent=11 // pred_check_branch
          %462 = sbr.rel (%p460) target = $region44
        $region43: #{forward.1} parent=11 // pred_region
          _
        $region44: #{forward.1} parent=11 // pred_fallthru
          _
        // Predicated region
        $region45: #{forward.1} parent=11 // pred_check
          %p463 = pneg %p243
        $region46: #{forward.1} parent=11 // pred_check_branch
          %465 = sbr.rel (%p463) target = $region48
        $region47: #{forward.1} parent=11 // pred_region
          _
        $region48: #{forward.1} parent=11 // pred_fallthru
          _
        // Predicated region
        $region49: #{forward.1} parent=11 // pred_check
          %p466 = pneg %p264
        $region50: #{forward.1} parent=11 // pred_check_branch
          %468 = sbr.rel (%p466) target = $region52
        $region51: #{forward.1} parent=11 // pred_region
          _
        $region52: #{forward.1} parent=11 // pred_fallthru
          _
        // Predicated region
        $region53: #{forward.1} parent=11 // pred_check
          %p469 = pneg %p285
        $region54: #{forward.1} parent=11 // pred_check_branch
          %471 = sbr.rel (%p469) target = $region56
        $region55: #{forward.1} parent=11 // pred_region
          _
        $region56: #{forward.1} parent=11 // pred_fallthru
          _
        // Predicated region
        $region57: #{forward.1} parent=11 // pred_check
          %p472 = pneg %p306
        $region58: #{forward.1} parent=11 // pred_check_branch
          %474 = sbr.rel (%p472) target = $region60
        $region59: #{forward.1} parent=11 // pred_region
          _
        $region60: #{forward.1} parent=11 // pred_fallthru
          _
        // Predicated region
        $region61: #{forward.1} parent=11 // pred_check
          %p475 = pneg %p327
        $region62: #{forward.1} parent=11 // pred_check_branch
          %477 = sbr.rel (%p475) target = $region64
        $region63: #{forward.1} parent=11 // pred_region
          _
        $region64: #{forward.1} parent=11 // pred_fallthru
          _
        // Predicated region
        $region65: #{forward.1} parent=11 // pred_check
          %p478 = pneg %p348
        $region66: #{forward.1} parent=11 // pred_check_branch
          %480 = sbr.rel (%p478) target = $region68
        $region67: #{forward.1} parent=11 // pred_region
          _
        $region68: #{forward.1} parent=11 // pred_fallthru
          _
        // Predicated region
        $region69: #{forward.1} parent=11 // pred_check
          %p481 = pneg %p369
        $region70: #{forward.1} parent=11 // pred_check_branch
          %483 = sbr.rel (%p481) target = $region72
        $region71: #{forward.1} parent=11 // pred_region
          %s485 = ssub.s32 1024, 1024
          %486 = vsyncadd [#allocation9], %s485
          %s487 = sshll.u32 [#allocation8], 4
          %s488 = int_to_ptr.vmem [resolvable:$true] %s487
          %493 = dma.hbm_to_vmem [thread:$0]  %s15, 1024, %s488, [#allocation9], 64, 64, 4
        $region72: #{forward.1} parent=11 // pred_fallthru
          _
        // Predicated region
        $region73: #{forward.1} parent=11 // pred_check
          %p494 = pneg %p390
        $region74: #{forward.1} parent=11 // pred_check_branch
          %496 = sbr.rel (%p494) target = $region76
        $region75: #{forward.1} parent=11 // pred_region
          _
        $region76: #{forward.1} parent=11 // pred_fallthru
          _
      $region12: #{forward.1} parent=5 // pred_fallthru
        _
      %p497 = scmp.lt.s32.totalorder %s28, 2
      // Predicated region
      $region77: #{forward.1} parent=5 // pred_check
        %p498 = pneg %p497
      $region78: #{forward.1} parent=5 // pred_check_branch
        %500 = sbr.rel (%p498) target = $region80
      $region79: #{forward.1} parent=5 // pred_region
        // Predicated region
        $region81: #{forward.1} parent=79 // pred_check
          %p501 = pneg %p48
        $region82: #{forward.1} parent=79 // pred_check_branch
          %503 = sbr.rel (%p501) target = $region84
        $region83: #{forward.1} parent=79 // pred_region
          %p504 = scmp.lt.s32.totalorder %s28, 1
          %s505 = scalar_select %p504, %s28, 1
          %s506 = smul.addr %s505, 8
          %s507 = smul.addr %s506, 4
          %s508 = scalar_lea.vmem %s0, %s507
        $region84: #{forward.1} parent=79 // pred_fallthru
          _
      $region80: #{forward.1} parent=5 // pred_fallthru
        _
      %p509 = scmp.le.s32.totalorder 1, %s28
      %p510 = scmp.lt.s32.totalorder %s28, 3
      %p511 = pnand %p509, %p510
      %p512 = pneg %p511
      // Predicated region
      $region85: #{forward.1} parent=5 // pred_check
        _
      $region86: #{forward.1} parent=5 // pred_check_branch
        %514 = sbr.rel (%p511) target = $region88
      $region87: #{forward.1} parent=5 // pred_region
        %s515 = ssub.s32 %s28, 1
        // Predicated region
        $region89: #{forward.1} parent=87 // pred_check
          %p516 = pneg %p180
        $region90: #{forward.1} parent=87 // pred_check_branch
          %518 = sbr.rel (%p516) target = $region92
        $region91: #{forward.1} parent=87 // pred_region
          %519 = dma.done [#allocation6], 16
        $region92: #{forward.1} parent=87 // pred_fallthru
          _
        // Predicated region
        $region93: #{forward.1} parent=87 // pred_check
          %p520 = pneg %p369
        $region94: #{forward.1} parent=87 // pred_check_branch
          %522 = sbr.rel (%p520) target = $region96
        $region95: #{forward.1} parent=87 // pred_region
          %523 = dma.done [#allocation9], 1024
        $region96: #{forward.1} parent=87 // pred_fallthru
          _
        %p524 = scmp.lt.s32.totalorder %s33, 1
        %s525 = scalar_select %p524, %s33, 1
        %s526 = smul.addr %s525, 8
        %s527 = smul.addr %s526, 4
        %s528 = scalar_lea.vmem %s0, %s527
        %p529 = pneg %p54
        %p530 = pneg %p51
        %p531 = pneg %p75
        %p532 = pneg %p72
        %p533 = pneg %p96
        %p534 = pneg %p93
        %p535 = pneg %p117
        %p536 = pneg %p114
        %p537 = pneg %p138
        %p538 = pneg %p135
        %p539 = pneg %p159
        %p540 = pneg %p156
        %p541 = pneg %p180
        %p542 = pneg %p177
        %p543 = pneg %p201
        %p544 = pneg %p198
        %p545 = pneg %p222
        %p546 = pneg %p219
        %p547 = pneg %p243
        %p548 = pneg %p240
        %p549 = pneg %p264
        %p550 = pneg %p261
        %p551 = pneg %p285
        %p552 = pneg %p282
        %p553 = pneg %p306
        %p554 = pneg %p303
        %p555 = pneg %p327
        %p556 = pneg %p324
        %p557 = pneg %p348
        %p558 = pneg %p345
        %p559 = pneg %p369
        %p560 = pneg %p366
        %p561 = pneg %p390
        %p562 = pneg %p387
        %p563 = pneg %p416
        %p564 = pneg %p413
        %s565 = sand.u32 %s403, 1
        %s566 = scalar_lea.sflag [#allocation7], %s565
        %s567 = sand.u32 %s403, 1
        %s568 = scalar_lea.vmem [#allocation10], %s567
        %p569 = scmp.lt.s32.totalorder %s33, 1
        %s570 = scalar_select %p569, %s33, 1
        %s571 = smul.addr %s570, 8
        %s572 = smul.addr %s571, 4
        %s573 = scalar_lea.vmem %s0, %s572
        %575 = vst [vmem:[#allocation2] sm:$0xf] 0
        %576 = vst [vmem:[#allocation2 + $0x4] sm:$0xf] 0
        %577 = vst [vmem:[#allocation2 + $0x8] sm:$0xf] 0
        %578 = vst [vmem:[#allocation2 + $0xc] sm:$0xf] 0
        %579 = vst [vmem:[#allocation2 + $0x10] sm:$0xf] 0
        %580 = vst [vmem:[#allocation2 + $0x14] sm:$0x7] 0
        %581 = vst [vmem:[#allocation3] sm:$0xf] 0
        %582 = vst [vmem:[#allocation3 + $0x4] sm:$0xf] 0
        %583 = vst [vmem:[#allocation3 + $0x8] sm:$0xf] 0
        %584 = vst [vmem:[#allocation3 + $0xc] sm:$0xf] 0
        %585 = vst [vmem:[#allocation3 + $0x10] sm:$0xf] 0
        %vm586 = vcmask 1041408
        %vm587 = vsmask.f32 1280
        %vm588 = vmand %vm586, %vm587
        %v589 = vld [vmem:[#allocation3 + $0x14] sm:$0x3]
        %v590 = vsel %vm588, 0, %v589
        %591 = vst [vmem:[#allocation3 + $0x14] sm:$0x3] %v590
        %592 = vst [vmem:[#allocation4] sm:$0xff] 0
        %593 = vst [vmem:[#allocation4 + $0x8] sm:$0xff] 0
        %594 = vst [vmem:[#allocation4 + $0x10] sm:$0xff] 0
        %595 = vst [vmem:[#allocation4 + $0x18] sm:$0xff] 0
        %596 = vst [vmem:[#allocation4 + $0x20] sm:$0xff] 0
        %vm597 = vcmask 1040384
        %vm598 = vsmask.f32 256
        %vm599 = vmand %vm597, %vm598
        %vm600 = vcmask 1044484
        %vm601 = vsmask.f32 4352
        %vm602 = vmand %vm600, %vm601
        %vm603 = vmor %vm602, %vm599
        %v604 = vld [vmem:[#allocation4 + $0x28] sm:$0x11]
        %v605 = vsel %vm603, 0, %v604
        %606 = vst [vmem:[#allocation4 + $0x28] sm:$0x11] %v605
        %v607 = vld [vmem:[%s573] sm:$0xff]
        %v608 = vld [vmem:[%s573 + $0x8] sm:$0xff]
        %v609 = vld [vmem:[%s573 + $0x10] sm:$0xff]
        %v610 = vld [vmem:[%s573 + $0x18] sm:$0xff]
        %v611 = vld [vmem:[%s1] sm:$0xf]
        %v612 = vld [vmem:[%s1 + $0x4] sm:$0xf]
        %v613 = vld [vmem:[%s1 + $0x8] sm:$0xf]
        %v614 = vld [vmem:[%s1 + $0xc] sm:$0xf]
        %v615 = vld [vmem:[%s1 + $0x10] sm:$0xf]
        %v616 = vld [vmem:[%s1 + $0x14] sm:$0xf]
        %v617 = vld [vmem:[%s1 + $0x18] sm:$0xf]
        %v618 = vld [vmem:[%s1 + $0x1c] sm:$0xf]
        %v619 = vld [vmem:[%s1 + $0x20] sm:$0xf]
        %v620 = vld [vmem:[%s1 + $0x24] sm:$0xf]
        %v621 = vld [vmem:[%s1 + $0x28] sm:$0xf]
        %v622 = vld [vmem:[%s1 + $0x2c] sm:$0xf]
        %v623 = vld [vmem:[%s1 + $0x30] sm:$0xf]
        %v624 = vld [vmem:[%s1 + $0x34] sm:$0xf]
        %v625 = vld [vmem:[%s1 + $0x38] sm:$0xf]
        %v626 = vld [vmem:[%s1 + $0x3c] sm:$0xf]
        %v627 = vld [vmem:[%s1 + $0x40] sm:$0xf]
        %v628 = vld [vmem:[%s1 + $0x44] sm:$0xf]
        %v629 = vld [vmem:[%s1 + $0x48] sm:$0xf]
        %v630 = vld [vmem:[%s1 + $0x4c] sm:$0xf]
        %v631 = vld [vmem:[%s1 + $0x50] sm:$0xf]
        %v632 = vld [vmem:[%s1 + $0x54] sm:$0xf]
        %v633 = vld [vmem:[%s1 + $0x58] sm:$0xf]
        %v634 = vld [vmem:[%s1 + $0x5c] sm:$0xf]
        %v635 = vld [vmem:[%s1 + $0x60] sm:$0xf]
        %v636 = vld [vmem:[%s1 + $0x64] sm:$0xf]
        %v637 = vld [vmem:[%s1 + $0x68] sm:$0xf]
        %v638 = vld [vmem:[%s1 + $0x6c] sm:$0xf]
        %v639 = vld [vmem:[%s1 + $0x70] sm:$0xf]
        %v640 = vld [vmem:[%s1 + $0x74] sm:$0xf]
        %v641 = vld [vmem:[%s1 + $0x78] sm:$0xf]
        %v642 = vld [vmem:[%s1 + $0x7c] sm:$0xf]
        %v647 = vunpack.c.l.b16 %v607
        %v648 = vunpack.c.h.b16 %v607
        %v649 = vunpack.c.l.b16 %v608
        %v650 = vunpack.c.h.b16 %v608
        %v651 = vunpack.c.l.b16 %v609
        %v652 = vunpack.c.h.b16 %v609
        %v653 = vunpack.c.l.b16 %v610
        %v654 = vunpack.c.h.b16 %v610
        %v655 = vpack.c.b16 %v649, %v647
        %v656 = vpack.c.b16 %v650, %v648
        %v657 = vpack.c.b16 %v653, %v651
        %v658 = vpack.c.b16 %v654, %v652
        %v695 = vunpack.c.l.b16 %v611
        %v696 = vunpack.c.l.b16 %v612
        %v697 = vunpack.c.l.b16 %v613
        %v698 = vunpack.c.l.b16 %v614
        %v699 = vunpack.c.l.b16 %v615
        %v700 = vunpack.c.l.b16 %v616
        %v701 = vunpack.c.l.b16 %v617
        %v702 = vunpack.c.l.b16 %v618
        %v703 = vunpack.c.l.b16 %v619
        %v704 = vunpack.c.l.b16 %v620
        %v705 = vunpack.c.l.b16 %v621
        %v706 = vunpack.c.l.b16 %v622
        %v707 = vunpack.c.l.b16 %v623
        %v708 = vunpack.c.l.b16 %v624
        %v709 = vunpack.c.l.b16 %v625
        %v710 = vunpack.c.l.b16 %v626
        %v711 = vunpack.c.l.b16 %v627
        %v712 = vunpack.c.l.b16 %v628
        %v713 = vunpack.c.l.b16 %v629
        %v714 = vunpack.c.l.b16 %v630
        %v715 = vunpack.c.l.b16 %v631
        %v716 = vunpack.c.l.b16 %v632
        %v717 = vunpack.c.l.b16 %v633
        %v718 = vunpack.c.l.b16 %v634
        %v719 = vunpack.c.l.b16 %v635
        %v720 = vunpack.c.l.b16 %v636
        %v721 = vunpack.c.l.b16 %v637
        %v722 = vunpack.c.l.b16 %v638
        %v723 = vunpack.c.l.b16 %v639
        %v724 = vunpack.c.l.b16 %v640
        %v725 = vunpack.c.l.b16 %v641
        %v726 = vunpack.c.l.b16 %v642
        %v727 = vpack.c.b16 %v696, %v695
        %v728 = vpack.c.b16 %v698, %v697
        %v729 = vpack.c.b16 %v700, %v699
        %v730 = vpack.c.b16 %v702, %v701
        %v731 = vpack.c.b16 %v704, %v703
        %v732 = vpack.c.b16 %v706, %v705
        %v733 = vpack.c.b16 %v708, %v707
        %v734 = vpack.c.b16 %v710, %v709
        %v735 = vpack.c.b16 %v712, %v711
        %v736 = vpack.c.b16 %v714, %v713
        %v737 = vpack.c.b16 %v716, %v715
        %v738 = vpack.c.b16 %v718, %v717
        %v739 = vpack.c.b16 %v720, %v719
        %v740 = vpack.c.b16 %v722, %v721
        %v741 = vpack.c.b16 %v724, %v723
        %v742 = vpack.c.b16 %v726, %v725
        %759 = vmatprep.subr.bf16.mxu0 0
        %760 = vmatpush1.bf16.msra.mxu0 %v727
        %761 = vmatprep.subr.bf16.mxu0 0
        %762 = vmatpush1.bf16.msra.mxu0 %v728
        %763 = vmatprep.subr.bf16.mxu0 0
        %764 = vmatpush1.bf16.msra.mxu0 %v729
        %765 = vmatprep.subr.bf16.mxu0 0
        %766 = vmatpush1.bf16.msra.mxu0 %v730
        %767 = vmatprep.subr.bf16.mxu0 0
        %768 = vmatpush1.bf16.msra.mxu0 %v731
        %769 = vmatprep.subr.bf16.mxu0 0
        %770 = vmatpush1.bf16.msra.mxu0 %v732
        %771 = vmatprep.subr.bf16.mxu0 0
        %772 = vmatpush1.bf16.msra.mxu0 %v733
        %773 = vmatprep.subr.bf16.mxu0 0
        %774 = vmatpush1.bf16.msra.mxu0 %v734
        %775 = vmatprep.subr.bf16.mxu0 0
        %776 = vmatpush1.bf16.msra.mxu0 %v735
        %777 = vmatprep.subr.bf16.mxu0 0
        %778 = vmatpush1.bf16.msra.mxu0 %v736
        %779 = vmatprep.subr.bf16.mxu0 0
        %780 = vmatpush1.bf16.msra.mxu0 %v737
        %781 = vmatprep.subr.bf16.mxu0 0
        %782 = vmatpush1.bf16.msra.mxu0 %v738
        %783 = vmatprep.subr.bf16.mxu0 0
        %784 = vmatpush1.bf16.msra.mxu0 %v739
        %785 = vmatprep.subr.bf16.mxu0 0
        %786 = vmatpush1.bf16.msra.mxu0 %v740
        %787 = vmatprep.subr.bf16.mxu0 0
        %788 = vmatpush1.bf16.msra.mxu0 %v741
        %789 = vmatprep.subr.bf16.mxu0 0
        %790 = vmatpush1.bf16.msra.mxu0 %v742
        %791 = vmatprep.mubr.bf16.mxu0 %v656
        %792 = vmatmul.mubr.bf16.gmra.mrb[0].mxu0 %v655
        %v793 = vpop.f32.mrb[0].mxu0
        %v794 = vadd.f32 0.0, %v793
        %v795 = vpop.f32.mrb[0].mxu0
        %v796 = vpop.f32.mrb[0].mxu0
        %v797 = vadd.f32 0.0, %v796
        %v798 = vpop.f32.mrb[0].mxu0
        %799 = vmatprep.mubr.bf16.mxu0 %v658
        %800 = vmatmul.mubr.bf16.gmra.mrb[0].mxu0 %v657
        %v801 = vpop.f32.mrb[0].mxu0
        %v802 = vadd.f32 0.0, %v801
        %v803 = vpop.f32.mrb[0].mxu0
        %v804 = vpop.f32.mrb[0].mxu0
        %v805 = vadd.f32 0.0, %v804
        %v806 = vpop.f32.mrb[0].mxu0
        %807 = vdwg.mxu0
        %v808 = vld [vmem:[%s2] sm:$0x1]
        %v810 = vlaneseq
        %v811 = vshrl.u32 %v810, 7
        %v812 = vsub.s32 0, %v811
        %v813 = vrot.slane %v808, %v812
        %v815 = vmul.f32 %v794, %v813
        %v816 = vmul.f32 %v797, %v813
        %v817 = vmul.f32 %v802, %v813
        %v818 = vmul.f32 %v805, %v813
        %v819 = vld [vmem:[%s3] sm:$0x1]
        %v821 = vlaneseq
        %v822 = vshrl.u32 %v821, 7
        %v823 = vsub.s32 0, %v822
        %v824 = vrot.slane %v819, %v823
        %v826 = vadd.f32 %v815, %v824
        %v827 = vadd.f32 %v816, %v824
        %v828 = vadd.f32 %v817, %v824
        %v829 = vadd.f32 %v818, %v824
        %v830 = vmax.f32 %v826, 0.0
        %v831 = vmax.f32 %v827, 0.0
        %v832 = vmax.f32 %v828, 0.0
        %v833 = vmax.f32 %v829, 0.0
        %v834 = vpack.c.bf16 %v831, %v830
        %v835 = vpack.c.bf16 %v833, %v832
        %v838 = vunpack.c.l.b16 %v834
        %v839 = vunpack.c.h.b16 %v834
        %v840 = vunpack.c.l.b16 %v835
        %v841 = vunpack.c.h.b16 %v835
        %v842 = vpack.c.b16 %v838, %v838
        %v843 = vpack.c.b16 %v839, %v839
        %v844 = vpack.c.b16 %v840, %v840
        %v845 = vpack.c.b16 %v841, %v841
        %850 = vst [vmem:[#allocation2 + $0x4] sm:$0xf] %v842
        %851 = vst [vmem:[#allocation2 + $0x8] sm:$0xf] %v843
        %852 = vst [vmem:[#allocation2 + $0xc] sm:$0xf] %v844
        %853 = vst [vmem:[#allocation2 + $0x10] sm:$0xf] %v845
        %v854 = vld [vmem:[#allocation2] sm:$0xe]
        %v855 = vld [vmem:[#allocation2 + $0x4] sm:$0xf]
        %v856 = vld [vmem:[#allocation2 + $0x8] sm:$0xf]
        %v857 = vld [vmem:[#allocation2 + $0xc] sm:$0xf]
        %v858 = vld [vmem:[#allocation2 + $0x10] sm:$0x1]
        %v859 = vld [vmem:[%s4] sm:$0xf]
        %v860 = vld [vmem:[%s4 + $0x4] sm:$0xf]
        %v861 = vld [vmem:[%s4 + $0x8] sm:$0xf]
        %v862 = vld [vmem:[%s4 + $0xc] sm:$0xf]
        %v863 = vld [vmem:[%s4 + $0x10] sm:$0xf]
        %v864 = vld [vmem:[%s4 + $0x14] sm:$0xf]
        %v865 = vld [vmem:[%s4 + $0x18] sm:$0xf]
        %v866 = vld [vmem:[%s4 + $0x1c] sm:$0xf]
        %v867 = vld [vmem:[%s4 + $0x20] sm:$0xf]
        %v868 = vld [vmem:[%s4 + $0x24] sm:$0xf]
        %v869 = vld [vmem:[%s4 + $0x28] sm:$0xf]
        %v870 = vld [vmem:[%s4 + $0x2c] sm:$0xf]
        %v871 = vld [vmem:[%s4 + $0x30] sm:$0xf]
        %v872 = vld [vmem:[%s4 + $0x34] sm:$0xf]
        %v873 = vld [vmem:[%s4 + $0x38] sm:$0xf]
        %v874 = vld [vmem:[%s4 + $0x3c] sm:$0xf]
        %v875 = vld [vmem:[#allocation2 + $0x10] sm:$0x3]
        %s876 = scalar_lea.vmem %s4, 64
        %v877 = vld [vmem:[%s876] sm:$0xf]
        %v878 = vld [vmem:[%s876 + $0x4] sm:$0xf]
        %v879 = vld [vmem:[%s876 + $0x8] sm:$0xf]
        %v880 = vld [vmem:[%s876 + $0xc] sm:$0xf]
        %v881 = vld [vmem:[%s876 + $0x10] sm:$0xf]
        %v882 = vld [vmem:[%s876 + $0x14] sm:$0xf]
        %v883 = vld [vmem:[%s876 + $0x18] sm:$0xf]
        %v884 = vld [vmem:[%s876 + $0x1c] sm:$0xf]
        %v885 = vld [vmem:[%s876 + $0x20] sm:$0xf]
        %v886 = vld [vmem:[%s876 + $0x24] sm:$0xf]
        %v887 = vld [vmem:[%s876 + $0x28] sm:$0xf]
        %v888 = vld [vmem:[%s876 + $0x2c] sm:$0xf]
        %v889 = vld [vmem:[%s876 + $0x30] sm:$0xf]
        %v890 = vld [vmem:[%s876 + $0x34] sm:$0xf]
        %v891 = vld [vmem:[%s876 + $0x38] sm:$0xf]
        %v892 = vld [vmem:[%s876 + $0x3c] sm:$0xf]
        %v898 = vunpack.c.l.b16 %v854
        %v899 = vunpack.c.l.b16 %v855
        %v900 = vunpack.c.l.b16 %v856
        %v901 = vunpack.c.l.b16 %v857
        %v902 = vunpack.c.l.b16 %v875
        %v903 = vpack.c.b16 %v899, %v898
        %v904 = vpack.c.b16 %v901, %v900
        %v905 = vpack.c.b16 %v902, %v902
        %vm906 = vsmask.f32 6400
        %v908 = vshrl.u32 %v903, 16
        %v910 = vrot.slane %v908, 1
        %v911 = vshll.u32 %v903, 16
        %v913 = vrot.slane %v911, 2
        %v914 = vor.u32 %v910, %v913
        %v916 = vshrl.u32 %v904, 16
        %v918 = vrot.slane %v916, 1
        %v919 = vshll.u32 %v904, 16
        %v921 = vrot.slane %v919, 2
        %v922 = vor.u32 %v918, %v921
        %v923 = vsel %vm906, %v914, %v922
        %v925 = vshrl.u32 %v905, 16
        %v927 = vrot.slane %v925, 1
        %v928 = vshll.u32 %v905, 16
        %v930 = vrot.slane %v928, 2
        %v931 = vor.u32 %v927, %v930
        %v932 = vsel %vm906, %v922, %v931
        %v951 = vunpack.c.l.b16 %v877
        %v952 = vunpack.c.l.b16 %v878
        %v953 = vunpack.c.l.b16 %v879
        %v954 = vunpack.c.l.b16 %v880
        %v955 = vunpack.c.l.b16 %v881
        %v956 = vunpack.c.l.b16 %v882
        %v957 = vunpack.c.l.b16 %v883
        %v958 = vunpack.c.l.b16 %v884
        %v959 = vunpack.c.l.b16 %v885
        %v960 = vunpack.c.l.b16 %v886
        %v961 = vunpack.c.l.b16 %v887
        %v962 = vunpack.c.l.b16 %v888
        %v963 = vunpack.c.l.b16 %v889
        %v964 = vunpack.c.l.b16 %v890
        %v965 = vunpack.c.l.b16 %v891
        %v966 = vunpack.c.l.b16 %v892
        %v967 = vpack.c.b16 %v952, %v951
        %v968 = vpack.c.b16 %v954, %v953
        %v969 = vpack.c.b16 %v956, %v955
        %v970 = vpack.c.b16 %v958, %v957
        %v971 = vpack.c.b16 %v960, %v959
        %v972 = vpack.c.b16 %v962, %v961
        %v973 = vpack.c.b16 %v964, %v963
        %v974 = vpack.c.b16 %v966, %v965
        %983 = vmatprep.subr.bf16.mxu0 0
        %984 = vmatpush1.bf16.msra.mxu0 %v967
        %985 = vmatprep.subr.bf16.mxu0 0
        %986 = vmatpush1.bf16.msra.mxu0 %v968
        %987 = vmatprep.subr.bf16.mxu0 0
        %988 = vmatpush1.bf16.msra.mxu0 %v969
        %989 = vmatprep.subr.bf16.mxu0 0
        %990 = vmatpush1.bf16.msra.mxu0 %v970
        %991 = vmatprep.subr.bf16.mxu0 0
        %992 = vmatpush1.bf16.msra.mxu0 %v971
        %993 = vmatprep.subr.bf16.mxu0 0
        %994 = vmatpush1.bf16.msra.mxu0 %v972
        %995 = vmatprep.subr.bf16.mxu0 0
        %996 = vmatpush1.bf16.msra.mxu0 %v973
        %997 = vmatprep.subr.bf16.mxu0 0
        %998 = vmatpush1.bf16.msra.mxu0 %v974
        %999 = vmatprep.subr.bf16.mxu0 0
        %1000 = vmatpush1.bf16.msra.mxu0 0
        %1001 = vmatprep.subr.bf16.mxu0 0
        %1002 = vmatpush1.bf16.msra.mxu0 0
        %1003 = vmatprep.subr.bf16.mxu0 0
        %1004 = vmatpush1.bf16.msra.mxu0 0
        %1005 = vmatprep.subr.bf16.mxu0 0
        %1006 = vmatpush1.bf16.msra.mxu0 0
        %1007 = vmatprep.subr.bf16.mxu0 0
        %1008 = vmatpush1.bf16.msra.mxu0 0
        %1009 = vmatprep.subr.bf16.mxu0 0
        %1010 = vmatpush1.bf16.msra.mxu0 0
        %1011 = vmatprep.subr.bf16.mxu0 0
        %1012 = vmatpush1.bf16.msra.mxu0 0
        %1013 = vmatprep.subr.bf16.mxu0 0
        %1014 = vmatpush1.bf16.msra.mxu0 0
        %1015 = vmatprep.mubr.bf16.mxu0 0
        %1016 = vmatmul.mubr.bf16.gmra.mrb[0].mxu0 %v923
        %v1017 = vpop.f32.mrb[0].mxu0
        %v1018 = vadd.f32 0.0, %v1017
        %v1019 = vpop.f32.mrb[0].mxu0
        %v1020 = vpop.f32.mrb[0].mxu0
        %v1021 = vadd.f32 0.0, %v1020
        %v1022 = vpop.f32.mrb[0].mxu0
        %1023 = vmatprep.mubr.bf16.mxu0 0
        %1024 = vmatmul.mubr.bf16.gmra.mrb[0].mxu0 %v932
        %v1025 = vpop.f32.mrb[0].mxu0
        %v1026 = vadd.f32 0.0, %v1025
        %v1027 = vpop.f32.mrb[0].mxu0
        %v1028 = vpop.f32.mrb[0].mxu0
        %v1029 = vadd.f32 0.0, %v1028
        %v1030 = vpop.f32.mrb[0].mxu0
        %1031 = vdwg.mxu0
        %v1033 = vunpack.c.l.b16 %v858
        %v1034 = vpack.c.b16 %v1033, %v1033
        %vm1035 = vcmask 1046528
        %v1036 = vrot.slane %v903, 1
        %v1037 = vrot.slane %v904, 1
        %v1038 = vsel %vm1035, %v1036, %v1037
        %v1039 = vrot.slane %v1034, 1
        %v1040 = vsel %vm1035, %v1037, %v1039
        %v1059 = vunpack.c.l.b16 %v859
        %v1060 = vunpack.c.l.b16 %v860
        %v1061 = vunpack.c.l.b16 %v861
        %v1062 = vunpack.c.l.b16 %v862
        %v1063 = vunpack.c.l.b16 %v863
        %v1064 = vunpack.c.l.b16 %v864
        %v1065 = vunpack.c.l.b16 %v865
        %v1066 = vunpack.c.l.b16 %v866
        %v1067 = vunpack.c.l.b16 %v867
        %v1068 = vunpack.c.l.b16 %v868
        %v1069 = vunpack.c.l.b16 %v869
        %v1070 = vunpack.c.l.b16 %v870
        %v1071 = vunpack.c.l.b16 %v871
        %v1072 = vunpack.c.l.b16 %v872
        %v1073 = vunpack.c.l.b16 %v873
        %v1074 = vunpack.c.l.b16 %v874
        %v1075 = vpack.c.b16 %v1060, %v1059
        %v1076 = vpack.c.b16 %v1062, %v1061
        %v1077 = vpack.c.b16 %v1064, %v1063
        %v1078 = vpack.c.b16 %v1066, %v1065
        %v1079 = vpack.c.b16 %v1068, %v1067
        %v1080 = vpack.c.b16 %v1070, %v1069
        %v1081 = vpack.c.b16 %v1072, %v1071
        %v1082 = vpack.c.b16 %v1074, %v1073
        %1091 = vmatprep.subr.bf16.mxu0 0
        %1092 = vmatpush1.bf16.msra.mxu0 %v1075
        %1093 = vmatprep.subr.bf16.mxu0 0
        %1094 = vmatpush1.bf16.msra.mxu0 %v1076
        %1095 = vmatprep.subr.bf16.mxu0 0
        %1096 = vmatpush1.bf16.msra.mxu0 %v1077
        %1097 = vmatprep.subr.bf16.mxu0 0
        %1098 = vmatpush1.bf16.msra.mxu0 %v1078
        %1099 = vmatprep.subr.bf16.mxu0 0
        %1100 = vmatpush1.bf16.msra.mxu0 %v1079
        %1101 = vmatprep.subr.bf16.mxu0 0
        %1102 = vmatpush1.bf16.msra.mxu0 %v1080
        %1103 = vmatprep.subr.bf16.mxu0 0
        %1104 = vmatpush1.bf16.msra.mxu0 %v1081
        %1105 = vmatprep.subr.bf16.mxu0 0
        %1106 = vmatpush1.bf16.msra.mxu0 %v1082
        %1107 = vmatprep.subr.bf16.mxu0 0
        %1108 = vmatpush1.bf16.msra.mxu0 0
        %1109 = vmatprep.subr.bf16.mxu0 0
        %1110 = vmatpush1.bf16.msra.mxu0 0
        %1111 = vmatprep.subr.bf16.mxu0 0
        %1112 = vmatpush1.bf16.msra.mxu0 0
        %1113 = vmatprep.subr.bf16.mxu0 0
        %1114 = vmatpush1.bf16.msra.mxu0 0
        %1115 = vmatprep.subr.bf16.mxu0 0
        %1116 = vmatpush1.bf16.msra.mxu0 0
        %1117 = vmatprep.subr.bf16.mxu0 0
        %1118 = vmatpush1.bf16.msra.mxu0 0
        %1119 = vmatprep.subr.bf16.mxu0 0
        %1120 = vmatpush1.bf16.msra.mxu0 0
        %1121 = vmatprep.subr.bf16.mxu0 0
        %1122 = vmatpush1.bf16.msra.mxu0 0
        %1123 = vmatprep.mubr.bf16.mxu0 0
        %1124 = vmatmul.mubr.bf16.gmra.mrb[0].mxu0 %v1038
        %v1125 = vpop.f32.mrb[0].mxu0
        %v1126 = vadd.f32 %v1018, %v1125
        %v1127 = vpop.f32.mrb[0].mxu0
        %v1128 = vpop.f32.mrb[0].mxu0
        %v1129 = vadd.f32 %v1021, %v1128
        %v1130 = vpop.f32.mrb[0].mxu0
        %1131 = vmatprep.mubr.bf16.mxu0 0
        %1132 = vmatmul.mubr.bf16.gmra.mrb[0].mxu0 %v1040
        %v1133 = vpop.f32.mrb[0].mxu0
        %v1134 = vadd.f32 %v1026, %v1133
        %v1135 = vpop.f32.mrb[0].mxu0
        %v1136 = vpop.f32.mrb[0].mxu0
        %v1137 = vadd.f32 %v1029, %v1136
        %v1138 = vpop.f32.mrb[0].mxu0
        %1139 = vdwg.mxu0
        %v1140 = vld [vmem:[#allocation2] sm:$0xc]
        %s1141 = scalar_lea.vmem %s4, 128
        %v1142 = vld [vmem:[%s1141] sm:$0xf]
        %v1143 = vld [vmem:[%s1141 + $0x4] sm:$0xf]
        %v1144 = vld [vmem:[%s1141 + $0x8] sm:$0xf]
        %v1145 = vld [vmem:[%s1141 + $0xc] sm:$0xf]
        %v1146 = vld [vmem:[%s1141 + $0x10] sm:$0xf]
        %v1147 = vld [vmem:[%s1141 + $0x14] sm:$0xf]
        %v1148 = vld [vmem:[%s1141 + $0x18] sm:$0xf]
        %v1149 = vld [vmem:[%s1141 + $0x1c] sm:$0xf]
        %v1150 = vld [vmem:[%s1141 + $0x20] sm:$0xf]
        %v1151 = vld [vmem:[%s1141 + $0x24] sm:$0xf]
        %v1152 = vld [vmem:[%s1141 + $0x28] sm:$0xf]
        %v1153 = vld [vmem:[%s1141 + $0x2c] sm:$0xf]
        %v1154 = vld [vmem:[%s1141 + $0x30] sm:$0xf]
        %v1155 = vld [vmem:[%s1141 + $0x34] sm:$0xf]
        %v1156 = vld [vmem:[%s1141 + $0x38] sm:$0xf]
        %v1157 = vld [vmem:[%s1141 + $0x3c] sm:$0xf]
        %v1159 = vunpack.c.l.b16 %v1140
        %v1160 = vpack.c.b16 %v899, %v1159
        %vm1161 = vcmask 1045504
        %v1162 = vrot.slane %v1160, 2
        %v1163 = vrot.slane %v904, 2
        %v1164 = vsel %vm1161, %v1162, %v1163
        %v1165 = vrot.slane %v905, 2
        %v1166 = vsel %vm1161, %v1163, %v1165
        %v1185 = vunpack.c.l.b16 %v1142
        %v1186 = vunpack.c.l.b16 %v1143
        %v1187 = vunpack.c.l.b16 %v1144
        %v1188 = vunpack.c.l.b16 %v1145
        %v1189 = vunpack.c.l.b16 %v1146
        %v1190 = vunpack.c.l.b16 %v1147
        %v1191 = vunpack.c.l.b16 %v1148
        %v1192 = vunpack.c.l.b16 %v1149
        %v1193 = vunpack.c.l.b16 %v1150
        %v1194 = vunpack.c.l.b16 %v1151
        %v1195 = vunpack.c.l.b16 %v1152
        %v1196 = vunpack.c.l.b16 %v1153
        %v1197 = vunpack.c.l.b16 %v1154
        %v1198 = vunpack.c.l.b16 %v1155
        %v1199 = vunpack.c.l.b16 %v1156
        %v1200 = vunpack.c.l.b16 %v1157
        %v1201 = vpack.c.b16 %v1186, %v1185
        %v1202 = vpack.c.b16 %v1188, %v1187
        %v1203 = vpack.c.b16 %v1190, %v1189
        %v1204 = vpack.c.b16 %v1192, %v1191
        %v1205 = vpack.c.b16 %v1194, %v1193
        %v1206 = vpack.c.b16 %v1196, %v1195
        %v1207 = vpack.c.b16 %v1198, %v1197
        %v1208 = vpack.c.b16 %v1200, %v1199
        %1217 = vmatprep.subr.bf16.mxu0 0
        %1218 = vmatpush1.bf16.msra.mxu0 %v1201
        %1219 = vmatprep.subr.bf16.mxu0 0
        %1220 = vmatpush1.bf16.msra.mxu0 %v1202
        %1221 = vmatprep.subr.bf16.mxu0 0
        %1222 = vmatpush1.bf16.msra.mxu0 %v1203
        %1223 = vmatprep.subr.bf16.mxu0 0
        %1224 = vmatpush1.bf16.msra.mxu0 %v1204
        %1225 = vmatprep.subr.bf16.mxu0 0
        %1226 = vmatpush1.bf16.msra.mxu0 %v1205
        %1227 = vmatprep.subr.bf16.mxu0 0
        %1228 = vmatpush1.bf16.msra.mxu0 %v1206
        %1229 = vmatprep.subr.bf16.mxu0 0
        %1230 = vmatpush1.bf16.msra.mxu0 %v1207
        %1231 = vmatprep.subr.bf16.mxu0 0
        %1232 = vmatpush1.bf16.msra.mxu0 %v1208
        %1233 = vmatprep.subr.bf16.mxu0 0
        %1234 = vmatpush1.bf16.msra.mxu0 0
        %1235 = vmatprep.subr.bf16.mxu0 0
        %1236 = vmatpush1.bf16.msra.mxu0 0
        %1237 = vmatprep.subr.bf16.mxu0 0
        %1238 = vmatpush1.bf16.msra.mxu0 0
        %1239 = vmatprep.subr.bf16.mxu0 0
        %1240 = vmatpush1.bf16.msra.mxu0 0
        %1241 = vmatprep.subr.bf16.mxu0 0
        %1242 = vmatpush1.bf16.msra.mxu0 0
        %1243 = vmatprep.subr.bf16.mxu0 0
        %1244 = vmatpush1.bf16.msra.mxu0 0
        %1245 = vmatprep.subr.bf16.mxu0 0
        %1246 = vmatpush1.bf16.msra.mxu0 0
        %1247 = vmatprep.subr.bf16.mxu0 0
        %1248 = vmatpush1.bf16.msra.mxu0 0
        %1249 = vmatprep.mubr.bf16.mxu0 0
        %1250 = vmatmul.mubr.bf16.gmra.mrb[0].mxu0 %v1164
        %v1251 = vpop.f32.mrb[0].mxu0
        %v1252 = vadd.f32 0.0, %v1251
        %v1253 = vpop.f32.mrb[0].mxu0
        %v1254 = vpop.f32.mrb[0].mxu0
        %v1255 = vadd.f32 0.0, %v1254
        %v1256 = vpop.f32.mrb[0].mxu0
        %1257 = vmatprep.mubr.bf16.mxu0 0
        %1258 = vmatmul.mubr.bf16.gmra.mrb[0].mxu0 %v1166
        %v1259 = vpop.f32.mrb[0].mxu0
        %v1260 = vadd.f32 0.0, %v1259
        %v1261 = vpop.f32.mrb[0].mxu0
        %v1262 = vpop.f32.mrb[0].mxu0
        %v1263 = vadd.f32 0.0, %v1262
        %v1264 = vpop.f32.mrb[0].mxu0
        %1265 = vdwg.mxu0
        %v1266 = vadd.f32 %v1126, %v1252
        %v1267 = vadd.f32 %v1129, %v1255
        %v1268 = vadd.f32 %v1134, %v1260
        %v1269 = vadd.f32 %v1137, %v1263
        %v1270 = vld [vmem:[#allocation2 + $0x10] sm:$0x7]
        %s1271 = scalar_lea.vmem %s4, 192
        %v1272 = vld [vmem:[%s1271] sm:$0xf]
        %v1273 = vld [vmem:[%s1271 + $0x4] sm:$0xf]
        %v1274 = vld [vmem:[%s1271 + $0x8] sm:$0xf]
        %v1275 = vld [vmem:[%s1271 + $0xc] sm:$0xf]
        %v1276 = vld [vmem:[%s1271 + $0x10] sm:$0xf]
        %v1277 = vld [vmem:[%s1271 + $0x14] sm:$0xf]
        %v1278 = vld [vmem:[%s1271 + $0x18] sm:$0xf]
        %v1279 = vld [vmem:[%s1271 + $0x1c] sm:$0xf]
        %v1280 = vld [vmem:[%s1271 + $0x20] sm:$0xf]
        %v1281 = vld [vmem:[%s1271 + $0x24] sm:$0xf]
        %v1282 = vld [vmem:[%s1271 + $0x28] sm:$0xf]
        %v1283 = vld [vmem:[%s1271 + $0x2c] sm:$0xf]
        %v1284 = vld [vmem:[%s1271 + $0x30] sm:$0xf]
        %v1285 = vld [vmem:[%s1271 + $0x34] sm:$0xf]
        %v1286 = vld [vmem:[%s1271 + $0x38] sm:$0xf]
        %v1287 = vld [vmem:[%s1271 + $0x3c] sm:$0xf]
        %v1289 = vunpack.c.l.b16 %v1270
        %v1290 = vpack.c.b16 %v1289, %v1289
        %vm1291 = vsmask.f32 5376
        %v1293 = vshrl.u32 %v1160, 16
        %v1295 = vrot.slane %v1293, 2
        %v1296 = vshll.u32 %v1160, 16
        %v1298 = vrot.slane %v1296, 3
        %v1299 = vor.u32 %v1295, %v1298
        %v1300 = vrot.slane %v916, 2
        %v1301 = vrot.slane %v919, 3
        %v1302 = vor.u32 %v1300, %v1301
        %v1303 = vsel %vm1291, %v1299, %v1302
        %v1305 = vshrl.u32 %v1290, 16
        %v1307 = vrot.slane %v1305, 2
        %v1308 = vshll.u32 %v1290, 16
        %v1310 = vrot.slane %v1308, 3
        %v1311 = vor.u32 %v1307, %v1310
        %v1312 = vsel %vm1291, %v1302, %v1311
        %v1331 = vunpack.c.l.b16 %v1272
        %v1332 = vunpack.c.l.b16 %v1273
        %v1333 = vunpack.c.l.b16 %v1274
        %v1334 = vunpack.c.l.b16 %v1275
        %v1335 = vunpack.c.l.b16 %v1276
        %v1336 = vunpack.c.l.b16 %v1277
        %v1337 = vunpack.c.l.b16 %v1278
        %v1338 = vunpack.c.l.b16 %v1279
        %v1339 = vunpack.c.l.b16 %v1280
        %v1340 = vunpack.c.l.b16 %v1281
        %v1341 = vunpack.c.l.b16 %v1282
        %v1342 = vunpack.c.l.b16 %v1283
        %v1343 = vunpack.c.l.b16 %v1284
        %v1344 = vunpack.c.l.b16 %v1285
        %v1345 = vunpack.c.l.b16 %v1286
        %v1346 = vunpack.c.l.b16 %v1287
        %v1347 = vpack.c.b16 %v1332, %v1331
        %v1348 = vpack.c.b16 %v1334, %v1333
        %v1349 = vpack.c.b16 %v1336, %v1335
        %v1350 = vpack.c.b16 %v1338, %v1337
        %v1351 = vpack.c.b16 %v1340, %v1339
        %v1352 = vpack.c.b16 %v1342, %v1341
        %v1353 = vpack.c.b16 %v1344, %v1343
        %v1354 = vpack.c.b16 %v1346, %v1345
        %1363 = vmatprep.subr.bf16.mxu0 0
        %1364 = vmatpush1.bf16.msra.mxu0 %v1347
        %1365 = vmatprep.subr.bf16.mxu0 0
        %1366 = vmatpush1.bf16.msra.mxu0 %v1348
        %1367 = vmatprep.subr.bf16.mxu0 0
        %1368 = vmatpush1.bf16.msra.mxu0 %v1349
        %1369 = vmatprep.subr.bf16.mxu0 0
        %1370 = vmatpush1.bf16.msra.mxu0 %v1350
        %1371 = vmatprep.subr.bf16.mxu0 0
        %1372 = vmatpush1.bf16.msra.mxu0 %v1351
        %1373 = vmatprep.subr.bf16.mxu0 0
        %1374 = vmatpush1.bf16.msra.mxu0 %v1352
        %1375 = vmatprep.subr.bf16.mxu0 0
        %1376 = vmatpush1.bf16.msra.mxu0 %v1353
        %1377 = vmatprep.subr.bf16.mxu0 0
        %1378 = vmatpush1.bf16.msra.mxu0 %v1354
        %1379 = vmatprep.subr.bf16.mxu0 0
        %1380 = vmatpush1.bf16.msra.mxu0 0
        %1381 = vmatprep.subr.bf16.mxu0 0
        %1382 = vmatpush1.bf16.msra.mxu0 0
        %1383 = vmatprep.subr.bf16.mxu0 0
        %1384 = vmatpush1.bf16.msra.mxu0 0
        %1385 = vmatprep.subr.bf16.mxu0 0
        %1386 = vmatpush1.bf16.msra.mxu0 0
        %1387 = vmatprep.subr.bf16.mxu0 0
        %1388 = vmatpush1.bf16.msra.mxu0 0
        %1389 = vmatprep.subr.bf16.mxu0 0
        %1390 = vmatpush1.bf16.msra.mxu0 0
        %1391 = vmatprep.subr.bf16.mxu0 0
        %1392 = vmatpush1.bf16.msra.mxu0 0
        %1393 = vmatprep.subr.bf16.mxu0 0
        %1394 = vmatpush1.bf16.msra.mxu0 0
        %1395 = vmatprep.mubr.bf16.mxu0 0
        %1396 = vmatmul.mubr.bf16.gmra.mrb[0].mxu0 %v1303
        %v1397 = vpop.f32.mrb[0].mxu0
        %v1398 = vadd.f32 0.0, %v1397
        %v1399 = vpop.f32.mrb[0].mxu0
        %v1400 = vpop.f32.mrb[0].mxu0
        %v1401 = vadd.f32 0.0, %v1400
        %v1402 = vpop.f32.mrb[0].mxu0
        %1403 = vmatprep.mubr.bf16.mxu0 0
        %1404 = vmatmul.mubr.bf16.gmra.mrb[0].mxu0 %v1312
        %v1405 = vpop.f32.mrb[0].mxu0
        %v1406 = vadd.f32 0.0, %v1405
        %v1407 = vpop.f32.mrb[0].mxu0
        %v1408 = vpop.f32.mrb[0].mxu0
        %v1409 = vadd.f32 0.0, %v1408
        %v1410 = vpop.f32.mrb[0].mxu0
        %1411 = vdwg.mxu0
        %v1412 = vadd.f32 %v1266, %v1398
        %v1413 = vadd.f32 %v1267, %v1401
        %v1414 = vadd.f32 %v1268, %v1406
        %v1415 = vadd.f32 %v1269, %v1409
        %v1416 = vld [vmem:[#allocation2] sm:$0x8]
        %s1417 = scalar_lea.vmem %s4, 256
        %v1418 = vld [vmem:[%s1417] sm:$0xf]
        %v1419 = vld [vmem:[%s1417 + $0x4] sm:$0xf]
        %v1420 = vld [vmem:[%s1417 + $0x8] sm:$0xf]
        %v1421 = vld [vmem:[%s1417 + $0xc] sm:$0xf]
        %v1422 = vld [vmem:[%s1417 + $0x10] sm:$0xf]
        %v1423 = vld [vmem:[%s1417 + $0x14] sm:$0xf]
        %v1424 = vld [vmem:[%s1417 + $0x18] sm:$0xf]
        %v1425 = vld [vmem:[%s1417 + $0x1c] sm:$0xf]
        %v1426 = vld [vmem:[%s1417 + $0x20] sm:$0xf]
        %v1427 = vld [vmem:[%s1417 + $0x24] sm:$0xf]
        %v1428 = vld [vmem:[%s1417 + $0x28] sm:$0xf]
        %v1429 = vld [vmem:[%s1417 + $0x2c] sm:$0xf]
        %v1430 = vld [vmem:[%s1417 + $0x30] sm:$0xf]
        %v1431 = vld [vmem:[%s1417 + $0x34] sm:$0xf]
        %v1432 = vld [vmem:[%s1417 + $0x38] sm:$0xf]
        %v1433 = vld [vmem:[%s1417 + $0x3c] sm:$0xf]
        %v1435 = vunpack.c.l.b16 %v1416
        %v1436 = vpack.c.b16 %v899, %v1435
        %vm1437 = vcmask 1044480
        %v1438 = vrot.slane %v1436, 3
        %v1439 = vrot.slane %v904, 3
        %v1440 = vsel %vm1437, %v1438, %v1439
        %v1441 = vrot.slane %v1290, 3
        %v1442 = vsel %vm1437, %v1439, %v1441
        %v1461 = vunpack.c.l.b16 %v1418
        %v1462 = vunpack.c.l.b16 %v1419
        %v1463 = vunpack.c.l.b16 %v1420
        %v1464 = vunpack.c.l.b16 %v1421
        %v1465 = vunpack.c.l.b16 %v1422
        %v1466 = vunpack.c.l.b16 %v1423
        %v1467 = vunpack.c.l.b16 %v1424
        %v1468 = vunpack.c.l.b16 %v1425
        %v1469 = vunpack.c.l.b16 %v1426
        %v1470 = vunpack.c.l.b16 %v1427
        %v1471 = vunpack.c.l.b16 %v1428
        %v1472 = vunpack.c.l.b16 %v1429
        %v1473 = vunpack.c.l.b16 %v1430
        %v1474 = vunpack.c.l.b16 %v1431
        %v1475 = vunpack.c.l.b16 %v1432
        %v1476 = vunpack.c.l.b16 %v1433
        %v1477 = vpack.c.b16 %v1462, %v1461
        %v1478 = vpack.c.b16 %v1464, %v1463
        %v1479 = vpack.c.b16 %v1466, %v1465
        %v1480 = vpack.c.b16 %v1468, %v1467
        %v1481 = vpack.c.b16 %v1470, %v1469
        %v1482 = vpack.c.b16 %v1472, %v1471
        %v1483 = vpack.c.b16 %v1474, %v1473
        %v1484 = vpack.c.b16 %v1476, %v1475
        %1493 = vmatprep.subr.bf16.mxu0 0
        %1494 = vmatpush1.bf16.msra.mxu0 %v1477
        %1495 = vmatprep.subr.bf16.mxu0 0
        %1496 = vmatpush1.bf16.msra.mxu0 %v1478
        %1497 = vmatprep.subr.bf16.mxu0 0
        %1498 = vmatpush1.bf16.msra.mxu0 %v1479
        %1499 = vmatprep.subr.bf16.mxu0 0
        %1500 = vmatpush1.bf16.msra.mxu0 %v1480
        %1501 = vmatprep.subr.bf16.mxu0 0
        %1502 = vmatpush1.bf16.msra.mxu0 %v1481
        %1503 = vmatprep.subr.bf16.mxu0 0
        %1504 = vmatpush1.bf16.msra.mxu0 %v1482
        %1505 = vmatprep.subr.bf16.mxu0 0
        %1506 = vmatpush1.bf16.msra.mxu0 %v1483
        %1507 = vmatprep.subr.bf16.mxu0 0
        %1508 = vmatpush1.bf16.msra.mxu0 %v1484
        %1509 = vmatprep.subr.bf16.mxu0 0
        %1510 = vmatpush1.bf16.msra.mxu0 0
        %1511 = vmatprep.subr.bf16.mxu0 0
        %1512 = vmatpush1.bf16.msra.mxu0 0
        %1513 = vmatprep.subr.bf16.mxu0 0
        %1514 = vmatpush1.bf16.msra.mxu0 0
        %1515 = vmatprep.subr.bf16.mxu0 0
        %1516 = vmatpush1.bf16.msra.mxu0 0
        %1517 = vmatprep.subr.bf16.mxu0 0
        %1518 = vmatpush1.bf16.msra.mxu0 0
        %1519 = vmatprep.subr.bf16.mxu0 0
        %1520 = vmatpush1.bf16.msra.mxu0 0
        %1521 = vmatprep.subr.bf16.mxu0 0
        %1522 = vmatpush1.bf16.msra.mxu0 0
        %1523 = vmatprep.subr.bf16.mxu0 0
        %1524 = vmatpush1.bf16.msra.mxu0 0
        %1525 = vmatprep.mubr.bf16.mxu0 0
        %1526 = vmatmul.mubr.bf16.gmra.mrb[0].mxu0 %v1440
        %v1527 = vpop.f32.mrb[0].mxu0
        %v1528 = vadd.f32 0.0, %v1527
        %v1529 = vpop.f32.mrb[0].mxu0
        %v1530 = vpop.f32.mrb[0].mxu0
        %v1531 = vadd.f32 0.0, %v1530
        %v1532 = vpop.f32.mrb[0].mxu0
        %1533 = vmatprep.mubr.bf16.mxu0 0
        %1534 = vmatmul.mubr.bf16.gmra.mrb[0].mxu0 %v1442
        %v1535 = vpop.f32.mrb[0].mxu0
        %v1536 = vadd.f32 0.0, %v1535
        %v1537 = vpop.f32.mrb[0].mxu0
        %v1538 = vpop.f32.mrb[0].mxu0
        %v1539 = vadd.f32 0.0, %v1538
        %v1540 = vpop.f32.mrb[0].mxu0
        %1541 = vdwg.mxu0
        %v1542 = vadd.f32 %v1412, %v1528
        %v1543 = vadd.f32 %v1413, %v1531
        %v1544 = vadd.f32 %v1414, %v1536
        %v1545 = vadd.f32 %v1415, %v1539
        %v1546 = vld [vmem:[#allocation2 + $0x10] sm:$0xf]
        %s1547 = scalar_lea.vmem %s4, 320
        %v1548 = vld [vmem:[%s1547] sm:$0xf]
        %v1549 = vld [vmem:[%s1547 + $0x4] sm:$0xf]
        %v1550 = vld [vmem:[%s1547 + $0x8] sm:$0xf]
        %v1551 = vld [vmem:[%s1547 + $0xc] sm:$0xf]
        %v1552 = vld [vmem:[%s1547 + $0x10] sm:$0xf]
        %v1553 = vld [vmem:[%s1547 + $0x14] sm:$0xf]
        %v1554 = vld [vmem:[%s1547 + $0x18] sm:$0xf]
        %v1555 = vld [vmem:[%s1547 + $0x1c] sm:$0xf]
        %v1556 = vld [vmem:[%s1547 + $0x20] sm:$0xf]
        %v1557 = vld [vmem:[%s1547 + $0x24] sm:$0xf]
        %v1558 = vld [vmem:[%s1547 + $0x28] sm:$0xf]
        %v1559 = vld [vmem:[%s1547 + $0x2c] sm:$0xf]
        %v1560 = vld [vmem:[%s1547 + $0x30] sm:$0xf]
        %v1561 = vld [vmem:[%s1547 + $0x34] sm:$0xf]
        %v1562 = vld [vmem:[%s1547 + $0x38] sm:$0xf]
        %v1563 = vld [vmem:[%s1547 + $0x3c] sm:$0xf]
        %v1565 = vunpack.c.l.b16 %v1546
        %v1566 = vpack.c.b16 %v1565, %v1565
        %v1568 = vshrl.u32 %v1436, 16
        %v1570 = vrot.slane %v1568, 3
        %v1571 = vshll.u32 %v1436, 16
        %v1573 = vrot.slane %v1571, 4
        %v1574 = vor.u32 %v1570, %v1573
        %v1575 = vrot.slane %v916, 3
        %v1576 = vrot.slane %v919, 4
        %v1577 = vor.u32 %v1575, %v1576
        %v1578 = vsel %vm601, %v1574, %v1577
        %v1580 = vshrl.u32 %v1566, 16
        %v1582 = vrot.slane %v1580, 3
        %v1583 = vshll.u32 %v1566, 16
        %v1585 = vrot.slane %v1583, 4
        %v1586 = vor.u32 %v1582, %v1585
        %v1587 = vsel %vm601, %v1577, %v1586
        %v1606 = vunpack.c.l.b16 %v1548
        %v1607 = vunpack.c.l.b16 %v1549
        %v1608 = vunpack.c.l.b16 %v1550
        %v1609 = vunpack.c.l.b16 %v1551
        %v1610 = vunpack.c.l.b16 %v1552
        %v1611 = vunpack.c.l.b16 %v1553
        %v1612 = vunpack.c.l.b16 %v1554
        %v1613 = vunpack.c.l.b16 %v1555
        %v1614 = vunpack.c.l.b16 %v1556
        %v1615 = vunpack.c.l.b16 %v1557
        %v1616 = vunpack.c.l.b16 %v1558
        %v1617 = vunpack.c.l.b16 %v1559
        %v1618 = vunpack.c.l.b16 %v1560
        %v1619 = vunpack.c.l.b16 %v1561
        %v1620 = vunpack.c.l.b16 %v1562
        %v1621 = vunpack.c.l.b16 %v1563
        %v1622 = vpack.c.b16 %v1607, %v1606
        %v1623 = vpack.c.b16 %v1609, %v1608
        %v1624 = vpack.c.b16 %v1611, %v1610
        %v1625 = vpack.c.b16 %v1613, %v1612
        %v1626 = vpack.c.b16 %v1615, %v1614
        %v1627 = vpack.c.b16 %v1617, %v1616
        %v1628 = vpack.c.b16 %v1619, %v1618
        %v1629 = vpack.c.b16 %v1621, %v1620
        %1638 = vmatprep.subr.bf16.mxu0 0
        %1639 = vmatpush1.bf16.msra.mxu0 %v1622
        %1640 = vmatprep.subr.bf16.mxu0 0
        %1641 = vmatpush1.bf16.msra.mxu0 %v1623
        %1642 = vmatprep.subr.bf16.mxu0 0
        %1643 = vmatpush1.bf16.msra.mxu0 %v1624
        %1644 = vmatprep.subr.bf16.mxu0 0
        %1645 = vmatpush1.bf16.msra.mxu0 %v1625
        %1646 = vmatprep.subr.bf16.mxu0 0
        %1647 = vmatpush1.bf16.msra.mxu0 %v1626
        %1648 = vmatprep.subr.bf16.mxu0 0
        %1649 = vmatpush1.bf16.msra.mxu0 %v1627
        %1650 = vmatprep.subr.bf16.mxu0 0
        %1651 = vmatpush1.bf16.msra.mxu0 %v1628
        %1652 = vmatprep.subr.bf16.mxu0 0
        %1653 = vmatpush1.bf16.msra.mxu0 %v1629
        %1654 = vmatprep.subr.bf16.mxu0 0
        %1655 = vmatpush1.bf16.msra.mxu0 0
        %1656 = vmatprep.subr.bf16.mxu0 0
        %1657 = vmatpush1.bf16.msra.mxu0 0
        %1658 = vmatprep.subr.bf16.mxu0 0
        %1659 = vmatpush1.bf16.msra.mxu0 0
        %1660 = vmatprep.subr.bf16.mxu0 0
        %1661 = vmatpush1.bf16.msra.mxu0 0
        %1662 = vmatprep.subr.bf16.mxu0 0
        %1663 = vmatpush1.bf16.msra.mxu0 0
        %1664 = vmatprep.subr.bf16.mxu0 0
        %1665 = vmatpush1.bf16.msra.mxu0 0
        %1666 = vmatprep.subr.bf16.mxu0 0
        %1667 = vmatpush1.bf16.msra.mxu0 0
        %1668 = vmatprep.subr.bf16.mxu0 0
        %1669 = vmatpush1.bf16.msra.mxu0 0
        %1670 = vmatprep.mubr.bf16.mxu0 0
        %1671 = vmatmul.mubr.bf16.gmra.mrb[0].mxu0 %v1578
        %v1672 = vpop.f32.mrb[0].mxu0
        %v1673 = vadd.f32 0.0, %v1672
        %v1674 = vpop.f32.mrb[0].mxu0
        %v1675 = vpop.f32.mrb[0].mxu0
        %v1676 = vadd.f32 0.0, %v1675
        %v1677 = vpop.f32.mrb[0].mxu0
        %1678 = vmatprep.mubr.bf16.mxu0 0
        %1679 = vmatmul.mubr.bf16.gmra.mrb[0].mxu0 %v1587
        %v1680 = vpop.f32.mrb[0].mxu0
        %v1681 = vadd.f32 0.0, %v1680
        %v1682 = vpop.f32.mrb[0].mxu0
        %v1683 = vpop.f32.mrb[0].mxu0
        %v1684 = vadd.f32 0.0, %v1683
        %v1685 = vpop.f32.mrb[0].mxu0
        %1686 = vdwg.mxu0
        %v1687 = vadd.f32 %v1542, %v1673
        %v1688 = vadd.f32 %v1543, %v1676
        %v1689 = vadd.f32 %v1544, %v1681
        %v1690 = vadd.f32 %v1545, %v1684
        %s1691 = scalar_lea.vmem %s4, 384
        %v1692 = vld [vmem:[%s1691] sm:$0xf]
        %v1693 = vld [vmem:[%s1691 + $0x4] sm:$0xf]
        %v1694 = vld [vmem:[%s1691 + $0x8] sm:$0xf]
        %v1695 = vld [vmem:[%s1691 + $0xc] sm:$0xf]
        %v1696 = vld [vmem:[%s1691 + $0x10] sm:$0xf]
        %v1697 = vld [vmem:[%s1691 + $0x14] sm:$0xf]
        %v1698 = vld [vmem:[%s1691 + $0x18] sm:$0xf]
        %v1699 = vld [vmem:[%s1691 + $0x1c] sm:$0xf]
        %v1700 = vld [vmem:[%s1691 + $0x20] sm:$0xf]
        %v1701 = vld [vmem:[%s1691 + $0x24] sm:$0xf]
        %v1702 = vld [vmem:[%s1691 + $0x28] sm:$0xf]
        %v1703 = vld [vmem:[%s1691 + $0x2c] sm:$0xf]
        %v1704 = vld [vmem:[%s1691 + $0x30] sm:$0xf]
        %v1705 = vld [vmem:[%s1691 + $0x34] sm:$0xf]
        %v1706 = vld [vmem:[%s1691 + $0x38] sm:$0xf]
        %v1707 = vld [vmem:[%s1691 + $0x3c] sm:$0xf]
        %v1708 = vpack.c.b16 %v900, %v899
        %v1709 = vpack.c.b16 %v1565, %v901
        %v1728 = vunpack.c.l.b16 %v1692
        %v1729 = vunpack.c.l.b16 %v1693
        %v1730 = vunpack.c.l.b16 %v1694
        %v1731 = vunpack.c.l.b16 %v1695
        %v1732 = vunpack.c.l.b16 %v1696
        %v1733 = vunpack.c.l.b16 %v1697
        %v1734 = vunpack.c.l.b16 %v1698
        %v1735 = vunpack.c.l.b16 %v1699
        %v1736 = vunpack.c.l.b16 %v1700
        %v1737 = vunpack.c.l.b16 %v1701
        %v1738 = vunpack.c.l.b16 %v1702
        %v1739 = vunpack.c.l.b16 %v1703
        %v1740 = vunpack.c.l.b16 %v1704
        %v1741 = vunpack.c.l.b16 %v1705
        %v1742 = vunpack.c.l.b16 %v1706
        %v1743 = vunpack.c.l.b16 %v1707
        %v1744 = vpack.c.b16 %v1729, %v1728
        %v1745 = vpack.c.b16 %v1731, %v1730
        %v1746 = vpack.c.b16 %v1733, %v1732
        %v1747 = vpack.c.b16 %v1735, %v1734
        %v1748 = vpack.c.b16 %v1737, %v1736
        %v1749 = vpack.c.b16 %v1739, %v1738
        %v1750 = vpack.c.b16 %v1741, %v1740
        %v1751 = vpack.c.b16 %v1743, %v1742
        %1760 = vmatprep.subr.bf16.mxu0 0
        %1761 = vmatpush1.bf16.msra.mxu0 %v1744
        %1762 = vmatprep.subr.bf16.mxu0 0
        %1763 = vmatpush1.bf16.msra.mxu0 %v1745
        %1764 = vmatprep.subr.bf16.mxu0 0
        %1765 = vmatpush1.bf16.msra.mxu0 %v1746
        %1766 = vmatprep.subr.bf16.mxu0 0
        %1767 = vmatpush1.bf16.msra.mxu0 %v1747
        %1768 = vmatprep.subr.bf16.mxu0 0
        %1769 = vmatpush1.bf16.msra.mxu0 %v1748
        %1770 = vmatprep.subr.bf16.mxu0 0
        %1771 = vmatpush1.bf16.msra.mxu0 %v1749
        %1772 = vmatprep.subr.bf16.mxu0 0
        %1773 = vmatpush1.bf16.msra.mxu0 %v1750
        %1774 = vmatprep.subr.bf16.mxu0 0
        %1775 = vmatpush1.bf16.msra.mxu0 %v1751
        %1776 = vmatprep.subr.bf16.mxu0 0
        %1777 = vmatpush1.bf16.msra.mxu0 0
        %1778 = vmatprep.subr.bf16.mxu0 0
        %1779 = vmatpush1.bf16.msra.mxu0 0
        %1780 = vmatprep.subr.bf16.mxu0 0
        %1781 = vmatpush1.bf16.msra.mxu0 0
        %1782 = vmatprep.subr.bf16.mxu0 0
        %1783 = vmatpush1.bf16.msra.mxu0 0
        %1784 = vmatprep.subr.bf16.mxu0 0
        %1785 = vmatpush1.bf16.msra.mxu0 0
        %1786 = vmatprep.subr.bf16.mxu0 0
        %1787 = vmatpush1.bf16.msra.mxu0 0
        %1788 = vmatprep.subr.bf16.mxu0 0
        %1789 = vmatpush1.bf16.msra.mxu0 0
        %1790 = vmatprep.subr.bf16.mxu0 0
        %1791 = vmatpush1.bf16.msra.mxu0 0
        %1792 = vmatprep.mubr.bf16.mxu0 0
        %1793 = vmatmul.mubr.bf16.gmra.mrb[0].mxu0 %v1708
        %v1794 = vpop.f32.mrb[0].mxu0
        %v1795 = vadd.f32 0.0, %v1794
        %v1796 = vpop.f32.mrb[0].mxu0
        %v1797 = vpop.f32.mrb[0].mxu0
        %v1798 = vadd.f32 0.0, %v1797
        %v1799 = vpop.f32.mrb[0].mxu0
        %1800 = vmatprep.mubr.bf16.mxu0 0
        %1801 = vmatmul.mubr.bf16.gmra.mrb[0].mxu0 %v1709
        %v1802 = vpop.f32.mrb[0].mxu0
        %v1803 = vadd.f32 0.0, %v1802
        %v1804 = vpop.f32.mrb[0].mxu0
        %v1805 = vpop.f32.mrb[0].mxu0
        %v1806 = vadd.f32 0.0, %v1805
        %v1807 = vpop.f32.mrb[0].mxu0
        %1808 = vdwg.mxu0
        %v1809 = vadd.f32 %v1687, %v1795
        %v1810 = vadd.f32 %v1688, %v1798
        %v1811 = vadd.f32 %v1689, %v1803
        %v1812 = vadd.f32 %v1690, %v1806
        %v1813 = vld [vmem:[#allocation2 + $0x4] sm:$0xf]
        %v1814 = vld [vmem:[#allocation2 + $0x8] sm:$0xf]
        %v1815 = vld [vmem:[#allocation2 + $0xc] sm:$0xf]
        %v1816 = vld [vmem:[#allocation2 + $0x10] sm:$0xf]
        %v1817 = vld [vmem:[#allocation2 + $0x14] sm:$0x1]
        %s1818 = scalar_lea.vmem %s4, 448
        %v1819 = vld [vmem:[%s1818] sm:$0xf]
        %v1820 = vld [vmem:[%s1818 + $0x4] sm:$0xf]
        %v1821 = vld [vmem:[%s1818 + $0x8] sm:$0xf]
        %v1822 = vld [vmem:[%s1818 + $0xc] sm:$0xf]
        %v1823 = vld [vmem:[%s1818 + $0x10] sm:$0xf]
        %v1824 = vld [vmem:[%s1818 + $0x14] sm:$0xf]
        %v1825 = vld [vmem:[%s1818 + $0x18] sm:$0xf]
        %v1826 = vld [vmem:[%s1818 + $0x1c] sm:$0xf]
        %v1827 = vld [vmem:[%s1818 + $0x20] sm:$0xf]
        %v1828 = vld [vmem:[%s1818 + $0x24] sm:$0xf]
        %v1829 = vld [vmem:[%s1818 + $0x28] sm:$0xf]
        %v1830 = vld [vmem:[%s1818 + $0x2c] sm:$0xf]
        %v1831 = vld [vmem:[%s1818 + $0x30] sm:$0xf]
        %v1832 = vld [vmem:[%s1818 + $0x34] sm:$0xf]
        %v1833 = vld [vmem:[%s1818 + $0x38] sm:$0xf]
        %v1834 = vld [vmem:[%s1818 + $0x3c] sm:$0xf]
        %v1840 = vunpack.c.l.b16 %v1813
        %v1841 = vunpack.c.l.b16 %v1814
        %v1842 = vunpack.c.l.b16 %v1815
        %v1843 = vunpack.c.l.b16 %v1816
        %v1844 = vunpack.c.l.b16 %v1817
        %v1845 = vpack.c.b16 %v1841, %v1840
        %v1846 = vpack.c.b16 %v1843, %v1842
        %v1847 = vpack.c.b16 %v1844, %v1844
        %vm1848 = vsmask.f32 7424
        %v1850 = vshrl.u32 %v1845, 16
        %v1852 = vshll.u32 %v1845, 16
        %v1854 = vrot.slane %v1852, 1
        %v1855 = vor.u32 %v1850, %v1854
        %v1857 = vshll.u32 %v1846, 16
        %v1859 = vrot.slane %v1857, 1
        %v1860 = vsel %vm1848, %v1855, %v1859
        %v1861 = vshrl.u32 %v1846, 16
        %v1863 = vor.u32 %v1861, %v1859
        %v1865 = vshll.u32 %v1847, 16
        %v1867 = vrot.slane %v1865, 1
        %v1868 = vsel %vm1848, %v1863, %v1867
        %v1887 = vunpack.c.l.b16 %v1819
        %v1888 = vunpack.c.l.b16 %v1820
        %v1889 = vunpack.c.l.b16 %v1821
        %v1890 = vunpack.c.l.b16 %v1822
        %v1891 = vunpack.c.l.b16 %v1823
        %v1892 = vunpack.c.l.b16 %v1824
        %v1893 = vunpack.c.l.b16 %v1825
        %v1894 = vunpack.c.l.b16 %v1826
        %v1895 = vunpack.c.l.b16 %v1827
        %v1896 = vunpack.c.l.b16 %v1828
        %v1897 = vunpack.c.l.b16 %v1829
        %v1898 = vunpack.c.l.b16 %v1830
        %v1899 = vunpack.c.l.b16 %v1831
        %v1900 = vunpack.c.l.b16 %v1832
        %v1901 = vunpack.c.l.b16 %v1833
        %v1902 = vunpack.c.l.b16 %v1834
        %v1903 = vpack.c.b16 %v1888, %v1887
        %v1904 = vpack.c.b16 %v1890, %v1889
        %v1905 = vpack.c.b16 %v1892, %v1891
        %v1906 = vpack.c.b16 %v1894, %v1893
        %v1907 = vpack.c.b16 %v1896, %v1895
        %v1908 = vpack.c.b16 %v1898, %v1897
        %v1909 = vpack.c.b16 %v1900, %v1899
        %v1910 = vpack.c.b16 %v1902, %v1901
        %1919 = vmatprep.subr.bf16.mxu0 0
        %1920 = vmatpush1.bf16.msra.mxu0 %v1903
        %1921 = vmatprep.subr.bf16.mxu0 0
        %1922 = vmatpush1.bf16.msra.mxu0 %v1904
        %1923 = vmatprep.subr.bf16.mxu0 0
        %1924 = vmatpush1.bf16.msra.mxu0 %v1905
        %1925 = vmatprep.subr.bf16.mxu0 0
        %1926 = vmatpush1.bf16.msra.mxu0 %v1906
        %1927 = vmatprep.subr.bf16.mxu0 0
        %1928 = vmatpush1.bf16.msra.mxu0 %v1907
        %1929 = vmatprep.subr.bf16.mxu0 0
        %1930 = vmatpush1.bf16.msra.mxu0 %v1908
        %1931 = vmatprep.subr.bf16.mxu0 0
        %1932 = vmatpush1.bf16.msra.mxu0 %v1909
        %1933 = vmatprep.subr.bf16.mxu0 0
        %1934 = vmatpush1.bf16.msra.mxu0 %v1910
        %1935 = vmatprep.subr.bf16.mxu0 0
        %1936 = vmatpush1.bf16.msra.mxu0 0
        %1937 = vmatprep.subr.bf16.mxu0 0
        %1938 = vmatpush1.bf16.msra.mxu0 0
        %1939 = vmatprep.subr.bf16.mxu0 0
        %1940 = vmatpush1.bf16.msra.mxu0 0
        %1941 = vmatprep.subr.bf16.mxu0 0
        %1942 = vmatpush1.bf16.msra.mxu0 0
        %1943 = vmatprep.subr.bf16.mxu0 0
        %1944 = vmatpush1.bf16.msra.mxu0 0
        %1945 = vmatprep.subr.bf16.mxu0 0
        %1946 = vmatpush1.bf16.msra.mxu0 0
        %1947 = vmatprep.subr.bf16.mxu0 0
        %1948 = vmatpush1.bf16.msra.mxu0 0
        %1949 = vmatprep.subr.bf16.mxu0 0
        %1950 = vmatpush1.bf16.msra.mxu0 0
        %1951 = vmatprep.mubr.bf16.mxu0 0
        %1952 = vmatmul.mubr.bf16.gmra.mrb[0].mxu0 %v1860
        %v1953 = vpop.f32.mrb[0].mxu0
        %v1954 = vadd.f32 0.0, %v1953
        %v1955 = vpop.f32.mrb[0].mxu0
        %v1956 = vpop.f32.mrb[0].mxu0
        %v1957 = vadd.f32 0.0, %v1956
        %v1958 = vpop.f32.mrb[0].mxu0
        %1959 = vmatprep.mubr.bf16.mxu0 0
        %1960 = vmatmul.mubr.bf16.gmra.mrb[0].mxu0 %v1868
        %v1961 = vpop.f32.mrb[0].mxu0
        %v1962 = vadd.f32 0.0, %v1961
        %v1963 = vpop.f32.mrb[0].mxu0
        %v1964 = vpop.f32.mrb[0].mxu0
        %v1965 = vadd.f32 0.0, %v1964
        %v1966 = vpop.f32.mrb[0].mxu0
        %1967 = vdwg.mxu0
        %v1968 = vadd.f32 %v1809, %v1954
        %v1969 = vadd.f32 %v1810, %v1957
        %v1970 = vadd.f32 %v1811, %v1962
        %v1971 = vadd.f32 %v1812, %v1965
        %v1972 = vld [vmem:[#allocation2 + $0x4] sm:$0xe]
        %s1973 = scalar_lea.vmem %s4, 512
        %v1974 = vld [vmem:[%s1973] sm:$0xf]
        %v1975 = vld [vmem:[%s1973 + $0x4] sm:$0xf]
        %v1976 = vld [vmem:[%s1973 + $0x8] sm:$0xf]
        %v1977 = vld [vmem:[%s1973 + $0xc] sm:$0xf]
        %v1978 = vld [vmem:[%s1973 + $0x10] sm:$0xf]
        %v1979 = vld [vmem:[%s1973 + $0x14] sm:$0xf]
        %v1980 = vld [vmem:[%s1973 + $0x18] sm:$0xf]
        %v1981 = vld [vmem:[%s1973 + $0x1c] sm:$0xf]
        %v1982 = vld [vmem:[%s1973 + $0x20] sm:$0xf]
        %v1983 = vld [vmem:[%s1973 + $0x24] sm:$0xf]
        %v1984 = vld [vmem:[%s1973 + $0x28] sm:$0xf]
        %v1985 = vld [vmem:[%s1973 + $0x2c] sm:$0xf]
        %v1986 = vld [vmem:[%s1973 + $0x30] sm:$0xf]
        %v1987 = vld [vmem:[%s1973 + $0x34] sm:$0xf]
        %v1988 = vld [vmem:[%s1973 + $0x38] sm:$0xf]
        %v1989 = vld [vmem:[%s1973 + $0x3c] sm:$0xf]
        %v1991 = vunpack.c.l.b16 %v1972
        %v1992 = vpack.c.b16 %v1841, %v1991
        %v1993 = vrot.slane %v1992, 1
        %v1994 = vrot.slane %v1846, 1
        %v1995 = vsel %vm1035, %v1993, %v1994
        %v1996 = vrot.slane %v1847, 1
        %v1997 = vsel %vm1035, %v1994, %v1996
        %v2016 = vunpack.c.l.b16 %v1974
        %v2017 = vunpack.c.l.b16 %v1975
        %v2018 = vunpack.c.l.b16 %v1976
        %v2019 = vunpack.c.l.b16 %v1977
        %v2020 = vunpack.c.l.b16 %v1978
        %v2021 = vunpack.c.l.b16 %v1979
        %v2022 = vunpack.c.l.b16 %v1980
        %v2023 = vunpack.c.l.b16 %v1981
        %v2024 = vunpack.c.l.b16 %v1982
        %v2025 = vunpack.c.l.b16 %v1983
        %v2026 = vunpack.c.l.b16 %v1984
        %v2027 = vunpack.c.l.b16 %v1985
        %v2028 = vunpack.c.l.b16 %v1986
        %v2029 = vunpack.c.l.b16 %v1987
        %v2030 = vunpack.c.l.b16 %v1988
        %v2031 = vunpack.c.l.b16 %v1989
        %v2032 = vpack.c.b16 %v2017, %v2016
        %v2033 = vpack.c.b16 %v2019, %v2018
        %v2034 = vpack.c.b16 %v2021, %v2020
        %v2035 = vpack.c.b16 %v2023, %v2022
        %v2036 = vpack.c.b16 %v2025, %v2024
        %v2037 = vpack.c.b16 %v2027, %v2026
        %v2038 = vpack.c.b16 %v2029, %v2028
        %v2039 = vpack.c.b16 %v2031, %v2030
        %2048 = vmatprep.subr.bf16.mxu0 0
        %2049 = vmatpush1.bf16.msra.mxu0 %v2032
        %2050 = vmatprep.subr.bf16.mxu0 0
        %2051 = vmatpush1.bf16.msra.mxu0 %v2033
        %2052 = vmatprep.subr.bf16.mxu0 0
        %2053 = vmatpush1.bf16.msra.mxu0 %v2034
        %2054 = vmatprep.subr.bf16.mxu0 0
        %2055 = vmatpush1.bf16.msra.mxu0 %v2035
        %2056 = vmatprep.subr.bf16.mxu0 0
        %2057 = vmatpush1.bf16.msra.mxu0 %v2036
        %2058 = vmatprep.subr.bf16.mxu0 0
        %2059 = vmatpush1.bf16.msra.mxu0 %v2037
        %2060 = vmatprep.subr.bf16.mxu0 0
        %2061 = vmatpush1.bf16.msra.mxu0 %v2038
        %2062 = vmatprep.subr.bf16.mxu0 0
        %2063 = vmatpush1.bf16.msra.mxu0 %v2039
        %2064 = vmatprep.subr.bf16.mxu0 0
        %2065 = vmatpush1.bf16.msra.mxu0 0
        %2066 = vmatprep.subr.bf16.mxu0 0
        %2067 = vmatpush1.bf16.msra.mxu0 0
        %2068 = vmatprep.subr.bf16.mxu0 0
        %2069 = vmatpush1.bf16.msra.mxu0 0
        %2070 = vmatprep.subr.bf16.mxu0 0
        %2071 = vmatpush1.bf16.msra.mxu0 0
        %2072 = vmatprep.subr.bf16.mxu0 0
        %2073 = vmatpush1.bf16.msra.mxu0 0
        %2074 = vmatprep.subr.bf16.mxu0 0
        %2075 = vmatpush1.bf16.msra.mxu0 0
        %2076 = vmatprep.subr.bf16.mxu0 0
        %2077 = vmatpush1.bf16.msra.mxu0 0
        %2078 = vmatprep.subr.bf16.mxu0 0
        %2079 = vmatpush1.bf16.msra.mxu0 0
        %2080 = vmatprep.mubr.bf16.mxu0 0
        %2081 = vmatmul.mubr.bf16.gmra.mrb[0].mxu0 %v1995
        %v2082 = vpop.f32.mrb[0].mxu0
        %v2083 = vadd.f32 0.0, %v2082
        %v2084 = vpop.f32.mrb[0].mxu0
        %v2085 = vpop.f32.mrb[0].mxu0
        %v2086 = vadd.f32 0.0, %v2085
        %v2087 = vpop.f32.mrb[0].mxu0
        %2088 = vmatprep.mubr.bf16.mxu0 0
        %2089 = vmatmul.mubr.bf16.gmra.mrb[0].mxu0 %v1997
        %v2090 = vpop.f32.mrb[0].mxu0
        %v2091 = vadd.f32 0.0, %v2090
        %v2092 = vpop.f32.mrb[0].mxu0
        %v2093 = vpop.f32.mrb[0].mxu0
        %v2094 = vadd.f32 0.0, %v2093
        %v2095 = vpop.f32.mrb[0].mxu0
        %2096 = vdwg.mxu0
        %v2097 = vadd.f32 %v1968, %v2083
        %v2098 = vadd.f32 %v1969, %v2086
        %v2099 = vadd.f32 %v1970, %v2091
        %v2100 = vadd.f32 %v1971, %v2094
        %v2101 = vld [vmem:[#allocation2 + $0x14] sm:$0x3]
        %s2102 = scalar_lea.vmem %s4, 576
        %v2103 = vld [vmem:[%s2102] sm:$0xf]
        %v2104 = vld [vmem:[%s2102 + $0x4] sm:$0xf]
        %v2105 = vld [vmem:[%s2102 + $0x8] sm:$0xf]
        %v2106 = vld [vmem:[%s2102 + $0xc] sm:$0xf]
        %v2107 = vld [vmem:[%s2102 + $0x10] sm:$0xf]
        %v2108 = vld [vmem:[%s2102 + $0x14] sm:$0xf]
        %v2109 = vld [vmem:[%s2102 + $0x18] sm:$0xf]
        %v2110 = vld [vmem:[%s2102 + $0x1c] sm:$0xf]
        %v2111 = vld [vmem:[%s2102 + $0x20] sm:$0xf]
        %v2112 = vld [vmem:[%s2102 + $0x24] sm:$0xf]
        %v2113 = vld [vmem:[%s2102 + $0x28] sm:$0xf]
        %v2114 = vld [vmem:[%s2102 + $0x2c] sm:$0xf]
        %v2115 = vld [vmem:[%s2102 + $0x30] sm:$0xf]
        %v2116 = vld [vmem:[%s2102 + $0x34] sm:$0xf]
        %v2117 = vld [vmem:[%s2102 + $0x38] sm:$0xf]
        %v2118 = vld [vmem:[%s2102 + $0x3c] sm:$0xf]
        %v2120 = vunpack.c.l.b16 %v2101
        %v2121 = vpack.c.b16 %v2120, %v2120
        %v2123 = vshrl.u32 %v1992, 16
        %v2125 = vrot.slane %v2123, 1
        %v2126 = vshll.u32 %v1992, 16
        %v2128 = vrot.slane %v2126, 2
        %v2129 = vor.u32 %v2125, %v2128
        %v2130 = vrot.slane %v1861, 1
        %v2131 = vrot.slane %v1857, 2
        %v2132 = vor.u32 %v2130, %v2131
        %v2133 = vsel %vm906, %v2129, %v2132
        %v2135 = vshrl.u32 %v2121, 16
        %v2137 = vrot.slane %v2135, 1
        %v2138 = vshll.u32 %v2121, 16
        %v2140 = vrot.slane %v2138, 2
        %v2141 = vor.u32 %v2137, %v2140
        %v2142 = vsel %vm906, %v2132, %v2141
        %v2161 = vunpack.c.l.b16 %v2103
        %v2162 = vunpack.c.l.b16 %v2104
        %v2163 = vunpack.c.l.b16 %v2105
        %v2164 = vunpack.c.l.b16 %v2106
        %v2165 = vunpack.c.l.b16 %v2107
        %v2166 = vunpack.c.l.b16 %v2108
        %v2167 = vunpack.c.l.b16 %v2109
        %v2168 = vunpack.c.l.b16 %v2110
        %v2169 = vunpack.c.l.b16 %v2111
        %v2170 = vunpack.c.l.b16 %v2112
        %v2171 = vunpack.c.l.b16 %v2113
        %v2172 = vunpack.c.l.b16 %v2114
        %v2173 = vunpack.c.l.b16 %v2115
        %v2174 = vunpack.c.l.b16 %v2116
        %v2175 = vunpack.c.l.b16 %v2117
        %v2176 = vunpack.c.l.b16 %v2118
        %v2177 = vpack.c.b16 %v2162, %v2161
        %v2178 = vpack.c.b16 %v2164, %v2163
        %v2179 = vpack.c.b16 %v2166, %v2165
        %v2180 = vpack.c.b16 %v2168, %v2167
        %v2181 = vpack.c.b16 %v2170, %v2169
        %v2182 = vpack.c.b16 %v2172, %v2171
        %v2183 = vpack.c.b16 %v2174, %v2173
        %v2184 = vpack.c.b16 %v2176, %v2175
        %2193 = vmatprep.subr.bf16.mxu0 0
        %2194 = vmatpush1.bf16.msra.mxu0 %v2177
        %2195 = vmatprep.subr.bf16.mxu0 0
        %2196 = vmatpush1.bf16.msra.mxu0 %v2178
        %2197 = vmatprep.subr.bf16.mxu0 0
        %2198 = vmatpush1.bf16.msra.mxu0 %v2179
        %2199 = vmatprep.subr.bf16.mxu0 0
        %2200 = vmatpush1.bf16.msra.mxu0 %v2180
        %2201 = vmatprep.subr.bf16.mxu0 0
        %2202 = vmatpush1.bf16.msra.mxu0 %v2181
        %2203 = vmatprep.subr.bf16.mxu0 0
        %2204 = vmatpush1.bf16.msra.mxu0 %v2182
        %2205 = vmatprep.subr.bf16.mxu0 0
        %2206 = vmatpush1.bf16.msra.mxu0 %v2183
        %2207 = vmatprep.subr.bf16.mxu0 0
        %2208 = vmatpush1.bf16.msra.mxu0 %v2184
        %2209 = vmatprep.subr.bf16.mxu0 0
        %2210 = vmatpush1.bf16.msra.mxu0 0
        %2211 = vmatprep.subr.bf16.mxu0 0
        %2212 = vmatpush1.bf16.msra.mxu0 0
        %2213 = vmatprep.subr.bf16.mxu0 0
        %2214 = vmatpush1.bf16.msra.mxu0 0
        %2215 = vmatprep.subr.bf16.mxu0 0
        %2216 = vmatpush1.bf16.msra.mxu0 0
        %2217 = vmatprep.subr.bf16.mxu0 0
        %2218 = vmatpush1.bf16.msra.mxu0 0
        %2219 = vmatprep.subr.bf16.mxu0 0
        %2220 = vmatpush1.bf16.msra.mxu0 0
        %2221 = vmatprep.subr.bf16.mxu0 0
        %2222 = vmatpush1.bf16.msra.mxu0 0
        %2223 = vmatprep.subr.bf16.mxu0 0
        %2224 = vmatpush1.bf16.msra.mxu0 0
        %2225 = vmatprep.mubr.bf16.mxu0 0
        %2226 = vmatmul.mubr.bf16.gmra.mrb[0].mxu0 %v2133
        %v2227 = vpop.f32.mrb[0].mxu0
        %v2228 = vadd.f32 0.0, %v2227
        %v2229 = vpop.f32.mrb[0].mxu0
        %v2230 = vpop.f32.mrb[0].mxu0
        %v2231 = vadd.f32 0.0, %v2230
        %v2232 = vpop.f32.mrb[0].mxu0
        %2233 = vmatprep.mubr.bf16.mxu0 0
        %2234 = vmatmul.mubr.bf16.gmra.mrb[0].mxu0 %v2142
        %v2235 = vpop.f32.mrb[0].mxu0
        %v2236 = vadd.f32 0.0, %v2235
        %v2237 = vpop.f32.mrb[0].mxu0
        %v2238 = vpop.f32.mrb[0].mxu0
        %v2239 = vadd.f32 0.0, %v2238
        %v2240 = vpop.f32.mrb[0].mxu0
        %2241 = vdwg.mxu0
        %v2242 = vadd.f32 %v2097, %v2228
        %v2243 = vadd.f32 %v2098, %v2231
        %v2244 = vadd.f32 %v2099, %v2236
        %v2245 = vadd.f32 %v2100, %v2239
        %v2246 = vld [vmem:[#allocation2 + $0x4] sm:$0xc]
        %s2247 = scalar_lea.vmem %s4, 640
        %v2248 = vld [vmem:[%s2247] sm:$0xf]
        %v2249 = vld [vmem:[%s2247 + $0x4] sm:$0xf]
        %v2250 = vld [vmem:[%s2247 + $0x8] sm:$0xf]
        %v2251 = vld [vmem:[%s2247 + $0xc] sm:$0xf]
        %v2252 = vld [vmem:[%s2247 + $0x10] sm:$0xf]
        %v2253 = vld [vmem:[%s2247 + $0x14] sm:$0xf]
        %v2254 = vld [vmem:[%s2247 + $0x18] sm:$0xf]
        %v2255 = vld [vmem:[%s2247 + $0x1c] sm:$0xf]
        %v2256 = vld [vmem:[%s2247 + $0x20] sm:$0xf]
        %v2257 = vld [vmem:[%s2247 + $0x24] sm:$0xf]
        %v2258 = vld [vmem:[%s2247 + $0x28] sm:$0xf]
        %v2259 = vld [vmem:[%s2247 + $0x2c] sm:$0xf]
        %v2260 = vld [vmem:[%s2247 + $0x30] sm:$0xf]
        %v2261 = vld [vmem:[%s2247 + $0x34] sm:$0xf]
        %v2262 = vld [vmem:[%s2247 + $0x38] sm:$0xf]
        %v2263 = vld [vmem:[%s2247 + $0x3c] sm:$0xf]
        %v2265 = vunpack.c.l.b16 %v2246
        %v2266 = vpack.c.b16 %v1841, %v2265
        %v2267 = vrot.slane %v2266, 2
        %v2268 = vrot.slane %v1846, 2
        %v2269 = vsel %vm1161, %v2267, %v2268
        %v2270 = vrot.slane %v2121, 2
        %v2271 = vsel %vm1161, %v2268, %v2270
        %v2290 = vunpack.c.l.b16 %v2248
        %v2291 = vunpack.c.l.b16 %v2249
        %v2292 = vunpack.c.l.b16 %v2250
        %v2293 = vunpack.c.l.b16 %v2251
        %v2294 = vunpack.c.l.b16 %v2252
        %v2295 = vunpack.c.l.b16 %v2253
        %v2296 = vunpack.c.l.b16 %v2254
        %v2297 = vunpack.c.l.b16 %v2255
        %v2298 = vunpack.c.l.b16 %v2256
        %v2299 = vunpack.c.l.b16 %v2257
        %v2300 = vunpack.c.l.b16 %v2258
        %v2301 = vunpack.c.l.b16 %v2259
        %v2302 = vunpack.c.l.b16 %v2260
        %v2303 = vunpack.c.l.b16 %v2261
        %v2304 = vunpack.c.l.b16 %v2262
        %v2305 = vunpack.c.l.b16 %v2263
        %v2306 = vpack.c.b16 %v2291, %v2290
        %v2307 = vpack.c.b16 %v2293, %v2292
        %v2308 = vpack.c.b16 %v2295, %v2294
        %v2309 = vpack.c.b16 %v2297, %v2296
        %v2310 = vpack.c.b16 %v2299, %v2298
        %v2311 = vpack.c.b16 %v2301, %v2300
        %v2312 = vpack.c.b16 %v2303, %v2302
        %v2313 = vpack.c.b16 %v2305, %v2304
        %2322 = vmatprep.subr.bf16.mxu0 0
        %2323 = vmatpush1.bf16.msra.mxu0 %v2306
        %2324 = vmatprep.subr.bf16.mxu0 0
        %2325 = vmatpush1.bf16.msra.mxu0 %v2307
        %2326 = vmatprep.subr.bf16.mxu0 0
        %2327 = vmatpush1.bf16.msra.mxu0 %v2308
        %2328 = vmatprep.subr.bf16.mxu0 0
        %2329 = vmatpush1.bf16.msra.mxu0 %v2309
        %2330 = vmatprep.subr.bf16.mxu0 0
        %2331 = vmatpush1.bf16.msra.mxu0 %v2310
        %2332 = vmatprep.subr.bf16.mxu0 0
        %2333 = vmatpush1.bf16.msra.mxu0 %v2311
        %2334 = vmatprep.subr.bf16.mxu0 0
        %2335 = vmatpush1.bf16.msra.mxu0 %v2312
        %2336 = vmatprep.subr.bf16.mxu0 0
        %2337 = vmatpush1.bf16.msra.mxu0 %v2313
        %2338 = vmatprep.subr.bf16.mxu0 0
        %2339 = vmatpush1.bf16.msra.mxu0 0
        %2340 = vmatprep.subr.bf16.mxu0 0
        %2341 = vmatpush1.bf16.msra.mxu0 0
        %2342 = vmatprep.subr.bf16.mxu0 0
        %2343 = vmatpush1.bf16.msra.mxu0 0
        %2344 = vmatprep.subr.bf16.mxu0 0
        %2345 = vmatpush1.bf16.msra.mxu0 0
        %2346 = vmatprep.subr.bf16.mxu0 0
        %2347 = vmatpush1.bf16.msra.mxu0 0
        %2348 = vmatprep.subr.bf16.mxu0 0
        %2349 = vmatpush1.bf16.msra.mxu0 0
        %2350 = vmatprep.subr.bf16.mxu0 0
        %2351 = vmatpush1.bf16.msra.mxu0 0
        %2352 = vmatprep.subr.bf16.mxu0 0
        %2353 = vmatpush1.bf16.msra.mxu0 0
        %2354 = vmatprep.mubr.bf16.mxu0 0
        %2355 = vmatmul.mubr.bf16.gmra.mrb[0].mxu0 %v2269
        %v2356 = vpop.f32.mrb[0].mxu0
        %v2357 = vadd.f32 0.0, %v2356
        %v2358 = vpop.f32.mrb[0].mxu0
        %v2359 = vpop.f32.mrb[0].mxu0
        %v2360 = vadd.f32 0.0, %v2359
        %v2361 = vpop.f32.mrb[0].mxu0
        %2362 = vmatprep.mubr.bf16.mxu0 0
        %2363 = vmatmul.mubr.bf16.gmra.mrb[0].mxu0 %v2271
        %v2364 = vpop.f32.mrb[0].mxu0
        %v2365 = vadd.f32 0.0, %v2364
        %v2366 = vpop.f32.mrb[0].mxu0
        %v2367 = vpop.f32.mrb[0].mxu0
        %v2368 = vadd.f32 0.0, %v2367
        %v2369 = vpop.f32.mrb[0].mxu0
        %2370 = vdwg.mxu0
        %v2371 = vadd.f32 %v2242, %v2357
        %v2372 = vadd.f32 %v2243, %v2360
        %v2373 = vadd.f32 %v2244, %v2365
        %v2374 = vadd.f32 %v2245, %v2368
        %v2375 = vld [vmem:[#allocation2 + $0x14] sm:$0x7]
        %s2376 = scalar_lea.vmem %s4, 704
        %v2377 = vld [vmem:[%s2376] sm:$0xf]
        %v2378 = vld [vmem:[%s2376 + $0x4] sm:$0xf]
        %v2379 = vld [vmem:[%s2376 + $0x8] sm:$0xf]
        %v2380 = vld [vmem:[%s2376 + $0xc] sm:$0xf]
        %v2381 = vld [vmem:[%s2376 + $0x10] sm:$0xf]
        %v2382 = vld [vmem:[%s2376 + $0x14] sm:$0xf]
        %v2383 = vld [vmem:[%s2376 + $0x18] sm:$0xf]
        %v2384 = vld [vmem:[%s2376 + $0x1c] sm:$0xf]
        %v2385 = vld [vmem:[%s2376 + $0x20] sm:$0xf]
        %v2386 = vld [vmem:[%s2376 + $0x24] sm:$0xf]
        %v2387 = vld [vmem:[%s2376 + $0x28] sm:$0xf]
        %v2388 = vld [vmem:[%s2376 + $0x2c] sm:$0xf]
        %v2389 = vld [vmem:[%s2376 + $0x30] sm:$0xf]
        %v2390 = vld [vmem:[%s2376 + $0x34] sm:$0xf]
        %v2391 = vld [vmem:[%s2376 + $0x38] sm:$0xf]
        %v2392 = vld [vmem:[%s2376 + $0x3c] sm:$0xf]
        %v2394 = vunpack.c.l.b16 %v2375
        %v2395 = vpack.c.b16 %v2394, %v2394
        %v2397 = vshrl.u32 %v2266, 16
        %v2399 = vrot.slane %v2397, 2
        %v2400 = vshll.u32 %v2266, 16
        %v2402 = vrot.slane %v2400, 3
        %v2403 = vor.u32 %v2399, %v2402
        %v2404 = vrot.slane %v1861, 2
        %v2405 = vrot.slane %v1857, 3
        %v2406 = vor.u32 %v2404, %v2405
        %v2407 = vsel %vm1291, %v2403, %v2406
        %v2409 = vshrl.u32 %v2395, 16
        %v2411 = vrot.slane %v2409, 2
        %v2412 = vshll.u32 %v2395, 16
        %v2414 = vrot.slane %v2412, 3
        %v2415 = vor.u32 %v2411, %v2414
        %v2416 = vsel %vm1291, %v2406, %v2415
        %v2435 = vunpack.c.l.b16 %v2377
        %v2436 = vunpack.c.l.b16 %v2378
        %v2437 = vunpack.c.l.b16 %v2379
        %v2438 = vunpack.c.l.b16 %v2380
        %v2439 = vunpack.c.l.b16 %v2381
        %v2440 = vunpack.c.l.b16 %v2382
        %v2441 = vunpack.c.l.b16 %v2383
        %v2442 = vunpack.c.l.b16 %v2384
        %v2443 = vunpack.c.l.b16 %v2385
        %v2444 = vunpack.c.l.b16 %v2386
        %v2445 = vunpack.c.l.b16 %v2387
        %v2446 = vunpack.c.l.b16 %v2388
        %v2447 = vunpack.c.l.b16 %v2389
        %v2448 = vunpack.c.l.b16 %v2390
        %v2449 = vunpack.c.l.b16 %v2391
        %v2450 = vunpack.c.l.b16 %v2392
        %v2451 = vpack.c.b16 %v2436, %v2435
        %v2452 = vpack.c.b16 %v2438, %v2437
        %v2453 = vpack.c.b16 %v2440, %v2439
        %v2454 = vpack.c.b16 %v2442, %v2441
        %v2455 = vpack.c.b16 %v2444, %v2443
        %v2456 = vpack.c.b16 %v2446, %v2445
        %v2457 = vpack.c.b16 %v2448, %v2447
        %v2458 = vpack.c.b16 %v2450, %v2449
        %2467 = vmatprep.subr.bf16.mxu0 0
        %2468 = vmatpush1.bf16.msra.mxu0 %v2451
        %2469 = vmatprep.subr.bf16.mxu0 0
        %2470 = vmatpush1.bf16.msra.mxu0 %v2452
        %2471 = vmatprep.subr.bf16.mxu0 0
        %2472 = vmatpush1.bf16.msra.mxu0 %v2453
        %2473 = vmatprep.subr.bf16.mxu0 0
        %2474 = vmatpush1.bf16.msra.mxu0 %v2454
        %2475 = vmatprep.subr.bf16.mxu0 0
        %2476 = vmatpush1.bf16.msra.mxu0 %v2455
        %2477 = vmatprep.subr.bf16.mxu0 0
        %2478 = vmatpush1.bf16.msra.mxu0 %v2456
        %2479 = vmatprep.subr.bf16.mxu0 0
        %2480 = vmatpush1.bf16.msra.mxu0 %v2457
        %2481 = vmatprep.subr.bf16.mxu0 0
        %2482 = vmatpush1.bf16.msra.mxu0 %v2458
        %2483 = vmatprep.subr.bf16.mxu0 0
        %2484 = vmatpush1.bf16.msra.mxu0 0
        %2485 = vmatprep.subr.bf16.mxu0 0
        %2486 = vmatpush1.bf16.msra.mxu0 0
        %2487 = vmatprep.subr.bf16.mxu0 0
        %2488 = vmatpush1.bf16.msra.mxu0 0
        %2489 = vmatprep.subr.bf16.mxu0 0
        %2490 = vmatpush1.bf16.msra.mxu0 0
        %2491 = vmatprep.subr.bf16.mxu0 0
        %2492 = vmatpush1.bf16.msra.mxu0 0
        %2493 = vmatprep.subr.bf16.mxu0 0
        %2494 = vmatpush1.bf16.msra.mxu0 0
        %2495 = vmatprep.subr.bf16.mxu0 0
        %2496 = vmatpush1.bf16.msra.mxu0 0
        %2497 = vmatprep.subr.bf16.mxu0 0
        %2498 = vmatpush1.bf16.msra.mxu0 0
        %2499 = vmatprep.mubr.bf16.mxu0 0
        %2500 = vmatmul.mubr.bf16.gmra.mrb[0].mxu0 %v2407
        %v2501 = vpop.f32.mrb[0].mxu0
        %v2502 = vadd.f32 0.0, %v2501
        %v2503 = vpop.f32.mrb[0].mxu0
        %v2504 = vpop.f32.mrb[0].mxu0
        %v2505 = vadd.f32 0.0, %v2504
        %v2506 = vpop.f32.mrb[0].mxu0
        %2507 = vmatprep.mubr.bf16.mxu0 0
        %2508 = vmatmul.mubr.bf16.gmra.mrb[0].mxu0 %v2416
        %v2509 = vpop.f32.mrb[0].mxu0
        %v2510 = vadd.f32 0.0, %v2509
        %v2511 = vpop.f32.mrb[0].mxu0
        %v2512 = vpop.f32.mrb[0].mxu0
        %v2513 = vadd.f32 0.0, %v2512
        %v2514 = vpop.f32.mrb[0].mxu0
        %2515 = vdwg.mxu0
        %v2516 = vadd.f32 %v2371, %v2502
        %v2517 = vadd.f32 %v2372, %v2505
        %v2518 = vadd.f32 %v2373, %v2510
        %v2519 = vadd.f32 %v2374, %v2513
        %v2520 = vld [vmem:[#allocation2 + $0x4] sm:$0x8]
        %s2521 = scalar_lea.vmem %s4, 768
        %v2522 = vld [vmem:[%s2521] sm:$0xf]
        %v2523 = vld [vmem:[%s2521 + $0x4] sm:$0xf]
        %v2524 = vld [vmem:[%s2521 + $0x8] sm:$0xf]
        %v2525 = vld [vmem:[%s2521 + $0xc] sm:$0xf]
        %v2526 = vld [vmem:[%s2521 + $0x10] sm:$0xf]
        %v2527 = vld [vmem:[%s2521 + $0x14] sm:$0xf]
        %v2528 = vld [vmem:[%s2521 + $0x18] sm:$0xf]
        %v2529 = vld [vmem:[%s2521 + $0x1c] sm:$0xf]
        %v2530 = vld [vmem:[%s2521 + $0x20] sm:$0xf]
        %v2531 = vld [vmem:[%s2521 + $0x24] sm:$0xf]
        %v2532 = vld [vmem:[%s2521 + $0x28] sm:$0xf]
        %v2533 = vld [vmem:[%s2521 + $0x2c] sm:$0xf]
        %v2534 = vld [vmem:[%s2521 + $0x30] sm:$0xf]
        %v2535 = vld [vmem:[%s2521 + $0x34] sm:$0xf]
        %v2536 = vld [vmem:[%s2521 + $0x38] sm:$0xf]
        %v2537 = vld [vmem:[%s2521 + $0x3c] sm:$0xf]
        %v2539 = vunpack.c.l.b16 %v2520
        %v2540 = vpack.c.b16 %v1841, %v2539
        %v2541 = vrot.slane %v2540, 3
        %v2542 = vrot.slane %v1846, 3
        %v2543 = vsel %vm1437, %v2541, %v2542
        %v2544 = vrot.slane %v2395, 3
        %v2545 = vsel %vm1437, %v2542, %v2544
        %v2564 = vunpack.c.l.b16 %v2522
        %v2565 = vunpack.c.l.b16 %v2523
        %v2566 = vunpack.c.l.b16 %v2524
        %v2567 = vunpack.c.l.b16 %v2525
        %v2568 = vunpack.c.l.b16 %v2526
        %v2569 = vunpack.c.l.b16 %v2527
        %v2570 = vunpack.c.l.b16 %v2528
        %v2571 = vunpack.c.l.b16 %v2529
        %v2572 = vunpack.c.l.b16 %v2530
        %v2573 = vunpack.c.l.b16 %v2531
        %v2574 = vunpack.c.l.b16 %v2532
        %v2575 = vunpack.c.l.b16 %v2533
        %v2576 = vunpack.c.l.b16 %v2534
        %v2577 = vunpack.c.l.b16 %v2535
        %v2578 = vunpack.c.l.b16 %v2536
        %v2579 = vunpack.c.l.b16 %v2537
        %v2580 = vpack.c.b16 %v2565, %v2564
        %v2581 = vpack.c.b16 %v2567, %v2566
        %v2582 = vpack.c.b16 %v2569, %v2568
        %v2583 = vpack.c.b16 %v2571, %v2570
        %v2584 = vpack.c.b16 %v2573, %v2572
        %v2585 = vpack.c.b16 %v2575, %v2574
        %v2586 = vpack.c.b16 %v2577, %v2576
        %v2587 = vpack.c.b16 %v2579, %v2578
        %2596 = vmatprep.subr.bf16.mxu0 0
        %2597 = vmatpush1.bf16.msra.mxu0 %v2580
        %2598 = vmatprep.subr.bf16.mxu0 0
        %2599 = vmatpush1.bf16.msra.mxu0 %v2581
        %2600 = vmatprep.subr.bf16.mxu0 0
        %2601 = vmatpush1.bf16.msra.mxu0 %v2582
        %2602 = vmatprep.subr.bf16.mxu0 0
        %2603 = vmatpush1.bf16.msra.mxu0 %v2583
        %2604 = vmatprep.subr.bf16.mxu0 0
        %2605 = vmatpush1.bf16.msra.mxu0 %v2584
        %2606 = vmatprep.subr.bf16.mxu0 0
        %2607 = vmatpush1.bf16.msra.mxu0 %v2585
        %2608 = vmatprep.subr.bf16.mxu0 0
        %2609 = vmatpush1.bf16.msra.mxu0 %v2586
        %2610 = vmatprep.subr.bf16.mxu0 0
        %2611 = vmatpush1.bf16.msra.mxu0 %v2587
        %2612 = vmatprep.subr.bf16.mxu0 0
        %2613 = vmatpush1.bf16.msra.mxu0 0
        %2614 = vmatprep.subr.bf16.mxu0 0
        %2615 = vmatpush1.bf16.msra.mxu0 0
        %2616 = vmatprep.subr.bf16.mxu0 0
        %2617 = vmatpush1.bf16.msra.mxu0 0
        %2618 = vmatprep.subr.bf16.mxu0 0
        %2619 = vmatpush1.bf16.msra.mxu0 0
        %2620 = vmatprep.subr.bf16.mxu0 0
        %2621 = vmatpush1.bf16.msra.mxu0 0
        %2622 = vmatprep.subr.bf16.mxu0 0
        %2623 = vmatpush1.bf16.msra.mxu0 0
        %2624 = vmatprep.subr.bf16.mxu0 0
        %2625 = vmatpush1.bf16.msra.mxu0 0
        %2626 = vmatprep.subr.bf16.mxu0 0
        %2627 = vmatpush1.bf16.msra.mxu0 0
        %2628 = vmatprep.mubr.bf16.mxu0 0
        %2629 = vmatmul.mubr.bf16.gmra.mrb[0].mxu0 %v2543
        %v2630 = vpop.f32.mrb[0].mxu0
        %v2631 = vadd.f32 0.0, %v2630
        %v2632 = vpop.f32.mrb[0].mxu0
        %v2633 = vpop.f32.mrb[0].mxu0
        %v2634 = vadd.f32 0.0, %v2633
        %v2635 = vpop.f32.mrb[0].mxu0
        %2636 = vmatprep.mubr.bf16.mxu0 0
        %2637 = vmatmul.mubr.bf16.gmra.mrb[0].mxu0 %v2545
        %v2638 = vpop.f32.mrb[0].mxu0
        %v2639 = vadd.f32 0.0, %v2638
        %v2640 = vpop.f32.mrb[0].mxu0
        %v2641 = vpop.f32.mrb[0].mxu0
        %v2642 = vadd.f32 0.0, %v2641
        %v2643 = vpop.f32.mrb[0].mxu0
        %2644 = vdwg.mxu0
        %v2645 = vadd.f32 %v2516, %v2631
        %v2646 = vadd.f32 %v2517, %v2634
        %v2647 = vadd.f32 %v2518, %v2639
        %v2648 = vadd.f32 %v2519, %v2642
        %v2649 = vld [vmem:[%s5] sm:$0x1]
        %v2651 = vlaneseq
        %v2652 = vshrl.u32 %v2651, 7
        %v2653 = vsub.s32 0, %v2652
        %v2654 = vrot.slane %v2649, %v2653
        %v2656 = vmul.f32 %v2645, %v2654
        %v2657 = vmul.f32 %v2646, %v2654
        %v2658 = vmul.f32 %v2647, %v2654
        %v2659 = vmul.f32 %v2648, %v2654
        %v2660 = vld [vmem:[#allocation5] sm:$0x1]
        %v2662 = vlaneseq
        %v2663 = vshrl.u32 %v2662, 7
        %v2664 = vsub.s32 0, %v2663
        %v2665 = vrot.slane %v2660, %v2664
        %v2667 = vadd.f32 %v2656, %v2665
        %v2668 = vadd.f32 %v2657, %v2665
        %v2669 = vadd.f32 %v2658, %v2665
        %v2670 = vadd.f32 %v2659, %v2665
        %v2671 = vmax.f32 %v2667, 0.0
        %v2672 = vmax.f32 %v2668, 0.0
        %v2673 = vmax.f32 %v2669, 0.0
        %v2674 = vmax.f32 %v2670, 0.0
        %v2675 = vpack.c.bf16 %v2672, %v2671
        %v2676 = vpack.c.bf16 %v2674, %v2673
        %v2679 = vunpack.c.l.b16 %v2675
        %v2680 = vunpack.c.h.b16 %v2675
        %v2681 = vunpack.c.l.b16 %v2676
        %v2682 = vunpack.c.h.b16 %v2676
        %v2683 = vpack.c.b16 %v2679, %v2679
        %v2684 = vpack.c.b16 %v2680, %v2680
        %v2685 = vpack.c.b16 %v2681, %v2681
        %v2686 = vpack.c.b16 %v2682, %v2682
        %2691 = vst [vmem:[#allocation3 + $0x4] sm:$0xf] %v2683
        %2692 = vst [vmem:[#allocation3 + $0x8] sm:$0xf] %v2684
        %2693 = vst [vmem:[#allocation3 + $0xc] sm:$0xf] %v2685
        %2694 = vst [vmem:[#allocation3 + $0x10] sm:$0xf] %v2686
        %v2695 = vld [vmem:[#allocation3] sm:$0xc]
        %v2696 = vld [vmem:[#allocation3 + $0x4] sm:$0xf]
        %v2697 = vld [vmem:[#allocation3 + $0x8] sm:$0xf]
        %v2698 = vld [vmem:[#allocation3 + $0xc] sm:$0xf]
        %v2699 = vld [vmem:[#allocation3 + $0x10] sm:$0x7]
        %v2700 = vld [vmem:[%s7] sm:$0xff]
        %v2701 = vld [vmem:[%s7 + $0x8] sm:$0xff]
        %v2702 = vld [vmem:[%s7 + $0x10] sm:$0xff]
        %v2703 = vld [vmem:[%s7 + $0x18] sm:$0xff]
        %v2704 = vld [vmem:[%s7 + $0x20] sm:$0xff]
        %v2705 = vld [vmem:[%s7 + $0x28] sm:$0xff]
        %v2706 = vld [vmem:[%s7 + $0x30] sm:$0xff]
        %v2707 = vld [vmem:[%s7 + $0x38] sm:$0xff]
        %v2708 = vld [vmem:[%s7 + $0x40] sm:$0xff]
        %v2709 = vld [vmem:[%s7 + $0x48] sm:$0xff]
        %v2710 = vld [vmem:[%s7 + $0x50] sm:$0xff]
        %v2711 = vld [vmem:[%s7 + $0x58] sm:$0xff]
        %v2712 = vld [vmem:[%s7 + $0x60] sm:$0xff]
        %v2713 = vld [vmem:[%s7 + $0x68] sm:$0xff]
        %v2714 = vld [vmem:[%s7 + $0x70] sm:$0xff]
        %v2715 = vld [vmem:[%s7 + $0x78] sm:$0xff]
        %v2716 = vld [vmem:[#allocation3] sm:$0x8]
        %s2717 = scalar_lea.vmem %s7, 128
        %v2718 = vld [vmem:[%s2717] sm:$0xff]
        %v2719 = vld [vmem:[%s2717 + $0x8] sm:$0xff]
        %v2720 = vld [vmem:[%s2717 + $0x10] sm:$0xff]
        %v2721 = vld [vmem:[%s2717 + $0x18] sm:$0xff]
        %v2722 = vld [vmem:[%s2717 + $0x20] sm:$0xff]
        %v2723 = vld [vmem:[%s2717 + $0x28] sm:$0xff]
        %v2724 = vld [vmem:[%s2717 + $0x30] sm:$0xff]
        %v2725 = vld [vmem:[%s2717 + $0x38] sm:$0xff]
        %v2726 = vld [vmem:[%s2717 + $0x40] sm:$0xff]
        %v2727 = vld [vmem:[%s2717 + $0x48] sm:$0xff]
        %v2728 = vld [vmem:[%s2717 + $0x50] sm:$0xff]
        %v2729 = vld [vmem:[%s2717 + $0x58] sm:$0xff]
        %v2730 = vld [vmem:[%s2717 + $0x60] sm:$0xff]
        %v2731 = vld [vmem:[%s2717 + $0x68] sm:$0xff]
        %v2732 = vld [vmem:[%s2717 + $0x70] sm:$0xff]
        %v2733 = vld [vmem:[%s2717 + $0x78] sm:$0xff]
        %v2739 = vunpack.c.l.b16 %v2716
        %v2740 = vunpack.c.l.b16 %v2696
        %v2741 = vunpack.c.l.b16 %v2697
        %v2742 = vunpack.c.l.b16 %v2698
        %v2743 = vunpack.c.l.b16 %v2699
        %v2744 = vpack.c.b16 %v2740, %v2739
        %v2745 = vpack.c.b16 %v2742, %v2741
        %v2746 = vpack.c.b16 %v2743, %v2743
        %v2747 = vrot.slane %v2744, 3
        %v2748 = vrot.slane %v2745, 3
        %v2749 = vsel %vm1437, %v2747, %v2748
        %v2750 = vrot.slane %v2746, 3
        %v2751 = vsel %vm1437, %v2748, %v2750
        %v2770 = vunpack.c.l.b16 %v2718
        %v2771 = vunpack.c.h.b16 %v2718
        %v2772 = vunpack.c.l.b16 %v2719
        %v2773 = vunpack.c.h.b16 %v2719
        %v2774 = vunpack.c.l.b16 %v2720
        %v2775 = vunpack.c.h.b16 %v2720
        %v2776 = vunpack.c.l.b16 %v2721
        %v2777 = vunpack.c.h.b16 %v2721
        %v2778 = vunpack.c.l.b16 %v2722
        %v2779 = vunpack.c.h.b16 %v2722
        %v2780 = vunpack.c.l.b16 %v2723
        %v2781 = vunpack.c.h.b16 %v2723
        %v2782 = vunpack.c.l.b16 %v2724
        %v2783 = vunpack.c.h.b16 %v2724
        %v2784 = vunpack.c.l.b16 %v2725
        %v2785 = vunpack.c.h.b16 %v2725
        %v2786 = vunpack.c.l.b16 %v2726
        %v2787 = vunpack.c.h.b16 %v2726
        %v2788 = vunpack.c.l.b16 %v2727
        %v2789 = vunpack.c.h.b16 %v2727
        %v2790 = vunpack.c.l.b16 %v2728
        %v2791 = vunpack.c.h.b16 %v2728
        %v2792 = vunpack.c.l.b16 %v2729
        %v2793 = vunpack.c.h.b16 %v2729
        %v2794 = vunpack.c.l.b16 %v2730
        %v2795 = vunpack.c.h.b16 %v2730
        %v2796 = vunpack.c.l.b16 %v2731
        %v2797 = vunpack.c.h.b16 %v2731
        %v2798 = vunpack.c.l.b16 %v2732
        %v2799 = vunpack.c.h.b16 %v2732
        %v2800 = vunpack.c.l.b16 %v2733
        %v2801 = vunpack.c.h.b16 %v2733
        %v2802 = vpack.c.b16 %v2772, %v2770
        %v2803 = vpack.c.b16 %v2773, %v2771
        %v2804 = vpack.c.b16 %v2776, %v2774
        %v2805 = vpack.c.b16 %v2777, %v2775
        %v2806 = vpack.c.b16 %v2780, %v2778
        %v2807 = vpack.c.b16 %v2781, %v2779
        %v2808 = vpack.c.b16 %v2784, %v2782
        %v2809 = vpack.c.b16 %v2785, %v2783
        %v2810 = vpack.c.b16 %v2788, %v2786
        %v2811 = vpack.c.b16 %v2789, %v2787
        %v2812 = vpack.c.b16 %v2792, %v2790
        %v2813 = vpack.c.b16 %v2793, %v2791
        %v2814 = vpack.c.b16 %v2796, %v2794
        %v2815 = vpack.c.b16 %v2797, %v2795
        %v2816 = vpack.c.b16 %v2800, %v2798
        %v2817 = vpack.c.b16 %v2801, %v2799
        %2834 = vmatprep.subr.bf16.mxu0 %v2803
        %2835 = vmatpush1.bf16.msra.mxu0 %v2802
        %2836 = vmatprep.subr.bf16.mxu0 %v2805
        %2837 = vmatpush1.bf16.msra.mxu0 %v2804
        %2838 = vmatprep.subr.bf16.mxu0 %v2807
        %2839 = vmatpush1.bf16.msra.mxu0 %v2806
        %2840 = vmatprep.subr.bf16.mxu0 %v2809
        %2841 = vmatpush1.bf16.msra.mxu0 %v2808
        %2842 = vmatprep.subr.bf16.mxu0 %v2811
        %2843 = vmatpush1.bf16.msra.mxu0 %v2810
        %2844 = vmatprep.subr.bf16.mxu0 %v2813
        %2845 = vmatpush1.bf16.msra.mxu0 %v2812
        %2846 = vmatprep.subr.bf16.mxu0 %v2815
        %2847 = vmatpush1.bf16.msra.mxu0 %v2814
        %2848 = vmatprep.subr.bf16.mxu0 %v2817
        %2849 = vmatpush1.bf16.msra.mxu0 %v2816
        %2850 = vmatprep.subr.bf16.mxu0 0
        %2851 = vmatpush1.bf16.msra.mxu0 0
        %2852 = vmatprep.subr.bf16.mxu0 0
        %2853 = vmatpush1.bf16.msra.mxu0 0
        %2854 = vmatprep.subr.bf16.mxu0 0
        %2855 = vmatpush1.bf16.msra.mxu0 0
        %2856 = vmatprep.subr.bf16.mxu0 0
        %2857 = vmatpush1.bf16.msra.mxu0 0
        %2858 = vmatprep.subr.bf16.mxu0 0
        %2859 = vmatpush1.bf16.msra.mxu0 0
        %2860 = vmatprep.subr.bf16.mxu0 0
        %2861 = vmatpush1.bf16.msra.mxu0 0
        %2862 = vmatprep.subr.bf16.mxu0 0
        %2863 = vmatpush1.bf16.msra.mxu0 0
        %2864 = vmatprep.subr.bf16.mxu0 0
        %2865 = vmatpush1.bf16.msra.mxu0 0
        %2866 = vmatprep.mubr.bf16.mxu0 0
        %2867 = vmatmul.mubr.bf16.gmra.mrb[0].mxu0 %v2749
        %v2868 = vpop.f32.mrb[0].mxu0
        %v2869 = vadd.f32 0.0, %v2868
        %v2870 = vpop.f32.mrb[0].mxu0
        %v2871 = vadd.f32 0.0, %v2870
        %v2872 = vpop.f32.mrb[0].mxu0
        %v2873 = vadd.f32 0.0, %v2872
        %v2874 = vpop.f32.mrb[0].mxu0
        %v2875 = vadd.f32 0.0, %v2874
        %2876 = vmatprep.mubr.bf16.mxu0 0
        %2877 = vmatmul.mubr.bf16.gmra.mrb[0].mxu0 %v2751
        %v2878 = vpop.f32.mrb[0].mxu0
        %v2879 = vadd.f32 0.0, %v2878
        %v2880 = vpop.f32.mrb[0].mxu0
        %v2881 = vadd.f32 0.0, %v2880
        %v2882 = vpop.f32.mrb[0].mxu0
        %v2883 = vadd.f32 0.0, %v2882
        %v2884 = vpop.f32.mrb[0].mxu0
        %v2885 = vadd.f32 0.0, %v2884
        %2886 = vdwg.mxu0
        %v2888 = vunpack.c.l.b16 %v2695
        %v2889 = vpack.c.b16 %v2740, %v2888
        %v2891 = vshrl.u32 %v2889, 16
        %v2893 = vrot.slane %v2891, 2
        %v2894 = vshll.u32 %v2889, 16
        %v2896 = vrot.slane %v2894, 3
        %v2897 = vor.u32 %v2893, %v2896
        %v2899 = vshrl.u32 %v2745, 16
        %v2901 = vrot.slane %v2899, 2
        %v2902 = vshll.u32 %v2745, 16
        %v2904 = vrot.slane %v2902, 3
        %v2905 = vor.u32 %v2901, %v2904
        %v2906 = vsel %vm1291, %v2897, %v2905
        %v2908 = vshrl.u32 %v2746, 16
        %v2910 = vrot.slane %v2908, 2
        %v2911 = vshll.u32 %v2746, 16
        %v2913 = vrot.slane %v2911, 3
        %v2914 = vor.u32 %v2910, %v2913
        %v2915 = vsel %vm1291, %v2905, %v2914
        %v2934 = vunpack.c.l.b16 %v2700
        %v2935 = vunpack.c.h.b16 %v2700
        %v2936 = vunpack.c.l.b16 %v2701
        %v2937 = vunpack.c.h.b16 %v2701
        %v2938 = vunpack.c.l.b16 %v2702
        %v2939 = vunpack.c.h.b16 %v2702
        %v2940 = vunpack.c.l.b16 %v2703
        %v2941 = vunpack.c.h.b16 %v2703
        %v2942 = vunpack.c.l.b16 %v2704
        %v2943 = vunpack.c.h.b16 %v2704
        %v2944 = vunpack.c.l.b16 %v2705
        %v2945 = vunpack.c.h.b16 %v2705
        %v2946 = vunpack.c.l.b16 %v2706
        %v2947 = vunpack.c.h.b16 %v2706
        %v2948 = vunpack.c.l.b16 %v2707
        %v2949 = vunpack.c.h.b16 %v2707
        %v2950 = vunpack.c.l.b16 %v2708
        %v2951 = vunpack.c.h.b16 %v2708
        %v2952 = vunpack.c.l.b16 %v2709
        %v2953 = vunpack.c.h.b16 %v2709
        %v2954 = vunpack.c.l.b16 %v2710
        %v2955 = vunpack.c.h.b16 %v2710
        %v2956 = vunpack.c.l.b16 %v2711
        %v2957 = vunpack.c.h.b16 %v2711
        %v2958 = vunpack.c.l.b16 %v2712
        %v2959 = vunpack.c.h.b16 %v2712
        %v2960 = vunpack.c.l.b16 %v2713
        %v2961 = vunpack.c.h.b16 %v2713
        %v2962 = vunpack.c.l.b16 %v2714
        %v2963 = vunpack.c.h.b16 %v2714
        %v2964 = vunpack.c.l.b16 %v2715
        %v2965 = vunpack.c.h.b16 %v2715
        %v2966 = vpack.c.b16 %v2936, %v2934
        %v2967 = vpack.c.b16 %v2937, %v2935
        %v2968 = vpack.c.b16 %v2940, %v2938
        %v2969 = vpack.c.b16 %v2941, %v2939
        %v2970 = vpack.c.b16 %v2944, %v2942
        %v2971 = vpack.c.b16 %v2945, %v2943
        %v2972 = vpack.c.b16 %v2948, %v2946
        %v2973 = vpack.c.b16 %v2949, %v2947
        %v2974 = vpack.c.b16 %v2952, %v2950
        %v2975 = vpack.c.b16 %v2953, %v2951
        %v2976 = vpack.c.b16 %v2956, %v2954
        %v2977 = vpack.c.b16 %v2957, %v2955
        %v2978 = vpack.c.b16 %v2960, %v2958
        %v2979 = vpack.c.b16 %v2961, %v2959
        %v2980 = vpack.c.b16 %v2964, %v2962
        %v2981 = vpack.c.b16 %v2965, %v2963
        %2998 = vmatprep.subr.bf16.mxu0 %v2967
        %2999 = vmatpush1.bf16.msra.mxu0 %v2966
        %3000 = vmatprep.subr.bf16.mxu0 %v2969
        %3001 = vmatpush1.bf16.msra.mxu0 %v2968
        %3002 = vmatprep.subr.bf16.mxu0 %v2971
        %3003 = vmatpush1.bf16.msra.mxu0 %v2970
        %3004 = vmatprep.subr.bf16.mxu0 %v2973
        %3005 = vmatpush1.bf16.msra.mxu0 %v2972
        %3006 = vmatprep.subr.bf16.mxu0 %v2975
        %3007 = vmatpush1.bf16.msra.mxu0 %v2974
        %3008 = vmatprep.subr.bf16.mxu0 %v2977
        %3009 = vmatpush1.bf16.msra.mxu0 %v2976
        %3010 = vmatprep.subr.bf16.mxu0 %v2979
        %3011 = vmatpush1.bf16.msra.mxu0 %v2978
        %3012 = vmatprep.subr.bf16.mxu0 %v2981
        %3013 = vmatpush1.bf16.msra.mxu0 %v2980
        %3014 = vmatprep.subr.bf16.mxu0 0
        %3015 = vmatpush1.bf16.msra.mxu0 0
        %3016 = vmatprep.subr.bf16.mxu0 0
        %3017 = vmatpush1.bf16.msra.mxu0 0
        %3018 = vmatprep.subr.bf16.mxu0 0
        %3019 = vmatpush1.bf16.msra.mxu0 0
        %3020 = vmatprep.subr.bf16.mxu0 0
        %3021 = vmatpush1.bf16.msra.mxu0 0
        %3022 = vmatprep.subr.bf16.mxu0 0
        %3023 = vmatpush1.bf16.msra.mxu0 0
        %3024 = vmatprep.subr.bf16.mxu0 0
        %3025 = vmatpush1.bf16.msra.mxu0 0
        %3026 = vmatprep.subr.bf16.mxu0 0
        %3027 = vmatpush1.bf16.msra.mxu0 0
        %3028 = vmatprep.subr.bf16.mxu0 0
        %3029 = vmatpush1.bf16.msra.mxu0 0
        %3030 = vmatprep.mubr.bf16.mxu0 0
        %3031 = vmatmul.mubr.bf16.gmra.mrb[0].mxu0 %v2906
        %v3032 = vpop.f32.mrb[0].mxu0
        %v3033 = vadd.f32 %v2869, %v3032
        %v3034 = vpop.f32.mrb[0].mxu0
        %v3035 = vadd.f32 %v2871, %v3034
        %v3036 = vpop.f32.mrb[0].mxu0
        %v3037 = vadd.f32 %v2873, %v3036
        %v3038 = vpop.f32.mrb[0].mxu0
        %v3039 = vadd.f32 %v2875, %v3038
        %3040 = vmatprep.mubr.bf16.mxu0 0
        %3041 = vmatmul.mubr.bf16.gmra.mrb[0].mxu0 %v2915
        %v3042 = vpop.f32.mrb[0].mxu0
        %v3043 = vadd.f32 %v2879, %v3042
        %v3044 = vpop.f32.mrb[0].mxu0
        %v3045 = vadd.f32 %v2881, %v3044
        %v3046 = vpop.f32.mrb[0].mxu0
        %v3047 = vadd.f32 %v2883, %v3046
        %v3048 = vpop.f32.mrb[0].mxu0
        %v3049 = vadd.f32 %v2885, %v3048
        %3050 = vdwg.mxu0
        %v3051 = vld [vmem:[#allocation3 + $0x10] sm:$0xf]
        %s3052 = scalar_lea.vmem %s7, 256
        %v3053 = vld [vmem:[%s3052] sm:$0xff]
        %v3054 = vld [vmem:[%s3052 + $0x8] sm:$0xff]
        %v3055 = vld [vmem:[%s3052 + $0x10] sm:$0xff]
        %v3056 = vld [vmem:[%s3052 + $0x18] sm:$0xff]
        %v3057 = vld [vmem:[%s3052 + $0x20] sm:$0xff]
        %v3058 = vld [vmem:[%s3052 + $0x28] sm:$0xff]
        %v3059 = vld [vmem:[%s3052 + $0x30] sm:$0xff]
        %v3060 = vld [vmem:[%s3052 + $0x38] sm:$0xff]
        %v3061 = vld [vmem:[%s3052 + $0x40] sm:$0xff]
        %v3062 = vld [vmem:[%s3052 + $0x48] sm:$0xff]
        %v3063 = vld [vmem:[%s3052 + $0x50] sm:$0xff]
        %v3064 = vld [vmem:[%s3052 + $0x58] sm:$0xff]
        %v3065 = vld [vmem:[%s3052 + $0x60] sm:$0xff]
        %v3066 = vld [vmem:[%s3052 + $0x68] sm:$0xff]
        %v3067 = vld [vmem:[%s3052 + $0x70] sm:$0xff]
        %v3068 = vld [vmem:[%s3052 + $0x78] sm:$0xff]
        %v3070 = vunpack.c.l.b16 %v3051
        %v3071 = vpack.c.b16 %v3070, %v3070
        %v3073 = vshrl.u32 %v2744, 16
        %v3075 = vrot.slane %v3073, 3
        %v3076 = vshll.u32 %v2744, 16
        %v3078 = vrot.slane %v3076, 4
        %v3079 = vor.u32 %v3075, %v3078
        %v3080 = vrot.slane %v2899, 3
        %v3081 = vrot.slane %v2902, 4
        %v3082 = vor.u32 %v3080, %v3081
        %v3083 = vsel %vm601, %v3079, %v3082
        %v3085 = vshrl.u32 %v3071, 16
        %v3087 = vrot.slane %v3085, 3
        %v3088 = vshll.u32 %v3071, 16
        %v3090 = vrot.slane %v3088, 4
        %v3091 = vor.u32 %v3087, %v3090
        %v3092 = vsel %vm601, %v3082, %v3091
        %v3111 = vunpack.c.l.b16 %v3053
        %v3112 = vunpack.c.h.b16 %v3053
        %v3113 = vunpack.c.l.b16 %v3054
        %v3114 = vunpack.c.h.b16 %v3054
        %v3115 = vunpack.c.l.b16 %v3055
        %v3116 = vunpack.c.h.b16 %v3055
        %v3117 = vunpack.c.l.b16 %v3056
        %v3118 = vunpack.c.h.b16 %v3056
        %v3119 = vunpack.c.l.b16 %v3057
        %v3120 = vunpack.c.h.b16 %v3057
        %v3121 = vunpack.c.l.b16 %v3058
        %v3122 = vunpack.c.h.b16 %v3058
        %v3123 = vunpack.c.l.b16 %v3059
        %v3124 = vunpack.c.h.b16 %v3059
        %v3125 = vunpack.c.l.b16 %v3060
        %v3126 = vunpack.c.h.b16 %v3060
        %v3127 = vunpack.c.l.b16 %v3061
        %v3128 = vunpack.c.h.b16 %v3061
        %v3129 = vunpack.c.l.b16 %v3062
        %v3130 = vunpack.c.h.b16 %v3062
        %v3131 = vunpack.c.l.b16 %v3063
        %v3132 = vunpack.c.h.b16 %v3063
        %v3133 = vunpack.c.l.b16 %v3064
        %v3134 = vunpack.c.h.b16 %v3064
        %v3135 = vunpack.c.l.b16 %v3065
        %v3136 = vunpack.c.h.b16 %v3065
        %v3137 = vunpack.c.l.b16 %v3066
        %v3138 = vunpack.c.h.b16 %v3066
        %v3139 = vunpack.c.l.b16 %v3067
        %v3140 = vunpack.c.h.b16 %v3067
        %v3141 = vunpack.c.l.b16 %v3068
        %v3142 = vunpack.c.h.b16 %v3068
        %v3143 = vpack.c.b16 %v3113, %v3111
        %v3144 = vpack.c.b16 %v3114, %v3112
        %v3145 = vpack.c.b16 %v3117, %v3115
        %v3146 = vpack.c.b16 %v3118, %v3116
        %v3147 = vpack.c.b16 %v3121, %v3119
        %v3148 = vpack.c.b16 %v3122, %v3120
        %v3149 = vpack.c.b16 %v3125, %v3123
        %v3150 = vpack.c.b16 %v3126, %v3124
        %v3151 = vpack.c.b16 %v3129, %v3127
        %v3152 = vpack.c.b16 %v3130, %v3128
        %v3153 = vpack.c.b16 %v3133, %v3131
        %v3154 = vpack.c.b16 %v3134, %v3132
        %v3155 = vpack.c.b16 %v3137, %v3135
        %v3156 = vpack.c.b16 %v3138, %v3136
        %v3157 = vpack.c.b16 %v3141, %v3139
        %v3158 = vpack.c.b16 %v3142, %v3140
        %3175 = vmatprep.subr.bf16.mxu0 %v3144
        %3176 = vmatpush1.bf16.msra.mxu0 %v3143
        %3177 = vmatprep.subr.bf16.mxu0 %v3146
        %3178 = vmatpush1.bf16.msra.mxu0 %v3145
        %3179 = vmatprep.subr.bf16.mxu0 %v3148
        %3180 = vmatpush1.bf16.msra.mxu0 %v3147
        %3181 = vmatprep.subr.bf16.mxu0 %v3150
        %3182 = vmatpush1.bf16.msra.mxu0 %v3149
        %3183 = vmatprep.subr.bf16.mxu0 %v3152
        %3184 = vmatpush1.bf16.msra.mxu0 %v3151
        %3185 = vmatprep.subr.bf16.mxu0 %v3154
        %3186 = vmatpush1.bf16.msra.mxu0 %v3153
        %3187 = vmatprep.subr.bf16.mxu0 %v3156
        %3188 = vmatpush1.bf16.msra.mxu0 %v3155
        %3189 = vmatprep.subr.bf16.mxu0 %v3158
        %3190 = vmatpush1.bf16.msra.mxu0 %v3157
        %3191 = vmatprep.subr.bf16.mxu0 0
        %3192 = vmatpush1.bf16.msra.mxu0 0
        %3193 = vmatprep.subr.bf16.mxu0 0
        %3194 = vmatpush1.bf16.msra.mxu0 0
        %3195 = vmatprep.subr.bf16.mxu0 0
        %3196 = vmatpush1.bf16.msra.mxu0 0
        %3197 = vmatprep.subr.bf16.mxu0 0
        %3198 = vmatpush1.bf16.msra.mxu0 0
        %3199 = vmatprep.subr.bf16.mxu0 0
        %3200 = vmatpush1.bf16.msra.mxu0 0
        %3201 = vmatprep.subr.bf16.mxu0 0
        %3202 = vmatpush1.bf16.msra.mxu0 0
        %3203 = vmatprep.subr.bf16.mxu0 0
        %3204 = vmatpush1.bf16.msra.mxu0 0
        %3205 = vmatprep.subr.bf16.mxu0 0
        %3206 = vmatpush1.bf16.msra.mxu0 0
        %3207 = vmatprep.mubr.bf16.mxu0 0
        %3208 = vmatmul.mubr.bf16.gmra.mrb[0].mxu0 %v3083
        %v3209 = vpop.f32.mrb[0].mxu0
        %v3210 = vadd.f32 0.0, %v3209
        %v3211 = vpop.f32.mrb[0].mxu0
        %v3212 = vadd.f32 0.0, %v3211
        %v3213 = vpop.f32.mrb[0].mxu0
        %v3214 = vadd.f32 0.0, %v3213
        %v3215 = vpop.f32.mrb[0].mxu0
        %v3216 = vadd.f32 0.0, %v3215
        %3217 = vmatprep.mubr.bf16.mxu0 0
        %3218 = vmatmul.mubr.bf16.gmra.mrb[0].mxu0 %v3092
        %v3219 = vpop.f32.mrb[0].mxu0
        %v3220 = vadd.f32 0.0, %v3219
        %v3221 = vpop.f32.mrb[0].mxu0
        %v3222 = vadd.f32 0.0, %v3221
        %v3223 = vpop.f32.mrb[0].mxu0
        %v3224 = vadd.f32 0.0, %v3223
        %v3225 = vpop.f32.mrb[0].mxu0
        %v3226 = vadd.f32 0.0, %v3225
        %3227 = vdwg.mxu0
        %v3228 = vadd.f32 %v3033, %v3210
        %v3229 = vadd.f32 %v3035, %v3212
        %v3230 = vadd.f32 %v3037, %v3214
        %v3231 = vadd.f32 %v3039, %v3216
        %v3232 = vadd.f32 %v3043, %v3220
        %v3233 = vadd.f32 %v3045, %v3222
        %v3234 = vadd.f32 %v3047, %v3224
        %v3235 = vadd.f32 %v3049, %v3226
        %s3236 = scalar_lea.vmem %s7, 384
        %v3237 = vld [vmem:[%s3236] sm:$0xff]
        %v3238 = vld [vmem:[%s3236 + $0x8] sm:$0xff]
        %v3239 = vld [vmem:[%s3236 + $0x10] sm:$0xff]
        %v3240 = vld [vmem:[%s3236 + $0x18] sm:$0xff]
        %v3241 = vld [vmem:[%s3236 + $0x20] sm:$0xff]
        %v3242 = vld [vmem:[%s3236 + $0x28] sm:$0xff]
        %v3243 = vld [vmem:[%s3236 + $0x30] sm:$0xff]
        %v3244 = vld [vmem:[%s3236 + $0x38] sm:$0xff]
        %v3245 = vld [vmem:[%s3236 + $0x40] sm:$0xff]
        %v3246 = vld [vmem:[%s3236 + $0x48] sm:$0xff]
        %v3247 = vld [vmem:[%s3236 + $0x50] sm:$0xff]
        %v3248 = vld [vmem:[%s3236 + $0x58] sm:$0xff]
        %v3249 = vld [vmem:[%s3236 + $0x60] sm:$0xff]
        %v3250 = vld [vmem:[%s3236 + $0x68] sm:$0xff]
        %v3251 = vld [vmem:[%s3236 + $0x70] sm:$0xff]
        %v3252 = vld [vmem:[%s3236 + $0x78] sm:$0xff]
        %v3253 = vpack.c.b16 %v2741, %v2740
        %v3254 = vpack.c.b16 %v3070, %v2742
        %v3273 = vunpack.c.l.b16 %v3237
        %v3274 = vunpack.c.h.b16 %v3237
        %v3275 = vunpack.c.l.b16 %v3238
        %v3276 = vunpack.c.h.b16 %v3238
        %v3277 = vunpack.c.l.b16 %v3239
        %v3278 = vunpack.c.h.b16 %v3239
        %v3279 = vunpack.c.l.b16 %v3240
        %v3280 = vunpack.c.h.b16 %v3240
        %v3281 = vunpack.c.l.b16 %v3241
        %v3282 = vunpack.c.h.b16 %v3241
        %v3283 = vunpack.c.l.b16 %v3242
        %v3284 = vunpack.c.h.b16 %v3242
        %v3285 = vunpack.c.l.b16 %v3243
        %v3286 = vunpack.c.h.b16 %v3243
        %v3287 = vunpack.c.l.b16 %v3244
        %v3288 = vunpack.c.h.b16 %v3244
        %v3289 = vunpack.c.l.b16 %v3245
        %v3290 = vunpack.c.h.b16 %v3245
        %v3291 = vunpack.c.l.b16 %v3246
        %v3292 = vunpack.c.h.b16 %v3246
        %v3293 = vunpack.c.l.b16 %v3247
        %v3294 = vunpack.c.h.b16 %v3247
        %v3295 = vunpack.c.l.b16 %v3248
        %v3296 = vunpack.c.h.b16 %v3248
        %v3297 = vunpack.c.l.b16 %v3249
        %v3298 = vunpack.c.h.b16 %v3249
        %v3299 = vunpack.c.l.b16 %v3250
        %v3300 = vunpack.c.h.b16 %v3250
        %v3301 = vunpack.c.l.b16 %v3251
        %v3302 = vunpack.c.h.b16 %v3251
        %v3303 = vunpack.c.l.b16 %v3252
        %v3304 = vunpack.c.h.b16 %v3252
        %v3305 = vpack.c.b16 %v3275, %v3273
        %v3306 = vpack.c.b16 %v3276, %v3274
        %v3307 = vpack.c.b16 %v3279, %v3277
        %v3308 = vpack.c.b16 %v3280, %v3278
        %v3309 = vpack.c.b16 %v3283, %v3281
        %v3310 = vpack.c.b16 %v3284, %v3282
        %v3311 = vpack.c.b16 %v3287, %v3285
        %v3312 = vpack.c.b16 %v3288, %v3286
        %v3313 = vpack.c.b16 %v3291, %v3289
        %v3314 = vpack.c.b16 %v3292, %v3290
        %v3315 = vpack.c.b16 %v3295, %v3293
        %v3316 = vpack.c.b16 %v3296, %v3294
        %v3317 = vpack.c.b16 %v3299, %v3297
        %v3318 = vpack.c.b16 %v3300, %v3298
        %v3319 = vpack.c.b16 %v3303, %v3301
        %v3320 = vpack.c.b16 %v3304, %v3302
        %3337 = vmatprep.subr.bf16.mxu0 %v3306
        %3338 = vmatpush1.bf16.msra.mxu0 %v3305
        %3339 = vmatprep.subr.bf16.mxu0 %v3308
        %3340 = vmatpush1.bf16.msra.mxu0 %v3307
        %3341 = vmatprep.subr.bf16.mxu0 %v3310
        %3342 = vmatpush1.bf16.msra.mxu0 %v3309
        %3343 = vmatprep.subr.bf16.mxu0 %v3312
        %3344 = vmatpush1.bf16.msra.mxu0 %v3311
        %3345 = vmatprep.subr.bf16.mxu0 %v3314
        %3346 = vmatpush1.bf16.msra.mxu0 %v3313
        %3347 = vmatprep.subr.bf16.mxu0 %v3316
        %3348 = vmatpush1.bf16.msra.mxu0 %v3315
        %3349 = vmatprep.subr.bf16.mxu0 %v3318
        %3350 = vmatpush1.bf16.msra.mxu0 %v3317
        %3351 = vmatprep.subr.bf16.mxu0 %v3320
        %3352 = vmatpush1.bf16.msra.mxu0 %v3319
        %3353 = vmatprep.subr.bf16.mxu0 0
        %3354 = vmatpush1.bf16.msra.mxu0 0
        %3355 = vmatprep.subr.bf16.mxu0 0
        %3356 = vmatpush1.bf16.msra.mxu0 0
        %3357 = vmatprep.subr.bf16.mxu0 0
        %3358 = vmatpush1.bf16.msra.mxu0 0
        %3359 = vmatprep.subr.bf16.mxu0 0
        %3360 = vmatpush1.bf16.msra.mxu0 0
        %3361 = vmatprep.subr.bf16.mxu0 0
        %3362 = vmatpush1.bf16.msra.mxu0 0
        %3363 = vmatprep.subr.bf16.mxu0 0
        %3364 = vmatpush1.bf16.msra.mxu0 0
        %3365 = vmatprep.subr.bf16.mxu0 0
        %3366 = vmatpush1.bf16.msra.mxu0 0
        %3367 = vmatprep.subr.bf16.mxu0 0
        %3368 = vmatpush1.bf16.msra.mxu0 0
        %3369 = vmatprep.mubr.bf16.mxu0 0
        %3370 = vmatmul.mubr.bf16.gmra.mrb[0].mxu0 %v3253
        %v3371 = vpop.f32.mrb[0].mxu0
        %v3372 = vadd.f32 0.0, %v3371
        %v3373 = vpop.f32.mrb[0].mxu0
        %v3374 = vadd.f32 0.0, %v3373
        %v3375 = vpop.f32.mrb[0].mxu0
        %v3376 = vadd.f32 0.0, %v3375
        %v3377 = vpop.f32.mrb[0].mxu0
        %v3378 = vadd.f32 0.0, %v3377
        %3379 = vmatprep.mubr.bf16.mxu0 0
        %3380 = vmatmul.mubr.bf16.gmra.mrb[0].mxu0 %v3254
        %v3381 = vpop.f32.mrb[0].mxu0
        %v3382 = vadd.f32 0.0, %v3381
        %v3383 = vpop.f32.mrb[0].mxu0
        %v3384 = vadd.f32 0.0, %v3383
        %v3385 = vpop.f32.mrb[0].mxu0
        %v3386 = vadd.f32 0.0, %v3385
        %v3387 = vpop.f32.mrb[0].mxu0
        %v3388 = vadd.f32 0.0, %v3387
        %3389 = vdwg.mxu0
        %v3390 = vadd.f32 %v3228, %v3372
        %v3391 = vadd.f32 %v3229, %v3374
        %v3392 = vadd.f32 %v3230, %v3376
        %v3393 = vadd.f32 %v3231, %v3378
        %v3394 = vadd.f32 %v3232, %v3382
        %v3395 = vadd.f32 %v3233, %v3384
        %v3396 = vadd.f32 %v3234, %v3386
        %v3397 = vadd.f32 %v3235, %v3388
        %v3398 = vld [vmem:[#allocation3 + $0x4] sm:$0xf]
        %v3399 = vld [vmem:[#allocation3 + $0x8] sm:$0xf]
        %v3400 = vld [vmem:[#allocation3 + $0xc] sm:$0xf]
        %v3401 = vld [vmem:[#allocation3 + $0x10] sm:$0xf]
        %v3402 = vld [vmem:[#allocation3 + $0x14] sm:$0x1]
        %s3403 = scalar_lea.vmem %s7, 512
        %v3404 = vld [vmem:[%s3403] sm:$0xff]
        %v3405 = vld [vmem:[%s3403 + $0x8] sm:$0xff]
        %v3406 = vld [vmem:[%s3403 + $0x10] sm:$0xff]
        %v3407 = vld [vmem:[%s3403 + $0x18] sm:$0xff]
        %v3408 = vld [vmem:[%s3403 + $0x20] sm:$0xff]
        %v3409 = vld [vmem:[%s3403 + $0x28] sm:$0xff]
        %v3410 = vld [vmem:[%s3403 + $0x30] sm:$0xff]
        %v3411 = vld [vmem:[%s3403 + $0x38] sm:$0xff]
        %v3412 = vld [vmem:[%s3403 + $0x40] sm:$0xff]
        %v3413 = vld [vmem:[%s3403 + $0x48] sm:$0xff]
        %v3414 = vld [vmem:[%s3403 + $0x50] sm:$0xff]
        %v3415 = vld [vmem:[%s3403 + $0x58] sm:$0xff]
        %v3416 = vld [vmem:[%s3403 + $0x60] sm:$0xff]
        %v3417 = vld [vmem:[%s3403 + $0x68] sm:$0xff]
        %v3418 = vld [vmem:[%s3403 + $0x70] sm:$0xff]
        %v3419 = vld [vmem:[%s3403 + $0x78] sm:$0xff]
        %v3425 = vunpack.c.l.b16 %v3398
        %v3426 = vunpack.c.l.b16 %v3399
        %v3427 = vunpack.c.l.b16 %v3400
        %v3428 = vunpack.c.l.b16 %v3401
        %v3429 = vunpack.c.l.b16 %v3402
        %v3430 = vpack.c.b16 %v3426, %v3425
        %v3431 = vpack.c.b16 %v3428, %v3427
        %v3432 = vpack.c.b16 %v3429, %v3429
        %v3434 = vshrl.u32 %v3430, 16
        %v3436 = vshll.u32 %v3430, 16
        %v3438 = vrot.slane %v3436, 1
        %v3439 = vor.u32 %v3434, %v3438
        %v3441 = vshll.u32 %v3431, 16
        %v3443 = vrot.slane %v3441, 1
        %v3444 = vsel %vm1848, %v3439, %v3443
        %v3445 = vshrl.u32 %v3431, 16
        %v3447 = vor.u32 %v3445, %v3443
        %v3449 = vshll.u32 %v3432, 16
        %v3451 = vrot.slane %v3449, 1
        %v3452 = vsel %vm1848, %v3447, %v3451
        %v3471 = vunpack.c.l.b16 %v3404
        %v3472 = vunpack.c.h.b16 %v3404
        %v3473 = vunpack.c.l.b16 %v3405
        %v3474 = vunpack.c.h.b16 %v3405
        %v3475 = vunpack.c.l.b16 %v3406
        %v3476 = vunpack.c.h.b16 %v3406
        %v3477 = vunpack.c.l.b16 %v3407
        %v3478 = vunpack.c.h.b16 %v3407
        %v3479 = vunpack.c.l.b16 %v3408
        %v3480 = vunpack.c.h.b16 %v3408
        %v3481 = vunpack.c.l.b16 %v3409
        %v3482 = vunpack.c.h.b16 %v3409
        %v3483 = vunpack.c.l.b16 %v3410
        %v3484 = vunpack.c.h.b16 %v3410
        %v3485 = vunpack.c.l.b16 %v3411
        %v3486 = vunpack.c.h.b16 %v3411
        %v3487 = vunpack.c.l.b16 %v3412
        %v3488 = vunpack.c.h.b16 %v3412
        %v3489 = vunpack.c.l.b16 %v3413
        %v3490 = vunpack.c.h.b16 %v3413
        %v3491 = vunpack.c.l.b16 %v3414
        %v3492 = vunpack.c.h.b16 %v3414
        %v3493 = vunpack.c.l.b16 %v3415
        %v3494 = vunpack.c.h.b16 %v3415
        %v3495 = vunpack.c.l.b16 %v3416
        %v3496 = vunpack.c.h.b16 %v3416
        %v3497 = vunpack.c.l.b16 %v3417
        %v3498 = vunpack.c.h.b16 %v3417
        %v3499 = vunpack.c.l.b16 %v3418
        %v3500 = vunpack.c.h.b16 %v3418
        %v3501 = vunpack.c.l.b16 %v3419
        %v3502 = vunpack.c.h.b16 %v3419
        %v3503 = vpack.c.b16 %v3473, %v3471
        %v3504 = vpack.c.b16 %v3474, %v3472
        %v3505 = vpack.c.b16 %v3477, %v3475
        %v3506 = vpack.c.b16 %v3478, %v3476
        %v3507 = vpack.c.b16 %v3481, %v3479
        %v3508 = vpack.c.b16 %v3482, %v3480
        %v3509 = vpack.c.b16 %v3485, %v3483
        %v3510 = vpack.c.b16 %v3486, %v3484
        %v3511 = vpack.c.b16 %v3489, %v3487
        %v3512 = vpack.c.b16 %v3490, %v3488
        %v3513 = vpack.c.b16 %v3493, %v3491
        %v3514 = vpack.c.b16 %v3494, %v3492
        %v3515 = vpack.c.b16 %v3497, %v3495
        %v3516 = vpack.c.b16 %v3498, %v3496
        %v3517 = vpack.c.b16 %v3501, %v3499
        %v3518 = vpack.c.b16 %v3502, %v3500
        %3535 = vmatprep.subr.bf16.mxu0 %v3504
        %3536 = vmatpush1.bf16.msra.mxu0 %v3503
        %3537 = vmatprep.subr.bf16.mxu0 %v3506
        %3538 = vmatpush1.bf16.msra.mxu0 %v3505
        %3539 = vmatprep.subr.bf16.mxu0 %v3508
        %3540 = vmatpush1.bf16.msra.mxu0 %v3507
        %3541 = vmatprep.subr.bf16.mxu0 %v3510
        %3542 = vmatpush1.bf16.msra.mxu0 %v3509
        %3543 = vmatprep.subr.bf16.mxu0 %v3512
        %3544 = vmatpush1.bf16.msra.mxu0 %v3511
        %3545 = vmatprep.subr.bf16.mxu0 %v3514
        %3546 = vmatpush1.bf16.msra.mxu0 %v3513
        %3547 = vmatprep.subr.bf16.mxu0 %v3516
        %3548 = vmatpush1.bf16.msra.mxu0 %v3515
        %3549 = vmatprep.subr.bf16.mxu0 %v3518
        %3550 = vmatpush1.bf16.msra.mxu0 %v3517
        %3551 = vmatprep.subr.bf16.mxu0 0
        %3552 = vmatpush1.bf16.msra.mxu0 0
        %3553 = vmatprep.subr.bf16.mxu0 0
        %3554 = vmatpush1.bf16.msra.mxu0 0
        %3555 = vmatprep.subr.bf16.mxu0 0
        %3556 = vmatpush1.bf16.msra.mxu0 0
        %3557 = vmatprep.subr.bf16.mxu0 0
        %3558 = vmatpush1.bf16.msra.mxu0 0
        %3559 = vmatprep.subr.bf16.mxu0 0
        %3560 = vmatpush1.bf16.msra.mxu0 0
        %3561 = vmatprep.subr.bf16.mxu0 0
        %3562 = vmatpush1.bf16.msra.mxu0 0
        %3563 = vmatprep.subr.bf16.mxu0 0
        %3564 = vmatpush1.bf16.msra.mxu0 0
        %3565 = vmatprep.subr.bf16.mxu0 0
        %3566 = vmatpush1.bf16.msra.mxu0 0
        %3567 = vmatprep.mubr.bf16.mxu0 0
        %3568 = vmatmul.mubr.bf16.gmra.mrb[0].mxu0 %v3444
        %v3569 = vpop.f32.mrb[0].mxu0
        %v3570 = vadd.f32 0.0, %v3569
        %v3571 = vpop.f32.mrb[0].mxu0
        %v3572 = vadd.f32 0.0, %v3571
        %v3573 = vpop.f32.mrb[0].mxu0
        %v3574 = vadd.f32 0.0, %v3573
        %v3575 = vpop.f32.mrb[0].mxu0
        %v3576 = vadd.f32 0.0, %v3575
        %3577 = vmatprep.mubr.bf16.mxu0 0
        %3578 = vmatmul.mubr.bf16.gmra.mrb[0].mxu0 %v3452
        %v3579 = vpop.f32.mrb[0].mxu0
        %v3580 = vadd.f32 0.0, %v3579
        %v3581 = vpop.f32.mrb[0].mxu0
        %v3582 = vadd.f32 0.0, %v3581
        %v3583 = vpop.f32.mrb[0].mxu0
        %v3584 = vadd.f32 0.0, %v3583
        %v3585 = vpop.f32.mrb[0].mxu0
        %v3586 = vadd.f32 0.0, %v3585
        %3587 = vdwg.mxu0
        %v3588 = vadd.f32 %v3390, %v3570
        %v3589 = vadd.f32 %v3391, %v3572
        %v3590 = vadd.f32 %v3392, %v3574
        %v3591 = vadd.f32 %v3393, %v3576
        %v3592 = vadd.f32 %v3394, %v3580
        %v3593 = vadd.f32 %v3395, %v3582
        %v3594 = vadd.f32 %v3396, %v3584
        %v3595 = vadd.f32 %v3397, %v3586
        %v3596 = vld [vmem:[#allocation3 + $0x4] sm:$0xe]
        %s3597 = scalar_lea.vmem %s7, 640
        %v3598 = vld [vmem:[%s3597] sm:$0xff]
        %v3599 = vld [vmem:[%s3597 + $0x8] sm:$0xff]
        %v3600 = vld [vmem:[%s3597 + $0x10] sm:$0xff]
        %v3601 = vld [vmem:[%s3597 + $0x18] sm:$0xff]
        %v3602 = vld [vmem:[%s3597 + $0x20] sm:$0xff]
        %v3603 = vld [vmem:[%s3597 + $0x28] sm:$0xff]
        %v3604 = vld [vmem:[%s3597 + $0x30] sm:$0xff]
        %v3605 = vld [vmem:[%s3597 + $0x38] sm:$0xff]
        %v3606 = vld [vmem:[%s3597 + $0x40] sm:$0xff]
        %v3607 = vld [vmem:[%s3597 + $0x48] sm:$0xff]
        %v3608 = vld [vmem:[%s3597 + $0x50] sm:$0xff]
        %v3609 = vld [vmem:[%s3597 + $0x58] sm:$0xff]
        %v3610 = vld [vmem:[%s3597 + $0x60] sm:$0xff]
        %v3611 = vld [vmem:[%s3597 + $0x68] sm:$0xff]
        %v3612 = vld [vmem:[%s3597 + $0x70] sm:$0xff]
        %v3613 = vld [vmem:[%s3597 + $0x78] sm:$0xff]
        %v3615 = vunpack.c.l.b16 %v3596
        %v3616 = vpack.c.b16 %v3426, %v3615
        %v3617 = vrot.slane %v3616, 1
        %v3618 = vrot.slane %v3431, 1
        %v3619 = vsel %vm1035, %v3617, %v3618
        %v3620 = vrot.slane %v3432, 1
        %v3621 = vsel %vm1035, %v3618, %v3620
        %v3640 = vunpack.c.l.b16 %v3598
        %v3641 = vunpack.c.h.b16 %v3598
        %v3642 = vunpack.c.l.b16 %v3599
        %v3643 = vunpack.c.h.b16 %v3599
        %v3644 = vunpack.c.l.b16 %v3600
        %v3645 = vunpack.c.h.b16 %v3600
        %v3646 = vunpack.c.l.b16 %v3601
        %v3647 = vunpack.c.h.b16 %v3601
        %v3648 = vunpack.c.l.b16 %v3602
        %v3649 = vunpack.c.h.b16 %v3602
        %v3650 = vunpack.c.l.b16 %v3603
        %v3651 = vunpack.c.h.b16 %v3603
        %v3652 = vunpack.c.l.b16 %v3604
        %v3653 = vunpack.c.h.b16 %v3604
        %v3654 = vunpack.c.l.b16 %v3605
        %v3655 = vunpack.c.h.b16 %v3605
        %v3656 = vunpack.c.l.b16 %v3606
        %v3657 = vunpack.c.h.b16 %v3606
        %v3658 = vunpack.c.l.b16 %v3607
        %v3659 = vunpack.c.h.b16 %v3607
        %v3660 = vunpack.c.l.b16 %v3608
        %v3661 = vunpack.c.h.b16 %v3608
        %v3662 = vunpack.c.l.b16 %v3609
        %v3663 = vunpack.c.h.b16 %v3609
        %v3664 = vunpack.c.l.b16 %v3610
        %v3665 = vunpack.c.h.b16 %v3610
        %v3666 = vunpack.c.l.b16 %v3611
        %v3667 = vunpack.c.h.b16 %v3611
        %v3668 = vunpack.c.l.b16 %v3612
        %v3669 = vunpack.c.h.b16 %v3612
        %v3670 = vunpack.c.l.b16 %v3613
        %v3671 = vunpack.c.h.b16 %v3613
        %v3672 = vpack.c.b16 %v3642, %v3640
        %v3673 = vpack.c.b16 %v3643, %v3641
        %v3674 = vpack.c.b16 %v3646, %v3644
        %v3675 = vpack.c.b16 %v3647, %v3645
        %v3676 = vpack.c.b16 %v3650, %v3648
        %v3677 = vpack.c.b16 %v3651, %v3649
        %v3678 = vpack.c.b16 %v3654, %v3652
        %v3679 = vpack.c.b16 %v3655, %v3653
        %v3680 = vpack.c.b16 %v3658, %v3656
        %v3681 = vpack.c.b16 %v3659, %v3657
        %v3682 = vpack.c.b16 %v3662, %v3660
        %v3683 = vpack.c.b16 %v3663, %v3661
        %v3684 = vpack.c.b16 %v3666, %v3664
        %v3685 = vpack.c.b16 %v3667, %v3665
        %v3686 = vpack.c.b16 %v3670, %v3668
        %v3687 = vpack.c.b16 %v3671, %v3669
        %3704 = vmatprep.subr.bf16.mxu0 %v3673
        %3705 = vmatpush1.bf16.msra.mxu0 %v3672
        %3706 = vmatprep.subr.bf16.mxu0 %v3675
        %3707 = vmatpush1.bf16.msra.mxu0 %v3674
        %3708 = vmatprep.subr.bf16.mxu0 %v3677
        %3709 = vmatpush1.bf16.msra.mxu0 %v3676
        %3710 = vmatprep.subr.bf16.mxu0 %v3679
        %3711 = vmatpush1.bf16.msra.mxu0 %v3678
        %3712 = vmatprep.subr.bf16.mxu0 %v3681
        %3713 = vmatpush1.bf16.msra.mxu0 %v3680
        %3714 = vmatprep.subr.bf16.mxu0 %v3683
        %3715 = vmatpush1.bf16.msra.mxu0 %v3682
        %3716 = vmatprep.subr.bf16.mxu0 %v3685
        %3717 = vmatpush1.bf16.msra.mxu0 %v3684
        %3718 = vmatprep.subr.bf16.mxu0 %v3687
        %3719 = vmatpush1.bf16.msra.mxu0 %v3686
        %3720 = vmatprep.subr.bf16.mxu0 0
        %3721 = vmatpush1.bf16.msra.mxu0 0
        %3722 = vmatprep.subr.bf16.mxu0 0
        %3723 = vmatpush1.bf16.msra.mxu0 0
        %3724 = vmatprep.subr.bf16.mxu0 0
        %3725 = vmatpush1.bf16.msra.mxu0 0
        %3726 = vmatprep.subr.bf16.mxu0 0
        %3727 = vmatpush1.bf16.msra.mxu0 0
        %3728 = vmatprep.subr.bf16.mxu0 0
        %3729 = vmatpush1.bf16.msra.mxu0 0
        %3730 = vmatprep.subr.bf16.mxu0 0
        %3731 = vmatpush1.bf16.msra.mxu0 0
        %3732 = vmatprep.subr.bf16.mxu0 0
        %3733 = vmatpush1.bf16.msra.mxu0 0
        %3734 = vmatprep.subr.bf16.mxu0 0
        %3735 = vmatpush1.bf16.msra.mxu0 0
        %3736 = vmatprep.mubr.bf16.mxu0 0
        %3737 = vmatmul.mubr.bf16.gmra.mrb[0].mxu0 %v3619
        %v3738 = vpop.f32.mrb[0].mxu0
        %v3739 = vadd.f32 0.0, %v3738
        %v3740 = vpop.f32.mrb[0].mxu0
        %v3741 = vadd.f32 0.0, %v3740
        %v3742 = vpop.f32.mrb[0].mxu0
        %v3743 = vadd.f32 0.0, %v3742
        %v3744 = vpop.f32.mrb[0].mxu0
        %v3745 = vadd.f32 0.0, %v3744
        %3746 = vmatprep.mubr.bf16.mxu0 0
        %3747 = vmatmul.mubr.bf16.gmra.mrb[0].mxu0 %v3621
        %v3748 = vpop.f32.mrb[0].mxu0
        %v3749 = vadd.f32 0.0, %v3748
        %v3750 = vpop.f32.mrb[0].mxu0
        %v3751 = vadd.f32 0.0, %v3750
        %v3752 = vpop.f32.mrb[0].mxu0
        %v3753 = vadd.f32 0.0, %v3752
        %v3754 = vpop.f32.mrb[0].mxu0
        %v3755 = vadd.f32 0.0, %v3754
        %3756 = vdwg.mxu0
        %v3757 = vadd.f32 %v3588, %v3739
        %v3758 = vadd.f32 %v3589, %v3741
        %v3759 = vadd.f32 %v3590, %v3743
        %v3760 = vadd.f32 %v3591, %v3745
        %v3761 = vadd.f32 %v3592, %v3749
        %v3762 = vadd.f32 %v3593, %v3751
        %v3763 = vadd.f32 %v3594, %v3753
        %v3764 = vadd.f32 %v3595, %v3755
        %v3765 = vld [vmem:[#allocation3 + $0x14] sm:$0x3]
        %s3766 = scalar_lea.vmem %s7, 768
        %v3767 = vld [vmem:[%s3766] sm:$0xff]
        %v3768 = vld [vmem:[%s3766 + $0x8] sm:$0xff]
        %v3769 = vld [vmem:[%s3766 + $0x10] sm:$0xff]
        %v3770 = vld [vmem:[%s3766 + $0x18] sm:$0xff]
        %v3771 = vld [vmem:[%s3766 + $0x20] sm:$0xff]
        %v3772 = vld [vmem:[%s3766 + $0x28] sm:$0xff]
        %v3773 = vld [vmem:[%s3766 + $0x30] sm:$0xff]
        %v3774 = vld [vmem:[%s3766 + $0x38] sm:$0xff]
        %v3775 = vld [vmem:[%s3766 + $0x40] sm:$0xff]
        %v3776 = vld [vmem:[%s3766 + $0x48] sm:$0xff]
        %v3777 = vld [vmem:[%s3766 + $0x50] sm:$0xff]
        %v3778 = vld [vmem:[%s3766 + $0x58] sm:$0xff]
        %v3779 = vld [vmem:[%s3766 + $0x60] sm:$0xff]
        %v3780 = vld [vmem:[%s3766 + $0x68] sm:$0xff]
        %v3781 = vld [vmem:[%s3766 + $0x70] sm:$0xff]
        %v3782 = vld [vmem:[%s3766 + $0x78] sm:$0xff]
        %v3784 = vunpack.c.l.b16 %v3765
        %v3785 = vpack.c.b16 %v3784, %v3784
        %v3787 = vshrl.u32 %v3616, 16
        %v3789 = vrot.slane %v3787, 1
        %v3790 = vshll.u32 %v3616, 16
        %v3792 = vrot.slane %v3790, 2
        %v3793 = vor.u32 %v3789, %v3792
        %v3794 = vrot.slane %v3445, 1
        %v3795 = vrot.slane %v3441, 2
        %v3796 = vor.u32 %v3794, %v3795
        %v3797 = vsel %vm906, %v3793, %v3796
        %v3799 = vshrl.u32 %v3785, 16
        %v3801 = vrot.slane %v3799, 1
        %v3802 = vshll.u32 %v3785, 16
        %v3804 = vrot.slane %v3802, 2
        %v3805 = vor.u32 %v3801, %v3804
        %v3806 = vsel %vm906, %v3796, %v3805
        %v3825 = vunpack.c.l.b16 %v3767
        %v3826 = vunpack.c.h.b16 %v3767
        %v3827 = vunpack.c.l.b16 %v3768
        %v3828 = vunpack.c.h.b16 %v3768
        %v3829 = vunpack.c.l.b16 %v3769
        %v3830 = vunpack.c.h.b16 %v3769
        %v3831 = vunpack.c.l.b16 %v3770
        %v3832 = vunpack.c.h.b16 %v3770
        %v3833 = vunpack.c.l.b16 %v3771
        %v3834 = vunpack.c.h.b16 %v3771
        %v3835 = vunpack.c.l.b16 %v3772
        %v3836 = vunpack.c.h.b16 %v3772
        %v3837 = vunpack.c.l.b16 %v3773
        %v3838 = vunpack.c.h.b16 %v3773
        %v3839 = vunpack.c.l.b16 %v3774
        %v3840 = vunpack.c.h.b16 %v3774
        %v3841 = vunpack.c.l.b16 %v3775
        %v3842 = vunpack.c.h.b16 %v3775
        %v3843 = vunpack.c.l.b16 %v3776
        %v3844 = vunpack.c.h.b16 %v3776
        %v3845 = vunpack.c.l.b16 %v3777
        %v3846 = vunpack.c.h.b16 %v3777
        %v3847 = vunpack.c.l.b16 %v3778
        %v3848 = vunpack.c.h.b16 %v3778
        %v3849 = vunpack.c.l.b16 %v3779
        %v3850 = vunpack.c.h.b16 %v3779
        %v3851 = vunpack.c.l.b16 %v3780
        %v3852 = vunpack.c.h.b16 %v3780
        %v3853 = vunpack.c.l.b16 %v3781
        %v3854 = vunpack.c.h.b16 %v3781
        %v3855 = vunpack.c.l.b16 %v3782
        %v3856 = vunpack.c.h.b16 %v3782
        %v3857 = vpack.c.b16 %v3827, %v3825
        %v3858 = vpack.c.b16 %v3828, %v3826
        %v3859 = vpack.c.b16 %v3831, %v3829
        %v3860 = vpack.c.b16 %v3832, %v3830
        %v3861 = vpack.c.b16 %v3835, %v3833
        %v3862 = vpack.c.b16 %v3836, %v3834
        %v3863 = vpack.c.b16 %v3839, %v3837
        %v3864 = vpack.c.b16 %v3840, %v3838
        %v3865 = vpack.c.b16 %v3843, %v3841
        %v3866 = vpack.c.b16 %v3844, %v3842
        %v3867 = vpack.c.b16 %v3847, %v3845
        %v3868 = vpack.c.b16 %v3848, %v3846
        %v3869 = vpack.c.b16 %v3851, %v3849
        %v3870 = vpack.c.b16 %v3852, %v3850
        %v3871 = vpack.c.b16 %v3855, %v3853
        %v3872 = vpack.c.b16 %v3856, %v3854
        %3889 = vmatprep.subr.bf16.mxu0 %v3858
        %3890 = vmatpush1.bf16.msra.mxu0 %v3857
        %3891 = vmatprep.subr.bf16.mxu0 %v3860
        %3892 = vmatpush1.bf16.msra.mxu0 %v3859
        %3893 = vmatprep.subr.bf16.mxu0 %v3862
        %3894 = vmatpush1.bf16.msra.mxu0 %v3861
        %3895 = vmatprep.subr.bf16.mxu0 %v3864
        %3896 = vmatpush1.bf16.msra.mxu0 %v3863
        %3897 = vmatprep.subr.bf16.mxu0 %v3866
        %3898 = vmatpush1.bf16.msra.mxu0 %v3865
        %3899 = vmatprep.subr.bf16.mxu0 %v3868
        %3900 = vmatpush1.bf16.msra.mxu0 %v3867
        %3901 = vmatprep.subr.bf16.mxu0 %v3870
        %3902 = vmatpush1.bf16.msra.mxu0 %v3869
        %3903 = vmatprep.subr.bf16.mxu0 %v3872
        %3904 = vmatpush1.bf16.msra.mxu0 %v3871
        %3905 = vmatprep.subr.bf16.mxu0 0
        %3906 = vmatpush1.bf16.msra.mxu0 0
        %3907 = vmatprep.subr.bf16.mxu0 0
        %3908 = vmatpush1.bf16.msra.mxu0 0
        %3909 = vmatprep.subr.bf16.mxu0 0
        %3910 = vmatpush1.bf16.msra.mxu0 0
        %3911 = vmatprep.subr.bf16.mxu0 0
        %3912 = vmatpush1.bf16.msra.mxu0 0
        %3913 = vmatprep.subr.bf16.mxu0 0
        %3914 = vmatpush1.bf16.msra.mxu0 0
        %3915 = vmatprep.subr.bf16.mxu0 0
        %3916 = vmatpush1.bf16.msra.mxu0 0
        %3917 = vmatprep.subr.bf16.mxu0 0
        %3918 = vmatpush1.bf16.msra.mxu0 0
        %3919 = vmatprep.subr.bf16.mxu0 0
        %3920 = vmatpush1.bf16.msra.mxu0 0
        %3921 = vmatprep.mubr.bf16.mxu0 0
        %3922 = vmatmul.mubr.bf16.gmra.mrb[0].mxu0 %v3797
        %v3923 = vpop.f32.mrb[0].mxu0
        %v3924 = vadd.f32 0.0, %v3923
        %v3925 = vpop.f32.mrb[0].mxu0
        %v3926 = vadd.f32 0.0, %v3925
        %v3927 = vpop.f32.mrb[0].mxu0
        %v3928 = vadd.f32 0.0, %v3927
        %v3929 = vpop.f32.mrb[0].mxu0
        %v3930 = vadd.f32 0.0, %v3929
        %3931 = vmatprep.mubr.bf16.mxu0 0
        %3932 = vmatmul.mubr.bf16.gmra.mrb[0].mxu0 %v3806
        %v3933 = vpop.f32.mrb[0].mxu0
        %v3934 = vadd.f32 0.0, %v3933
        %v3935 = vpop.f32.mrb[0].mxu0
        %v3936 = vadd.f32 0.0, %v3935
        %v3937 = vpop.f32.mrb[0].mxu0
        %v3938 = vadd.f32 0.0, %v3937
        %v3939 = vpop.f32.mrb[0].mxu0
        %v3940 = vadd.f32 0.0, %v3939
        %3941 = vdwg.mxu0
        %v3942 = vadd.f32 %v3757, %v3924
        %v3943 = vadd.f32 %v3758, %v3926
        %v3944 = vadd.f32 %v3759, %v3928
        %v3945 = vadd.f32 %v3760, %v3930
        %v3946 = vadd.f32 %v3761, %v3934
        %v3947 = vadd.f32 %v3762, %v3936
        %v3948 = vadd.f32 %v3763, %v3938
        %v3949 = vadd.f32 %v3764, %v3940
        %v3950 = vld [vmem:[%s8] sm:$0x3]
        %v3952 = vlaneseq
        %v3953 = vshrl.u32 %v3952, 7
        %v3954 = vsub.s32 0, %v3953
        %v3955 = vrot.slane %v3950, %v3954
        %v3956 = vlaneseq
        %v3957 = vshrl.u32 %v3956, 7
        %v3958 = vsub.s32 1, %v3957
        %v3959 = vrot.slane %v3950, %v3958
        %v3962 = vmul.f32 %v3942, %v3955
        %v3963 = vmul.f32 %v3943, %v3959
        %v3964 = vmul.f32 %v3944, %v3955
        %v3965 = vmul.f32 %v3945, %v3959
        %v3966 = vmul.f32 %v3946, %v3955
        %v3967 = vmul.f32 %v3947, %v3959
        %v3968 = vmul.f32 %v3948, %v3955
        %v3969 = vmul.f32 %v3949, %v3959
        %v3970 = vld [vmem:[%s9] sm:$0x3]
        %v3972 = vlaneseq
        %v3973 = vshrl.u32 %v3972, 7
        %v3974 = vsub.s32 0, %v3973
        %v3975 = vrot.slane %v3970, %v3974
        %v3976 = vlaneseq
        %v3977 = vshrl.u32 %v3976, 7
        %v3978 = vsub.s32 1, %v3977
        %v3979 = vrot.slane %v3970, %v3978
        %v3982 = vadd.f32 %v3962, %v3975
        %v3983 = vadd.f32 %v3963, %v3979
        %v3984 = vadd.f32 %v3964, %v3975
        %v3985 = vadd.f32 %v3965, %v3979
        %v3986 = vadd.f32 %v3966, %v3975
        %v3987 = vadd.f32 %v3967, %v3979
        %v3988 = vadd.f32 %v3968, %v3975
        %v3989 = vadd.f32 %v3969, %v3979
        %v3990 = vmax.f32 %v3982, 0.0
        %v3991 = vmax.f32 %v3983, 0.0
        %v3992 = vmax.f32 %v3984, 0.0
        %v3993 = vmax.f32 %v3985, 0.0
        %v3994 = vmax.f32 %v3986, 0.0
        %v3995 = vmax.f32 %v3987, 0.0
        %v3996 = vmax.f32 %v3988, 0.0
        %v3997 = vmax.f32 %v3989, 0.0
        %v3998 = vpack.c.bf16 %v3992, %v3990
        %v3999 = vpack.c.bf16 %v3993, %v3991
        %v4000 = vpack.c.bf16 %v3996, %v3994
        %v4001 = vpack.c.bf16 %v3997, %v3995
        %v4006 = vunpack.c.l.b16 %v3998
        %v4007 = vunpack.c.l.b16 %v3999
        %v4008 = vunpack.c.h.b16 %v3998
        %v4009 = vunpack.c.h.b16 %v3999
        %v4010 = vunpack.c.l.b16 %v4000
        %v4011 = vunpack.c.l.b16 %v4001
        %v4012 = vunpack.c.h.b16 %v4000
        %v4013 = vunpack.c.h.b16 %v4001
        %v4014 = vpack.c.b16 %v4007, %v4006
        %v4015 = vpack.c.b16 %v4009, %v4008
        %v4016 = vpack.c.b16 %v4011, %v4010
        %v4017 = vpack.c.b16 %v4013, %v4012
        %4022 = vst [vmem:[#allocation4 + $0x8] sm:$0xff] %v4014
        %4023 = vst [vmem:[#allocation4 + $0x10] sm:$0xff] %v4015
        %4024 = vst [vmem:[#allocation4 + $0x18] sm:$0xff] %v4016
        %4025 = vst [vmem:[#allocation4 + $0x20] sm:$0xff] %v4017
        %v4026 = vld [vmem:[#allocation4] sm:$0x88]
        %v4027 = vld [vmem:[#allocation4 + $0x8] sm:$0xff]
        %v4028 = vld [vmem:[#allocation4 + $0x10] sm:$0xff]
        %v4029 = vld [vmem:[#allocation4 + $0x18] sm:$0xff]
        %v4030 = vld [vmem:[#allocation4 + $0x20] sm:$0xff]
        %v4031 = vld [vmem:[%s10] sm:$0xff]
        %v4032 = vld [vmem:[%s10 + $0x8] sm:$0xff]
        %v4033 = vld [vmem:[%s10 + $0x10] sm:$0xff]
        %v4034 = vld [vmem:[%s10 + $0x18] sm:$0xff]
        %v4035 = vld [vmem:[%s10 + $0x20] sm:$0xff]
        %v4036 = vld [vmem:[%s10 + $0x28] sm:$0xff]
        %v4037 = vld [vmem:[%s10 + $0x30] sm:$0xff]
        %v4038 = vld [vmem:[%s10 + $0x38] sm:$0xff]
        %v4039 = vld [vmem:[%s10 + $0x40] sm:$0xff]
        %v4040 = vld [vmem:[%s10 + $0x48] sm:$0xff]
        %v4041 = vld [vmem:[%s10 + $0x50] sm:$0xff]
        %v4042 = vld [vmem:[%s10 + $0x58] sm:$0xff]
        %v4043 = vld [vmem:[%s10 + $0x60] sm:$0xff]
        %v4044 = vld [vmem:[%s10 + $0x68] sm:$0xff]
        %v4045 = vld [vmem:[%s10 + $0x70] sm:$0xff]
        %v4046 = vld [vmem:[%s10 + $0x78] sm:$0xff]
        %v4047 = vld [vmem:[%s10 + $0x80] sm:$0xff]
        %v4048 = vld [vmem:[%s10 + $0x88] sm:$0xff]
        %v4049 = vld [vmem:[%s10 + $0x90] sm:$0xff]
        %v4050 = vld [vmem:[%s10 + $0x98] sm:$0xff]
        %v4051 = vld [vmem:[%s10 + $0xa0] sm:$0xff]
        %v4052 = vld [vmem:[%s10 + $0xa8] sm:$0xff]
        %v4053 = vld [vmem:[%s10 + $0xb0] sm:$0xff]
        %v4054 = vld [vmem:[%s10 + $0xb8] sm:$0xff]
        %v4055 = vld [vmem:[%s10 + $0xc0] sm:$0xff]
        %v4056 = vld [vmem:[%s10 + $0xc8] sm:$0xff]
        %v4057 = vld [vmem:[%s10 + $0xd0] sm:$0xff]
        %v4058 = vld [vmem:[%s10 + $0xd8] sm:$0xff]
        %v4059 = vld [vmem:[%s10 + $0xe0] sm:$0xff]
        %v4060 = vld [vmem:[%s10 + $0xe8] sm:$0xff]
        %v4061 = vld [vmem:[%s10 + $0xf0] sm:$0xff]
        %v4062 = vld [vmem:[%s10 + $0xf8] sm:$0xff]
        %s4063 = scalar_lea.vmem %s10, 256
        %v4064 = vld [vmem:[%s4063] sm:$0xff]
        %v4065 = vld [vmem:[%s4063 + $0x8] sm:$0xff]
        %v4066 = vld [vmem:[%s4063 + $0x10] sm:$0xff]
        %v4067 = vld [vmem:[%s4063 + $0x18] sm:$0xff]
        %v4068 = vld [vmem:[%s4063 + $0x20] sm:$0xff]
        %v4069 = vld [vmem:[%s4063 + $0x28] sm:$0xff]
        %v4070 = vld [vmem:[%s4063 + $0x30] sm:$0xff]
        %v4071 = vld [vmem:[%s4063 + $0x38] sm:$0xff]
        %v4072 = vld [vmem:[%s4063 + $0x40] sm:$0xff]
        %v4073 = vld [vmem:[%s4063 + $0x48] sm:$0xff]
        %v4074 = vld [vmem:[%s4063 + $0x50] sm:$0xff]
        %v4075 = vld [vmem:[%s4063 + $0x58] sm:$0xff]
        %v4076 = vld [vmem:[%s4063 + $0x60] sm:$0xff]
        %v4077 = vld [vmem:[%s4063 + $0x68] sm:$0xff]
        %v4078 = vld [vmem:[%s4063 + $0x70] sm:$0xff]
        %v4079 = vld [vmem:[%s4063 + $0x78] sm:$0xff]
        %v4080 = vld [vmem:[%s4063 + $0x80] sm:$0xff]
        %v4081 = vld [vmem:[%s4063 + $0x88] sm:$0xff]
        %v4082 = vld [vmem:[%s4063 + $0x90] sm:$0xff]
        %v4083 = vld [vmem:[%s4063 + $0x98] sm:$0xff]
        %v4084 = vld [vmem:[%s4063 + $0xa0] sm:$0xff]
        %v4085 = vld [vmem:[%s4063 + $0xa8] sm:$0xff]
        %v4086 = vld [vmem:[%s4063 + $0xb0] sm:$0xff]
        %v4087 = vld [vmem:[%s4063 + $0xb8] sm:$0xff]
        %v4088 = vld [vmem:[%s4063 + $0xc0] sm:$0xff]
        %v4089 = vld [vmem:[%s4063 + $0xc8] sm:$0xff]
        %v4090 = vld [vmem:[%s4063 + $0xd0] sm:$0xff]
        %v4091 = vld [vmem:[%s4063 + $0xd8] sm:$0xff]
        %v4092 = vld [vmem:[%s4063 + $0xe0] sm:$0xff]
        %v4093 = vld [vmem:[%s4063 + $0xe8] sm:$0xff]
        %v4094 = vld [vmem:[%s4063 + $0xf0] sm:$0xff]
        %v4095 = vld [vmem:[%s4063 + $0xf8] sm:$0xff]
        %v4100 = vunpack.c.l.b16 %v4027
        %v4101 = vunpack.c.h.b16 %v4027
        %v4102 = vunpack.c.l.b16 %v4028
        %v4103 = vunpack.c.h.b16 %v4028
        %v4104 = vunpack.c.l.b16 %v4029
        %v4105 = vunpack.c.h.b16 %v4029
        %v4106 = vunpack.c.l.b16 %v4030
        %v4107 = vunpack.c.h.b16 %v4030
        %v4108 = vpack.c.b16 %v4102, %v4100
        %v4109 = vpack.c.b16 %v4103, %v4101
        %v4110 = vpack.c.b16 %v4106, %v4104
        %v4111 = vpack.c.b16 %v4107, %v4105
        %v4148 = vunpack.c.l.b16 %v4064
        %v4149 = vunpack.c.h.b16 %v4064
        %v4150 = vunpack.c.l.b16 %v4065
        %v4151 = vunpack.c.h.b16 %v4065
        %v4152 = vunpack.c.l.b16 %v4066
        %v4153 = vunpack.c.h.b16 %v4066
        %v4154 = vunpack.c.l.b16 %v4067
        %v4155 = vunpack.c.h.b16 %v4067
        %v4156 = vunpack.c.l.b16 %v4068
        %v4157 = vunpack.c.h.b16 %v4068
        %v4158 = vunpack.c.l.b16 %v4069
        %v4159 = vunpack.c.h.b16 %v4069
        %v4160 = vunpack.c.l.b16 %v4070
        %v4161 = vunpack.c.h.b16 %v4070
        %v4162 = vunpack.c.l.b16 %v4071
        %v4163 = vunpack.c.h.b16 %v4071
        %v4164 = vunpack.c.l.b16 %v4072
        %v4165 = vunpack.c.h.b16 %v4072
        %v4166 = vunpack.c.l.b16 %v4073
        %v4167 = vunpack.c.h.b16 %v4073
        %v4168 = vunpack.c.l.b16 %v4074
        %v4169 = vunpack.c.h.b16 %v4074
        %v4170 = vunpack.c.l.b16 %v4075
        %v4171 = vunpack.c.h.b16 %v4075
        %v4172 = vunpack.c.l.b16 %v4076
        %v4173 = vunpack.c.h.b16 %v4076
        %v4174 = vunpack.c.l.b16 %v4077
        %v4175 = vunpack.c.h.b16 %v4077
        %v4176 = vunpack.c.l.b16 %v4078
        %v4177 = vunpack.c.h.b16 %v4078
        %v4178 = vunpack.c.l.b16 %v4079
        %v4179 = vunpack.c.h.b16 %v4079
        %v4180 = vunpack.c.l.b16 %v4080
        %v4181 = vunpack.c.h.b16 %v4080
        %v4182 = vunpack.c.l.b16 %v4081
        %v4183 = vunpack.c.h.b16 %v4081
        %v4184 = vunpack.c.l.b16 %v4082
        %v4185 = vunpack.c.h.b16 %v4082
        %v4186 = vunpack.c.l.b16 %v4083
        %v4187 = vunpack.c.h.b16 %v4083
        %v4188 = vunpack.c.l.b16 %v4084
        %v4189 = vunpack.c.h.b16 %v4084
        %v4190 = vunpack.c.l.b16 %v4085
        %v4191 = vunpack.c.h.b16 %v4085
        %v4192 = vunpack.c.l.b16 %v4086
        %v4193 = vunpack.c.h.b16 %v4086
        %v4194 = vunpack.c.l.b16 %v4087
        %v4195 = vunpack.c.h.b16 %v4087
        %v4196 = vunpack.c.l.b16 %v4088
        %v4197 = vunpack.c.h.b16 %v4088
        %v4198 = vunpack.c.l.b16 %v4089
        %v4199 = vunpack.c.h.b16 %v4089
        %v4200 = vunpack.c.l.b16 %v4090
        %v4201 = vunpack.c.h.b16 %v4090
        %v4202 = vunpack.c.l.b16 %v4091
        %v4203 = vunpack.c.h.b16 %v4091
        %v4204 = vunpack.c.l.b16 %v4092
        %v4205 = vunpack.c.h.b16 %v4092
        %v4206 = vunpack.c.l.b16 %v4093
        %v4207 = vunpack.c.h.b16 %v4093
        %v4208 = vunpack.c.l.b16 %v4094
        %v4209 = vunpack.c.h.b16 %v4094
        %v4210 = vunpack.c.l.b16 %v4095
        %v4211 = vunpack.c.h.b16 %v4095
        %v4212 = vpack.c.b16 %v4150, %v4148
        %v4213 = vpack.c.b16 %v4151, %v4149
        %v4214 = vpack.c.b16 %v4154, %v4152
        %v4215 = vpack.c.b16 %v4155, %v4153
        %v4216 = vpack.c.b16 %v4158, %v4156
        %v4217 = vpack.c.b16 %v4159, %v4157
        %v4218 = vpack.c.b16 %v4162, %v4160
        %v4219 = vpack.c.b16 %v4163, %v4161
        %v4220 = vpack.c.b16 %v4166, %v4164
        %v4221 = vpack.c.b16 %v4167, %v4165
        %v4222 = vpack.c.b16 %v4170, %v4168
        %v4223 = vpack.c.b16 %v4171, %v4169
        %v4224 = vpack.c.b16 %v4174, %v4172
        %v4225 = vpack.c.b16 %v4175, %v4173
        %v4226 = vpack.c.b16 %v4178, %v4176
        %v4227 = vpack.c.b16 %v4179, %v4177
        %v4228 = vpack.c.b16 %v4182, %v4180
        %v4229 = vpack.c.b16 %v4183, %v4181
        %v4230 = vpack.c.b16 %v4186, %v4184
        %v4231 = vpack.c.b16 %v4187, %v4185
        %v4232 = vpack.c.b16 %v4190, %v4188
        %v4233 = vpack.c.b16 %v4191, %v4189
        %v4234 = vpack.c.b16 %v4194, %v4192
        %v4235 = vpack.c.b16 %v4195, %v4193
        %v4236 = vpack.c.b16 %v4198, %v4196
        %v4237 = vpack.c.b16 %v4199, %v4197
        %v4238 = vpack.c.b16 %v4202, %v4200
        %v4239 = vpack.c.b16 %v4203, %v4201
        %v4240 = vpack.c.b16 %v4206, %v4204
        %v4241 = vpack.c.b16 %v4207, %v4205
        %v4242 = vpack.c.b16 %v4210, %v4208
        %v4243 = vpack.c.b16 %v4211, %v4209
        %4276 = vmatprep.subr.bf16.mxu0 %v4213
        %4277 = vmatpush1.bf16.msra.mxu0 %v4212
        %4278 = vmatprep.subr.bf16.mxu0 %v4215
        %4279 = vmatpush1.bf16.msra.mxu0 %v4214
        %4280 = vmatprep.subr.bf16.mxu0 %v4217
        %4281 = vmatpush1.bf16.msra.mxu0 %v4216
        %4282 = vmatprep.subr.bf16.mxu0 %v4219
        %4283 = vmatpush1.bf16.msra.mxu0 %v4218
        %4284 = vmatprep.subr.bf16.mxu0 %v4221
        %4285 = vmatpush1.bf16.msra.mxu0 %v4220
        %4286 = vmatprep.subr.bf16.mxu0 %v4223
        %4287 = vmatpush1.bf16.msra.mxu0 %v4222
        %4288 = vmatprep.subr.bf16.mxu0 %v4225
        %4289 = vmatpush1.bf16.msra.mxu0 %v4224
        %4290 = vmatprep.subr.bf16.mxu0 %v4227
        %4291 = vmatpush1.bf16.msra.mxu0 %v4226
        %4292 = vmatprep.subr.bf16.mxu0 %v4229
        %4293 = vmatpush1.bf16.msra.mxu0 %v4228
        %4294 = vmatprep.subr.bf16.mxu0 %v4231
        %4295 = vmatpush1.bf16.msra.mxu0 %v4230
        %4296 = vmatprep.subr.bf16.mxu0 %v4233
        %4297 = vmatpush1.bf16.msra.mxu0 %v4232
        %4298 = vmatprep.subr.bf16.mxu0 %v4235
        %4299 = vmatpush1.bf16.msra.mxu0 %v4234
        %4300 = vmatprep.subr.bf16.mxu0 %v4237
        %4301 = vmatpush1.bf16.msra.mxu0 %v4236
        %4302 = vmatprep.subr.bf16.mxu0 %v4239
        %4303 = vmatpush1.bf16.msra.mxu0 %v4238
        %4304 = vmatprep.subr.bf16.mxu0 %v4241
        %4305 = vmatpush1.bf16.msra.mxu0 %v4240
        %4306 = vmatprep.subr.bf16.mxu0 %v4243
        %4307 = vmatpush1.bf16.msra.mxu0 %v4242
        %4308 = vmatprep.mubr.bf16.mxu0 %v4109
        %4309 = vmatmul.mubr.bf16.gmra.mrb[0].mxu0 %v4108
        %v4310 = vpop.f32.mrb[0].mxu0
        %v4311 = vadd.f32 0.0, %v4310
        %v4312 = vpop.f32.mrb[0].mxu0
        %v4313 = vadd.f32 0.0, %v4312
        %v4314 = vpop.f32.mrb[0].mxu0
        %v4315 = vadd.f32 0.0, %v4314
        %v4316 = vpop.f32.mrb[0].mxu0
        %v4317 = vadd.f32 0.0, %v4316
        %4318 = vmatprep.mubr.bf16.mxu0 %v4111
        %4319 = vmatmul.mubr.bf16.gmra.mrb[0].mxu0 %v4110
        %v4320 = vpop.f32.mrb[0].mxu0
        %v4321 = vadd.f32 0.0, %v4320
        %v4322 = vpop.f32.mrb[0].mxu0
        %v4323 = vadd.f32 0.0, %v4322
        %v4324 = vpop.f32.mrb[0].mxu0
        %v4325 = vadd.f32 0.0, %v4324
        %v4326 = vpop.f32.mrb[0].mxu0
        %v4327 = vadd.f32 0.0, %v4326
        %4328 = vdwg.mxu0
        %v4330 = vunpack.c.l.b16 %v4026
        %v4331 = vunpack.c.h.b16 %v4026
        %v4332 = vpack.c.b16 %v4100, %v4330
        %v4333 = vpack.c.b16 %v4101, %v4331
        %v4334 = vpack.c.b16 %v4104, %v4102
        %v4335 = vpack.c.b16 %v4105, %v4103
        %v4336 = vpack.c.b16 %v4106, %v4106
        %v4337 = vpack.c.b16 %v4107, %v4107
        %v4339 = vshrl.u32 %v4332, 16
        %v4341 = vrot.slane %v4339, 3
        %v4342 = vshll.u32 %v4332, 16
        %v4344 = vrot.slane %v4342, 4
        %v4345 = vor.u32 %v4341, %v4344
        %v4347 = vshrl.u32 %v4334, 16
        %v4349 = vrot.slane %v4347, 3
        %v4350 = vshll.u32 %v4334, 16
        %v4352 = vrot.slane %v4350, 4
        %v4353 = vor.u32 %v4349, %v4352
        %v4354 = vsel %vm601, %v4345, %v4353
        %v4356 = vshrl.u32 %v4333, 16
        %v4358 = vrot.slane %v4356, 3
        %v4359 = vshll.u32 %v4333, 16
        %v4361 = vrot.slane %v4359, 4
        %v4362 = vor.u32 %v4358, %v4361
        %v4364 = vshrl.u32 %v4335, 16
        %v4366 = vrot.slane %v4364, 3
        %v4367 = vshll.u32 %v4335, 16
        %v4369 = vrot.slane %v4367, 4
        %v4370 = vor.u32 %v4366, %v4369
        %v4371 = vsel %vm601, %v4362, %v4370
        %v4373 = vshrl.u32 %v4336, 16
        %v4375 = vrot.slane %v4373, 3
        %v4376 = vshll.u32 %v4336, 16
        %v4378 = vrot.slane %v4376, 4
        %v4379 = vor.u32 %v4375, %v4378
        %v4380 = vsel %vm601, %v4353, %v4379
        %v4382 = vshrl.u32 %v4337, 16
        %v4384 = vrot.slane %v4382, 3
        %v4385 = vshll.u32 %v4337, 16
        %v4387 = vrot.slane %v4385, 4
        %v4388 = vor.u32 %v4384, %v4387
        %v4389 = vsel %vm601, %v4370, %v4388
        %v4426 = vunpack.c.l.b16 %v4031
        %v4427 = vunpack.c.h.b16 %v4031
        %v4428 = vunpack.c.l.b16 %v4032
        %v4429 = vunpack.c.h.b16 %v4032
        %v4430 = vunpack.c.l.b16 %v4033
        %v4431 = vunpack.c.h.b16 %v4033
        %v4432 = vunpack.c.l.b16 %v4034
        %v4433 = vunpack.c.h.b16 %v4034
        %v4434 = vunpack.c.l.b16 %v4035
        %v4435 = vunpack.c.h.b16 %v4035
        %v4436 = vunpack.c.l.b16 %v4036
        %v4437 = vunpack.c.h.b16 %v4036
        %v4438 = vunpack.c.l.b16 %v4037
        %v4439 = vunpack.c.h.b16 %v4037
        %v4440 = vunpack.c.l.b16 %v4038
        %v4441 = vunpack.c.h.b16 %v4038
        %v4442 = vunpack.c.l.b16 %v4039
        %v4443 = vunpack.c.h.b16 %v4039
        %v4444 = vunpack.c.l.b16 %v4040
        %v4445 = vunpack.c.h.b16 %v4040
        %v4446 = vunpack.c.l.b16 %v4041
        %v4447 = vunpack.c.h.b16 %v4041
        %v4448 = vunpack.c.l.b16 %v4042
        %v4449 = vunpack.c.h.b16 %v4042
        %v4450 = vunpack.c.l.b16 %v4043
        %v4451 = vunpack.c.h.b16 %v4043
        %v4452 = vunpack.c.l.b16 %v4044
        %v4453 = vunpack.c.h.b16 %v4044
        %v4454 = vunpack.c.l.b16 %v4045
        %v4455 = vunpack.c.h.b16 %v4045
        %v4456 = vunpack.c.l.b16 %v4046
        %v4457 = vunpack.c.h.b16 %v4046
        %v4458 = vunpack.c.l.b16 %v4047
        %v4459 = vunpack.c.h.b16 %v4047
        %v4460 = vunpack.c.l.b16 %v4048
        %v4461 = vunpack.c.h.b16 %v4048
        %v4462 = vunpack.c.l.b16 %v4049
        %v4463 = vunpack.c.h.b16 %v4049
        %v4464 = vunpack.c.l.b16 %v4050
        %v4465 = vunpack.c.h.b16 %v4050
        %v4466 = vunpack.c.l.b16 %v4051
        %v4467 = vunpack.c.h.b16 %v4051
        %v4468 = vunpack.c.l.b16 %v4052
        %v4469 = vunpack.c.h.b16 %v4052
        %v4470 = vunpack.c.l.b16 %v4053
        %v4471 = vunpack.c.h.b16 %v4053
        %v4472 = vunpack.c.l.b16 %v4054
        %v4473 = vunpack.c.h.b16 %v4054
        %v4474 = vunpack.c.l.b16 %v4055
        %v4475 = vunpack.c.h.b16 %v4055
        %v4476 = vunpack.c.l.b16 %v4056
        %v4477 = vunpack.c.h.b16 %v4056
        %v4478 = vunpack.c.l.b16 %v4057
        %v4479 = vunpack.c.h.b16 %v4057
        %v4480 = vunpack.c.l.b16 %v4058
        %v4481 = vunpack.c.h.b16 %v4058
        %v4482 = vunpack.c.l.b16 %v4059
        %v4483 = vunpack.c.h.b16 %v4059
        %v4484 = vunpack.c.l.b16 %v4060
        %v4485 = vunpack.c.h.b16 %v4060
        %v4486 = vunpack.c.l.b16 %v4061
        %v4487 = vunpack.c.h.b16 %v4061
        %v4488 = vunpack.c.l.b16 %v4062
        %v4489 = vunpack.c.h.b16 %v4062
        %v4490 = vpack.c.b16 %v4428, %v4426
        %v4491 = vpack.c.b16 %v4429, %v4427
        %v4492 = vpack.c.b16 %v4432, %v4430
        %v4493 = vpack.c.b16 %v4433, %v4431
        %v4494 = vpack.c.b16 %v4436, %v4434
        %v4495 = vpack.c.b16 %v4437, %v4435
        %v4496 = vpack.c.b16 %v4440, %v4438
        %v4497 = vpack.c.b16 %v4441, %v4439
        %v4498 = vpack.c.b16 %v4444, %v4442
        %v4499 = vpack.c.b16 %v4445, %v4443
        %v4500 = vpack.c.b16 %v4448, %v4446
        %v4501 = vpack.c.b16 %v4449, %v4447
        %v4502 = vpack.c.b16 %v4452, %v4450
        %v4503 = vpack.c.b16 %v4453, %v4451
        %v4504 = vpack.c.b16 %v4456, %v4454
        %v4505 = vpack.c.b16 %v4457, %v4455
        %v4506 = vpack.c.b16 %v4460, %v4458
        %v4507 = vpack.c.b16 %v4461, %v4459
        %v4508 = vpack.c.b16 %v4464, %v4462
        %v4509 = vpack.c.b16 %v4465, %v4463
        %v4510 = vpack.c.b16 %v4468, %v4466
        %v4511 = vpack.c.b16 %v4469, %v4467
        %v4512 = vpack.c.b16 %v4472, %v4470
        %v4513 = vpack.c.b16 %v4473, %v4471
        %v4514 = vpack.c.b16 %v4476, %v4474
        %v4515 = vpack.c.b16 %v4477, %v4475
        %v4516 = vpack.c.b16 %v4480, %v4478
        %v4517 = vpack.c.b16 %v4481, %v4479
        %v4518 = vpack.c.b16 %v4484, %v4482
        %v4519 = vpack.c.b16 %v4485, %v4483
        %v4520 = vpack.c.b16 %v4488, %v4486
        %v4521 = vpack.c.b16 %v4489, %v4487
        %4554 = vmatprep.subr.bf16.mxu0 %v4491
        %4555 = vmatpush1.bf16.msra.mxu0 %v4490
        %4556 = vmatprep.subr.bf16.mxu0 %v4493
        %4557 = vmatpush1.bf16.msra.mxu0 %v4492
        %4558 = vmatprep.subr.bf16.mxu0 %v4495
        %4559 = vmatpush1.bf16.msra.mxu0 %v4494
        %4560 = vmatprep.subr.bf16.mxu0 %v4497
        %4561 = vmatpush1.bf16.msra.mxu0 %v4496
        %4562 = vmatprep.subr.bf16.mxu0 %v4499
        %4563 = vmatpush1.bf16.msra.mxu0 %v4498
        %4564 = vmatprep.subr.bf16.mxu0 %v4501
        %4565 = vmatpush1.bf16.msra.mxu0 %v4500
        %4566 = vmatprep.subr.bf16.mxu0 %v4503
        %4567 = vmatpush1.bf16.msra.mxu0 %v4502
        %4568 = vmatprep.subr.bf16.mxu0 %v4505
        %4569 = vmatpush1.bf16.msra.mxu0 %v4504
        %4570 = vmatprep.subr.bf16.mxu0 %v4507
        %4571 = vmatpush1.bf16.msra.mxu0 %v4506
        %4572 = vmatprep.subr.bf16.mxu0 %v4509
        %4573 = vmatpush1.bf16.msra.mxu0 %v4508
        %4574 = vmatprep.subr.bf16.mxu0 %v4511
        %4575 = vmatpush1.bf16.msra.mxu0 %v4510
        %4576 = vmatprep.subr.bf16.mxu0 %v4513
        %4577 = vmatpush1.bf16.msra.mxu0 %v4512
        %4578 = vmatprep.subr.bf16.mxu0 %v4515
        %4579 = vmatpush1.bf16.msra.mxu0 %v4514
        %4580 = vmatprep.subr.bf16.mxu0 %v4517
        %4581 = vmatpush1.bf16.msra.mxu0 %v4516
        %4582 = vmatprep.subr.bf16.mxu0 %v4519
        %4583 = vmatpush1.bf16.msra.mxu0 %v4518
        %4584 = vmatprep.subr.bf16.mxu0 %v4521
        %4585 = vmatpush1.bf16.msra.mxu0 %v4520
        %4586 = vmatprep.mubr.bf16.mxu0 %v4371
        %4587 = vmatmul.mubr.bf16.gmra.mrb[0].mxu0 %v4354
        %v4588 = vpop.f32.mrb[0].mxu0
        %v4589 = vadd.f32 %v4311, %v4588
        %v4590 = vpop.f32.mrb[0].mxu0
        %v4591 = vadd.f32 %v4313, %v4590
        %v4592 = vpop.f32.mrb[0].mxu0
        %v4593 = vadd.f32 %v4315, %v4592
        %v4594 = vpop.f32.mrb[0].mxu0
        %v4595 = vadd.f32 %v4317, %v4594
        %4596 = vmatprep.mubr.bf16.mxu0 %v4389
        %4597 = vmatmul.mubr.bf16.gmra.mrb[0].mxu0 %v4380
        %v4598 = vpop.f32.mrb[0].mxu0
        %v4599 = vadd.f32 %v4321, %v4598
        %v4600 = vpop.f32.mrb[0].mxu0
        %v4601 = vadd.f32 %v4323, %v4600
        %v4602 = vpop.f32.mrb[0].mxu0
        %v4603 = vadd.f32 %v4325, %v4602
        %v4604 = vpop.f32.mrb[0].mxu0
        %v4605 = vadd.f32 %v4327, %v4604
        %4606 = vdwg.mxu0
        %v4607 = vld [vmem:[#allocation4 + $0x8] sm:$0xff]
        %v4608 = vld [vmem:[#allocation4 + $0x10] sm:$0xff]
        %v4609 = vld [vmem:[#allocation4 + $0x18] sm:$0xff]
        %v4610 = vld [vmem:[#allocation4 + $0x20] sm:$0xff]
        %v4611 = vld [vmem:[#allocation4 + $0x28] sm:$0x11]
        %s4612 = scalar_lea.vmem %s10, 512
        %v4613 = vld [vmem:[%s4612] sm:$0xff]
        %v4614 = vld [vmem:[%s4612 + $0x8] sm:$0xff]
        %v4615 = vld [vmem:[%s4612 + $0x10] sm:$0xff]
        %v4616 = vld [vmem:[%s4612 + $0x18] sm:$0xff]
        %v4617 = vld [vmem:[%s4612 + $0x20] sm:$0xff]
        %v4618 = vld [vmem:[%s4612 + $0x28] sm:$0xff]
        %v4619 = vld [vmem:[%s4612 + $0x30] sm:$0xff]
        %v4620 = vld [vmem:[%s4612 + $0x38] sm:$0xff]
        %v4621 = vld [vmem:[%s4612 + $0x40] sm:$0xff]
        %v4622 = vld [vmem:[%s4612 + $0x48] sm:$0xff]
        %v4623 = vld [vmem:[%s4612 + $0x50] sm:$0xff]
        %v4624 = vld [vmem:[%s4612 + $0x58] sm:$0xff]
        %v4625 = vld [vmem:[%s4612 + $0x60] sm:$0xff]
        %v4626 = vld [vmem:[%s4612 + $0x68] sm:$0xff]
        %v4627 = vld [vmem:[%s4612 + $0x70] sm:$0xff]
        %v4628 = vld [vmem:[%s4612 + $0x78] sm:$0xff]
        %v4629 = vld [vmem:[%s4612 + $0x80] sm:$0xff]
        %v4630 = vld [vmem:[%s4612 + $0x88] sm:$0xff]
        %v4631 = vld [vmem:[%s4612 + $0x90] sm:$0xff]
        %v4632 = vld [vmem:[%s4612 + $0x98] sm:$0xff]
        %v4633 = vld [vmem:[%s4612 + $0xa0] sm:$0xff]
        %v4634 = vld [vmem:[%s4612 + $0xa8] sm:$0xff]
        %v4635 = vld [vmem:[%s4612 + $0xb0] sm:$0xff]
        %v4636 = vld [vmem:[%s4612 + $0xb8] sm:$0xff]
        %v4637 = vld [vmem:[%s4612 + $0xc0] sm:$0xff]
        %v4638 = vld [vmem:[%s4612 + $0xc8] sm:$0xff]
        %v4639 = vld [vmem:[%s4612 + $0xd0] sm:$0xff]
        %v4640 = vld [vmem:[%s4612 + $0xd8] sm:$0xff]
        %v4641 = vld [vmem:[%s4612 + $0xe0] sm:$0xff]
        %v4642 = vld [vmem:[%s4612 + $0xe8] sm:$0xff]
        %v4643 = vld [vmem:[%s4612 + $0xf0] sm:$0xff]
        %v4644 = vld [vmem:[%s4612 + $0xf8] sm:$0xff]
        %v4650 = vunpack.c.l.b16 %v4607
        %v4651 = vunpack.c.h.b16 %v4607
        %v4652 = vunpack.c.l.b16 %v4608
        %v4653 = vunpack.c.h.b16 %v4608
        %v4654 = vunpack.c.l.b16 %v4609
        %v4655 = vunpack.c.h.b16 %v4609
        %v4656 = vunpack.c.l.b16 %v4610
        %v4657 = vunpack.c.h.b16 %v4610
        %v4658 = vunpack.c.l.b16 %v4611
        %v4659 = vunpack.c.h.b16 %v4611
        %v4660 = vpack.c.b16 %v4652, %v4650
        %v4661 = vpack.c.b16 %v4653, %v4651
        %v4662 = vpack.c.b16 %v4656, %v4654
        %v4663 = vpack.c.b16 %v4657, %v4655
        %v4664 = vpack.c.b16 %v4658, %v4658
        %v4665 = vpack.c.b16 %v4659, %v4659
        %v4667 = vshrl.u32 %v4660, 16
        %v4669 = vshll.u32 %v4660, 16
        %v4671 = vrot.slane %v4669, 1
        %v4672 = vor.u32 %v4667, %v4671
        %v4674 = vshll.u32 %v4662, 16
        %v4676 = vrot.slane %v4674, 1
        %v4677 = vsel %vm1848, %v4672, %v4676
        %v4679 = vshrl.u32 %v4661, 16
        %v4681 = vshll.u32 %v4661, 16
        %v4683 = vrot.slane %v4681, 1
        %v4684 = vor.u32 %v4679, %v4683
        %v4686 = vshll.u32 %v4663, 16
        %v4688 = vrot.slane %v4686, 1
        %v4689 = vsel %vm1848, %v4684, %v4688
        %v4690 = vshrl.u32 %v4662, 16
        %v4692 = vor.u32 %v4690, %v4676
        %v4694 = vshll.u32 %v4664, 16
        %v4696 = vrot.slane %v4694, 1
        %v4697 = vsel %vm1848, %v4692, %v4696
        %v4698 = vshrl.u32 %v4663, 16
        %v4700 = vor.u32 %v4698, %v4688
        %v4702 = vshll.u32 %v4665, 16
        %v4704 = vrot.slane %v4702, 1
        %v4705 = vsel %vm1848, %v4700, %v4704
        %v4742 = vunpack.c.l.b16 %v4613
        %v4743 = vunpack.c.h.b16 %v4613
        %v4744 = vunpack.c.l.b16 %v4614
        %v4745 = vunpack.c.h.b16 %v4614
        %v4746 = vunpack.c.l.b16 %v4615
        %v4747 = vunpack.c.h.b16 %v4615
        %v4748 = vunpack.c.l.b16 %v4616
        %v4749 = vunpack.c.h.b16 %v4616
        %v4750 = vunpack.c.l.b16 %v4617
        %v4751 = vunpack.c.h.b16 %v4617
        %v4752 = vunpack.c.l.b16 %v4618
        %v4753 = vunpack.c.h.b16 %v4618
        %v4754 = vunpack.c.l.b16 %v4619
        %v4755 = vunpack.c.h.b16 %v4619
        %v4756 = vunpack.c.l.b16 %v4620
        %v4757 = vunpack.c.h.b16 %v4620
        %v4758 = vunpack.c.l.b16 %v4621
        %v4759 = vunpack.c.h.b16 %v4621
        %v4760 = vunpack.c.l.b16 %v4622
        %v4761 = vunpack.c.h.b16 %v4622
        %v4762 = vunpack.c.l.b16 %v4623
        %v4763 = vunpack.c.h.b16 %v4623
        %v4764 = vunpack.c.l.b16 %v4624
        %v4765 = vunpack.c.h.b16 %v4624
        %v4766 = vunpack.c.l.b16 %v4625
        %v4767 = vunpack.c.h.b16 %v4625
        %v4768 = vunpack.c.l.b16 %v4626
        %v4769 = vunpack.c.h.b16 %v4626
        %v4770 = vunpack.c.l.b16 %v4627
        %v4771 = vunpack.c.h.b16 %v4627
        %v4772 = vunpack.c.l.b16 %v4628
        %v4773 = vunpack.c.h.b16 %v4628
        %v4774 = vunpack.c.l.b16 %v4629
        %v4775 = vunpack.c.h.b16 %v4629
        %v4776 = vunpack.c.l.b16 %v4630
        %v4777 = vunpack.c.h.b16 %v4630
        %v4778 = vunpack.c.l.b16 %v4631
        %v4779 = vunpack.c.h.b16 %v4631
        %v4780 = vunpack.c.l.b16 %v4632
        %v4781 = vunpack.c.h.b16 %v4632
        %v4782 = vunpack.c.l.b16 %v4633
        %v4783 = vunpack.c.h.b16 %v4633
        %v4784 = vunpack.c.l.b16 %v4634
        %v4785 = vunpack.c.h.b16 %v4634
        %v4786 = vunpack.c.l.b16 %v4635
        %v4787 = vunpack.c.h.b16 %v4635
        %v4788 = vunpack.c.l.b16 %v4636
        %v4789 = vunpack.c.h.b16 %v4636
        %v4790 = vunpack.c.l.b16 %v4637
        %v4791 = vunpack.c.h.b16 %v4637
        %v4792 = vunpack.c.l.b16 %v4638
        %v4793 = vunpack.c.h.b16 %v4638
        %v4794 = vunpack.c.l.b16 %v4639
        %v4795 = vunpack.c.h.b16 %v4639
        %v4796 = vunpack.c.l.b16 %v4640
        %v4797 = vunpack.c.h.b16 %v4640
        %v4798 = vunpack.c.l.b16 %v4641
        %v4799 = vunpack.c.h.b16 %v4641
        %v4800 = vunpack.c.l.b16 %v4642
        %v4801 = vunpack.c.h.b16 %v4642
        %v4802 = vunpack.c.l.b16 %v4643
        %v4803 = vunpack.c.h.b16 %v4643
        %v4804 = vunpack.c.l.b16 %v4644
        %v4805 = vunpack.c.h.b16 %v4644
        %v4806 = vpack.c.b16 %v4744, %v4742
        %v4807 = vpack.c.b16 %v4745, %v4743
        %v4808 = vpack.c.b16 %v4748, %v4746
        %v4809 = vpack.c.b16 %v4749, %v4747
        %v4810 = vpack.c.b16 %v4752, %v4750
        %v4811 = vpack.c.b16 %v4753, %v4751
        %v4812 = vpack.c.b16 %v4756, %v4754
        %v4813 = vpack.c.b16 %v4757, %v4755
        %v4814 = vpack.c.b16 %v4760, %v4758
        %v4815 = vpack.c.b16 %v4761, %v4759
        %v4816 = vpack.c.b16 %v4764, %v4762
        %v4817 = vpack.c.b16 %v4765, %v4763
        %v4818 = vpack.c.b16 %v4768, %v4766
        %v4819 = vpack.c.b16 %v4769, %v4767
        %v4820 = vpack.c.b16 %v4772, %v4770
        %v4821 = vpack.c.b16 %v4773, %v4771
        %v4822 = vpack.c.b16 %v4776, %v4774
        %v4823 = vpack.c.b16 %v4777, %v4775
        %v4824 = vpack.c.b16 %v4780, %v4778
        %v4825 = vpack.c.b16 %v4781, %v4779
        %v4826 = vpack.c.b16 %v4784, %v4782
        %v4827 = vpack.c.b16 %v4785, %v4783
        %v4828 = vpack.c.b16 %v4788, %v4786
        %v4829 = vpack.c.b16 %v4789, %v4787
        %v4830 = vpack.c.b16 %v4792, %v4790
        %v4831 = vpack.c.b16 %v4793, %v4791
        %v4832 = vpack.c.b16 %v4796, %v4794
        %v4833 = vpack.c.b16 %v4797, %v4795
        %v4834 = vpack.c.b16 %v4800, %v4798
        %v4835 = vpack.c.b16 %v4801, %v4799
        %v4836 = vpack.c.b16 %v4804, %v4802
        %v4837 = vpack.c.b16 %v4805, %v4803
        %4870 = vmatprep.subr.bf16.mxu0 %v4807
        %4871 = vmatpush1.bf16.msra.mxu0 %v4806
        %4872 = vmatprep.subr.bf16.mxu0 %v4809
        %4873 = vmatpush1.bf16.msra.mxu0 %v4808
        %4874 = vmatprep.subr.bf16.mxu0 %v4811
        %4875 = vmatpush1.bf16.msra.mxu0 %v4810
        %4876 = vmatprep.subr.bf16.mxu0 %v4813
        %4877 = vmatpush1.bf16.msra.mxu0 %v4812
        %4878 = vmatprep.subr.bf16.mxu0 %v4815
        %4879 = vmatpush1.bf16.msra.mxu0 %v4814
        %4880 = vmatprep.subr.bf16.mxu0 %v4817
        %4881 = vmatpush1.bf16.msra.mxu0 %v4816
        %4882 = vmatprep.subr.bf16.mxu0 %v4819
        %4883 = vmatpush1.bf16.msra.mxu0 %v4818
        %4884 = vmatprep.subr.bf16.mxu0 %v4821
        %4885 = vmatpush1.bf16.msra.mxu0 %v4820
        %4886 = vmatprep.subr.bf16.mxu0 %v4823
        %4887 = vmatpush1.bf16.msra.mxu0 %v4822
        %4888 = vmatprep.subr.bf16.mxu0 %v4825
        %4889 = vmatpush1.bf16.msra.mxu0 %v4824
        %4890 = vmatprep.subr.bf16.mxu0 %v4827
        %4891 = vmatpush1.bf16.msra.mxu0 %v4826
        %4892 = vmatprep.subr.bf16.mxu0 %v4829
        %4893 = vmatpush1.bf16.msra.mxu0 %v4828
        %4894 = vmatprep.subr.bf16.mxu0 %v4831
        %4895 = vmatpush1.bf16.msra.mxu0 %v4830
        %4896 = vmatprep.subr.bf16.mxu0 %v4833
        %4897 = vmatpush1.bf16.msra.mxu0 %v4832
        %4898 = vmatprep.subr.bf16.mxu0 %v4835
        %4899 = vmatpush1.bf16.msra.mxu0 %v4834
        %4900 = vmatprep.subr.bf16.mxu0 %v4837
        %4901 = vmatpush1.bf16.msra.mxu0 %v4836
        %4902 = vmatprep.mubr.bf16.mxu0 %v4689
        %4903 = vmatmul.mubr.bf16.gmra.mrb[0].mxu0 %v4677
        %v4904 = vpop.f32.mrb[0].mxu0
        %v4905 = vadd.f32 0.0, %v4904
        %v4906 = vpop.f32.mrb[0].mxu0
        %v4907 = vadd.f32 0.0, %v4906
        %v4908 = vpop.f32.mrb[0].mxu0
        %v4909 = vadd.f32 0.0, %v4908
        %v4910 = vpop.f32.mrb[0].mxu0
        %v4911 = vadd.f32 0.0, %v4910
        %4912 = vmatprep.mubr.bf16.mxu0 %v4705
        %4913 = vmatmul.mubr.bf16.gmra.mrb[0].mxu0 %v4697
        %v4914 = vpop.f32.mrb[0].mxu0
        %v4915 = vadd.f32 0.0, %v4914
        %v4916 = vpop.f32.mrb[0].mxu0
        %v4917 = vadd.f32 0.0, %v4916
        %v4918 = vpop.f32.mrb[0].mxu0
        %v4919 = vadd.f32 0.0, %v4918
        %v4920 = vpop.f32.mrb[0].mxu0
        %v4921 = vadd.f32 0.0, %v4920
        %4922 = vdwg.mxu0
        %v4923 = vadd.f32 %v4589, %v4905
        %v4924 = vadd.f32 %v4591, %v4907
        %v4925 = vadd.f32 %v4593, %v4909
        %v4926 = vadd.f32 %v4595, %v4911
        %v4927 = vadd.f32 %v4599, %v4915
        %v4928 = vadd.f32 %v4601, %v4917
        %v4929 = vadd.f32 %v4603, %v4919
        %v4930 = vadd.f32 %v4605, %v4921
        %v4931 = vld [vmem:[%s11] sm:$0x3]
        %v4933 = vlaneseq
        %v4934 = vshrl.u32 %v4933, 7
        %v4935 = vsub.s32 0, %v4934
        %v4936 = vrot.slane %v4931, %v4935
        %v4937 = vlaneseq
        %v4938 = vshrl.u32 %v4937, 7
        %v4939 = vsub.s32 1, %v4938
        %v4940 = vrot.slane %v4931, %v4939
        %v4943 = vmul.f32 %v4923, %v4936
        %v4944 = vmul.f32 %v4924, %v4940
        %v4945 = vmul.f32 %v4925, %v4936
        %v4946 = vmul.f32 %v4926, %v4940
        %v4947 = vmul.f32 %v4927, %v4936
        %v4948 = vmul.f32 %v4928, %v4940
        %v4949 = vmul.f32 %v4929, %v4936
        %v4950 = vmul.f32 %v4930, %v4940
        %v4951 = vld [vmem:[%s12] sm:$0x3]
        %v4953 = vlaneseq
        %v4954 = vshrl.u32 %v4953, 7
        %v4955 = vsub.s32 0, %v4954
        %v4956 = vrot.slane %v4951, %v4955
        %v4957 = vlaneseq
        %v4958 = vshrl.u32 %v4957, 7
        %v4959 = vsub.s32 1, %v4958
        %v4960 = vrot.slane %v4951, %v4959
        %v4963 = vadd.f32 %v4943, %v4956
        %v4964 = vadd.f32 %v4944, %v4960
        %v4965 = vadd.f32 %v4945, %v4956
        %v4966 = vadd.f32 %v4946, %v4960
        %v4967 = vadd.f32 %v4947, %v4956
        %v4968 = vadd.f32 %v4948, %v4960
        %v4969 = vadd.f32 %v4949, %v4956
        %v4970 = vadd.f32 %v4950, %v4960
        %v4971 = vmax.f32 %v4963, 0.0
        %v4972 = vmax.f32 %v4964, 0.0
        %v4973 = vmax.f32 %v4965, 0.0
        %v4974 = vmax.f32 %v4966, 0.0
        %v4975 = vmax.f32 %v4967, 0.0
        %v4976 = vmax.f32 %v4968, 0.0
        %v4977 = vmax.f32 %v4969, 0.0
        %v4978 = vmax.f32 %v4970, 0.0
        %v4979 = vadd.f32 %v4971, %v4973
        %v4980 = vadd.f32 %v4979, %v4975
        %v4981 = vadd.f32 %v4980, %v4977
        %v4982 = vrot.slane %v4981, 4
        %v4983 = vadd.f32 %v4981, %v4982
        %v4984 = vrot.slane %v4983, 2
        %v4985 = vadd.f32 %v4983, %v4984
        %v4986 = vrot.slane %v4985, 1
        %v4987 = vadd.f32 %v4985, %v4986
        %v4988 = vadd.f32 %v4972, %v4974
        %v4989 = vadd.f32 %v4988, %v4976
        %v4990 = vadd.f32 %v4989, %v4978
        %v4991 = vrot.slane %v4990, 4
        %v4992 = vadd.f32 %v4990, %v4991
        %v4993 = vrot.slane %v4992, 2
        %v4994 = vadd.f32 %v4992, %v4993
        %v4995 = vrot.slane %v4994, 1
        %v4996 = vadd.f32 %v4994, %v4995
        %v4997 = vadd.f32 %v4987, 0.0
        %v4998 = vadd.f32 %v4996, 0.0
        %v4999 = vmul.f32 %v4997, 0.03125
        %v5000 = vmul.f32 %v4998, 0.03125
        %v5001 = vpack.c.bf16 %v4999, %v4999
        %v5002 = vpack.c.bf16 %v5000, %v5000
        %v5003 = vld [vmem:[%s13] sm:$0xf]
        %v5004 = vld [vmem:[%s13 + $0x4] sm:$0xf]
        %v5005 = vld [vmem:[%s13 + $0x8] sm:$0xf]
        %v5006 = vld [vmem:[%s13 + $0xc] sm:$0xf]
        %v5007 = vld [vmem:[%s13 + $0x10] sm:$0xf]
        %v5008 = vld [vmem:[%s13 + $0x14] sm:$0xf]
        %v5009 = vld [vmem:[%s13 + $0x18] sm:$0xf]
        %v5010 = vld [vmem:[%s13 + $0x1c] sm:$0xf]
        %v5011 = vld [vmem:[%s13 + $0x20] sm:$0xf]
        %v5012 = vld [vmem:[%s13 + $0x24] sm:$0xf]
        %v5013 = vld [vmem:[%s13 + $0x28] sm:$0xf]
        %v5014 = vld [vmem:[%s13 + $0x2c] sm:$0xf]
        %v5015 = vld [vmem:[%s13 + $0x30] sm:$0xf]
        %v5016 = vld [vmem:[%s13 + $0x34] sm:$0xf]
        %v5017 = vld [vmem:[%s13 + $0x38] sm:$0xf]
        %v5018 = vld [vmem:[%s13 + $0x3c] sm:$0xf]
        %v5019 = vld [vmem:[%s13 + $0x40] sm:$0xf]
        %v5020 = vld [vmem:[%s13 + $0x44] sm:$0xf]
        %v5021 = vld [vmem:[%s13 + $0x48] sm:$0xf]
        %v5022 = vld [vmem:[%s13 + $0x4c] sm:$0xf]
        %v5023 = vld [vmem:[%s13 + $0x50] sm:$0xf]
        %v5024 = vld [vmem:[%s13 + $0x54] sm:$0xf]
        %v5025 = vld [vmem:[%s13 + $0x58] sm:$0xf]
        %v5026 = vld [vmem:[%s13 + $0x5c] sm:$0xf]
        %v5027 = vld [vmem:[%s13 + $0x60] sm:$0xf]
        %v5028 = vld [vmem:[%s13 + $0x64] sm:$0xf]
        %v5029 = vld [vmem:[%s13 + $0x68] sm:$0xf]
        %v5030 = vld [vmem:[%s13 + $0x6c] sm:$0xf]
        %v5031 = vld [vmem:[%s13 + $0x70] sm:$0xf]
        %v5032 = vld [vmem:[%s13 + $0x74] sm:$0xf]
        %v5033 = vld [vmem:[%s13 + $0x78] sm:$0xf]
        %v5034 = vld [vmem:[%s13 + $0x7c] sm:$0xf]
        %v5035 = vld [vmem:[%s14] sm:$0x1]
        %v5068 = vunpack.c.l.b16 %v5003
        %v5069 = vunpack.c.l.b16 %v5004
        %v5070 = vunpack.c.l.b16 %v5005
        %v5071 = vunpack.c.l.b16 %v5006
        %v5072 = vunpack.c.l.b16 %v5007
        %v5073 = vunpack.c.l.b16 %v5008
        %v5074 = vunpack.c.l.b16 %v5009
        %v5075 = vunpack.c.l.b16 %v5010
        %v5076 = vunpack.c.l.b16 %v5011
        %v5077 = vunpack.c.l.b16 %v5012
        %v5078 = vunpack.c.l.b16 %v5013
        %v5079 = vunpack.c.l.b16 %v5014
        %v5080 = vunpack.c.l.b16 %v5015
        %v5081 = vunpack.c.l.b16 %v5016
        %v5082 = vunpack.c.l.b16 %v5017
        %v5083 = vunpack.c.l.b16 %v5018
        %v5084 = vunpack.c.l.b16 %v5019
        %v5085 = vunpack.c.l.b16 %v5020
        %v5086 = vunpack.c.l.b16 %v5021
        %v5087 = vunpack.c.l.b16 %v5022
        %v5088 = vunpack.c.l.b16 %v5023
        %v5089 = vunpack.c.l.b16 %v5024
        %v5090 = vunpack.c.l.b16 %v5025
        %v5091 = vunpack.c.l.b16 %v5026
        %v5092 = vunpack.c.l.b16 %v5027
        %v5093 = vunpack.c.l.b16 %v5028
        %v5094 = vunpack.c.l.b16 %v5029
        %v5095 = vunpack.c.l.b16 %v5030
        %v5096 = vunpack.c.l.b16 %v5031
        %v5097 = vunpack.c.l.b16 %v5032
        %v5098 = vunpack.c.l.b16 %v5033
        %v5099 = vunpack.c.l.b16 %v5034
        %v5100 = vpack.c.b16 %v5069, %v5068
        %v5101 = vpack.c.b16 %v5071, %v5070
        %v5102 = vpack.c.b16 %v5073, %v5072
        %v5103 = vpack.c.b16 %v5075, %v5074
        %v5104 = vpack.c.b16 %v5077, %v5076
        %v5105 = vpack.c.b16 %v5079, %v5078
        %v5106 = vpack.c.b16 %v5081, %v5080
        %v5107 = vpack.c.b16 %v5083, %v5082
        %v5108 = vpack.c.b16 %v5085, %v5084
        %v5109 = vpack.c.b16 %v5087, %v5086
        %v5110 = vpack.c.b16 %v5089, %v5088
        %v5111 = vpack.c.b16 %v5091, %v5090
        %v5112 = vpack.c.b16 %v5093, %v5092
        %v5113 = vpack.c.b16 %v5095, %v5094
        %v5114 = vpack.c.b16 %v5097, %v5096
        %v5115 = vpack.c.b16 %v5099, %v5098
        %5132 = vmatprep.subr.bf16.mxu0 0
        %5133 = vmatpush1.bf16.msra.mxu0 %v5100
        %5134 = vmatprep.subr.bf16.mxu0 0
        %5135 = vmatpush1.bf16.msra.mxu0 %v5101
        %5136 = vmatprep.subr.bf16.mxu0 0
        %5137 = vmatpush1.bf16.msra.mxu0 %v5102
        %5138 = vmatprep.subr.bf16.mxu0 0
        %5139 = vmatpush1.bf16.msra.mxu0 %v5103
        %5140 = vmatprep.subr.bf16.mxu0 0
        %5141 = vmatpush1.bf16.msra.mxu0 %v5104
        %5142 = vmatprep.subr.bf16.mxu0 0
        %5143 = vmatpush1.bf16.msra.mxu0 %v5105
        %5144 = vmatprep.subr.bf16.mxu0 0
        %5145 = vmatpush1.bf16.msra.mxu0 %v5106
        %5146 = vmatprep.subr.bf16.mxu0 0
        %5147 = vmatpush1.bf16.msra.mxu0 %v5107
        %5148 = vmatprep.subr.bf16.mxu0 0
        %5149 = vmatpush1.bf16.msra.mxu0 %v5108
        %5150 = vmatprep.subr.bf16.mxu0 0
        %5151 = vmatpush1.bf16.msra.mxu0 %v5109
        %5152 = vmatprep.subr.bf16.mxu0 0
        %5153 = vmatpush1.bf16.msra.mxu0 %v5110
        %5154 = vmatprep.subr.bf16.mxu0 0
        %5155 = vmatpush1.bf16.msra.mxu0 %v5111
        %5156 = vmatprep.subr.bf16.mxu0 0
        %5157 = vmatpush1.bf16.msra.mxu0 %v5112
        %5158 = vmatprep.subr.bf16.mxu0 0
        %5159 = vmatpush1.bf16.msra.mxu0 %v5113
        %5160 = vmatprep.subr.bf16.mxu0 0
        %5161 = vmatpush1.bf16.msra.mxu0 %v5114
        %5162 = vmatprep.subr.bf16.mxu0 0
        %5163 = vmatpush1.bf16.msra.mxu0 %v5115
        %5164 = vmatprep.mubr.bf16.mxu0 %v5002
        %5165 = vmatmul.mubr.bf16.gmra.mrb[0].mxu0 %v5001
        %v5166 = vpop.f32.mrb[0].mxu0
        %v5167 = vadd.f32 %v5035, %v5166
        %v5168 = vpop.f32.mrb[0].mxu0
        %v5169 = vpop.f32.mrb[0].mxu0
        %v5170 = vpop.f32.mrb[0].mxu0
        %5171 = vdwg.mxu0
        %v5172 = vmax.f32 %v5167, 0.0
        %v5173 = vpack.c.bf16 %v5172, %v5172
        %v5174 = vld [vmem:[#allocation8] sm:$0xf]
        %v5175 = vld [vmem:[#allocation8 + $0x4] sm:$0xf]
        %v5176 = vld [vmem:[#allocation8 + $0x8] sm:$0xf]
        %v5177 = vld [vmem:[#allocation8 + $0xc] sm:$0xf]
        %v5178 = vld [vmem:[#allocation8 + $0x10] sm:$0xf]
        %v5179 = vld [vmem:[#allocation8 + $0x14] sm:$0xf]
        %v5180 = vld [vmem:[#allocation8 + $0x18] sm:$0xf]
        %v5181 = vld [vmem:[#allocation8 + $0x1c] sm:$0xf]
        %v5182 = vld [vmem:[#allocation8 + $0x20] sm:$0xf]
        %v5183 = vld [vmem:[#allocation8 + $0x24] sm:$0xf]
        %v5184 = vld [vmem:[#allocation8 + $0x28] sm:$0xf]
        %v5185 = vld [vmem:[#allocation8 + $0x2c] sm:$0xf]
        %v5186 = vld [vmem:[#allocation8 + $0x30] sm:$0xf]
        %v5187 = vld [vmem:[#allocation8 + $0x34] sm:$0xf]
        %v5188 = vld [vmem:[#allocation8 + $0x38] sm:$0xf]
        %v5189 = vld [vmem:[#allocation8 + $0x3c] sm:$0xf]
        %v5190 = vld [vmem:[%s16] sm:$0x1]
        %v5207 = vunpack.c.l.b16 %v5174
        %v5208 = vunpack.c.l.b16 %v5175
        %v5209 = vunpack.c.l.b16 %v5176
        %v5210 = vunpack.c.l.b16 %v5177
        %v5211 = vunpack.c.l.b16 %v5178
        %v5212 = vunpack.c.l.b16 %v5179
        %v5213 = vunpack.c.l.b16 %v5180
        %v5214 = vunpack.c.l.b16 %v5181
        %v5215 = vunpack.c.l.b16 %v5182
        %v5216 = vunpack.c.l.b16 %v5183
        %v5217 = vunpack.c.l.b16 %v5184
        %v5218 = vunpack.c.l.b16 %v5185
        %v5219 = vunpack.c.l.b16 %v5186
        %v5220 = vunpack.c.l.b16 %v5187
        %v5221 = vunpack.c.l.b16 %v5188
        %v5222 = vunpack.c.l.b16 %v5189
        %v5223 = vpack.c.b16 %v5208, %v5207
        %v5224 = vpack.c.b16 %v5210, %v5209
        %v5225 = vpack.c.b16 %v5212, %v5211
        %v5226 = vpack.c.b16 %v5214, %v5213
        %v5227 = vpack.c.b16 %v5216, %v5215
        %v5228 = vpack.c.b16 %v5218, %v5217
        %v5229 = vpack.c.b16 %v5220, %v5219
        %v5230 = vpack.c.b16 %v5222, %v5221
        %5239 = vmatprep.subr.bf16.mxu0 0
        %5240 = vmatpush1.bf16.msra.mxu0 %v5223
        %5241 = vmatprep.subr.bf16.mxu0 0
        %5242 = vmatpush1.bf16.msra.mxu0 %v5224
        %5243 = vmatprep.subr.bf16.mxu0 0
        %5244 = vmatpush1.bf16.msra.mxu0 %v5225
        %5245 = vmatprep.subr.bf16.mxu0 0
        %5246 = vmatpush1.bf16.msra.mxu0 %v5226
        %5247 = vmatprep.subr.bf16.mxu0 0
        %5248 = vmatpush1.bf16.msra.mxu0 %v5227
        %5249 = vmatprep.subr.bf16.mxu0 0
        %5250 = vmatpush1.bf16.msra.mxu0 %v5228
        %5251 = vmatprep.subr.bf16.mxu0 0
        %5252 = vmatpush1.bf16.msra.mxu0 %v5229
        %5253 = vmatprep.subr.bf16.mxu0 0
        %5254 = vmatpush1.bf16.msra.mxu0 %v5230
        %5255 = vmatprep.subr.bf16.mxu0 0
        %5256 = vmatpush1.bf16.msra.mxu0 0
        %5257 = vmatprep.subr.bf16.mxu0 0
        %5258 = vmatpush1.bf16.msra.mxu0 0
        %5259 = vmatprep.subr.bf16.mxu0 0
        %5260 = vmatpush1.bf16.msra.mxu0 0
        %5261 = vmatprep.subr.bf16.mxu0 0
        %5262 = vmatpush1.bf16.msra.mxu0 0
        %5263 = vmatprep.subr.bf16.mxu0 0
        %5264 = vmatpush1.bf16.msra.mxu0 0
        %5265 = vmatprep.subr.bf16.mxu0 0
        %5266 = vmatpush1.bf16.msra.mxu0 0
        %5267 = vmatprep.subr.bf16.mxu0 0
        %5268 = vmatpush1.bf16.msra.mxu0 0
        %5269 = vmatprep.subr.bf16.mxu0 0
        %5270 = vmatpush1.bf16.msra.mxu0 0
        %5271 = vmatprep.mubr.bf16.mxu0 0
        %5272 = vmatmul.mubr.bf16.gmra.mrb[0].mxu0 %v5173
        %v5273 = vpop.f32.mrb[0].mxu0
        %v5274 = vadd.f32 %v5190, %v5273
        %v5275 = vpop.f32.mrb[0].mxu0
        %v5276 = vpop.f32.mrb[0].mxu0
        %v5277 = vpop.f32.mrb[0].mxu0
        %5278 = vdwg.mxu0
        %v5279 = vmax.f32 %v5274, 0.0
        %5280 = vst [vmem:[%s568] sm:$0x1] %v5279
        %s5281 = sand.u32 %s403, 1
        %s5282 = scalar_lea.sflag [#allocation7], %s5281
        %s5283 = sand.u32 %s403, 1
        %s5284 = scalar_lea.vmem [#allocation10], %s5283
        // Predicated region
        $region97: #{forward.1} parent=87 // pred_check
          %p5285 = pneg %p413
        $region98: #{forward.1} parent=87 // pred_check_branch
          %5287 = sbr.rel (%p5285) target = $region100
        $region99: #{forward.1} parent=87 // pred_region
          %s5289 = ssub.s32 16, 16
          %5290 = vsyncadd %s5282, %s5289
          %s5291 = smul.addr %s33, 16
          %s5292 = scalar_lea.hbm %s17, %s5291
          %s5294 = sshll.u32 %s5284, 4
          %s5295 = int_to_ptr.vmem [resolvable:$true] %s5294
          %5297 = dma.vmem_to_hbm [thread:$0]  %s5295, 16, %s5292, %s5282
        $region100: #{forward.1} parent=87 // pred_fallthru
          _
      $region88: #{forward.1} parent=5 // pred_fallthru
        _
      %p5298 = scmp.le.s32.totalorder 2, %s28
      // Predicated region
      $region101: #{forward.1} parent=5 // pred_check
        %p5299 = pneg %p5298
      $region102: #{forward.1} parent=5 // pred_check_branch
        %5301 = sbr.rel (%p5299) target = $region104
      $region103: #{forward.1} parent=5 // pred_region
        %s5302 = ssub.s32 %s28, 2
        // Predicated region
        $region105: #{forward.1} parent=103 // pred_check
          %p5303 = pneg %p419
        $region106: #{forward.1} parent=103 // pred_check_branch
          %5305 = sbr.rel (%p5303) target = $region108
        $region107: #{forward.1} parent=103 // pred_region
          %s5306 = sand.u32 %s404, 1
          %s5307 = scalar_lea.sflag [#allocation7], %s5306
          %s5308 = sand.u32 %s404, 1
          %s5309 = scalar_lea.vmem [#allocation10], %s5308
          %5310 = dma.done %s5307, 16
        $region108: #{forward.1} parent=103 // pred_fallthru
          _
      $region104: #{forward.1} parent=5 // pred_fallthru
        _
    $region6: #{forward.1} parent=1 // loop_footer
      %s32 = sadd.s32 1, %s28
    $region7: #{forward.1} parent=1 // loop_footer_branch
      %27 = sbr.rel target = $region3
    $region8: #{forward.1} parent=1 // loop_exit
      _
    %5311 = vsyncpa [#allocation6], 1
    %s5312 = scalar_lea.sflag [#allocation6], 1
    %5313 = vsyncpa %s5312, 1
    %5314 = vsyncpa [#allocation9], 1
    %5315 = vsyncpa [#allocation7], 1
    %s5316 = scalar_lea.sflag [#allocation7], 1
    %5317 = vsyncpa %s5316, 1

</llo_original>
